<compile_context>
chip_gen: v7x
topology: tpu7x:2x2x1
jax: 0.10.0
libtpu: 0.0.40
codegen_flags: <defaults>
</compile_context>

<pallas_src>
import jax
import jax.numpy as jnp
import numpy as np
from jax.experimental import pallas as pl
from jax.experimental.pallas import tpu as pltpu


# ----------------------------- Pallas kernel --------------------------------


def _instance_head_kernel(
    emb_ref, loc_ref, vis_ref,
    wl1_ref, bl1_ref, wl2_ref, bl2_ref,          # language fc1/fc2
    wo1_ref, bo1_ref, wo2_ref, bo2_ref,          # location fc1/fc2
    wv1_ref, bv1_ref, wv2_ref, bv2_ref,          # visual fc1/fc2
    wf1a_ref, wf1b_ref, wf1c_ref, bf1_ref,       # instance_fc1 (split over the concat axis)
    feat_ref,
):
    fuse_dtype = wf1a_ref.dtype  # bf16

    def mlp2(x, w1_ref, b1_ref, w2_ref, b2_ref):
        # bf16/f32 operands, f32 accumulation on the MXU; biases added in f32.
        h = jnp.dot(x.astype(w1_ref.dtype), w1_ref[...],
                    preferred_element_type=jnp.float32) + b1_ref[...]
        h = jnp.maximum(h, 0.0).astype(w2_ref.dtype)
        h = jnp.dot(h, w2_ref[...], preferred_element_type=jnp.float32) + b2_ref[...]
        return jnp.maximum(h, 0.0).astype(fuse_dtype)

    lang = mlp2(emb_ref[...], wl1_ref, bl1_ref, wl2_ref, bl2_ref)   # [TM, 256]
    loc = mlp2(loc_ref[...], wo1_ref, bo1_ref, wo2_ref, bo2_ref)    # [TM, 256]
    vis = mlp2(vis_ref[...], wv1_ref, bv1_ref, wv2_ref, bv2_ref)    # [TM, 256]

    # instance_fc1 over concat([lang, loc, vis], axis=1) == sum of 3 partial matmuls
    # (avoids an in-kernel lane concatenation / copy).
    h = (jnp.dot(lang, wf1a_ref[...], preferred_element_type=jnp.float32)
         + jnp.dot(loc, wf1b_ref[...], preferred_element_type=jnp.float32)
         + jnp.dot(vis, wf1c_ref[...], preferred_element_type=jnp.float32)
         + bf1_ref[...])
    # Sigmoid via exp (EUP) + approximate reciprocal (EUP): keeps VALU slots free.
    feat_ref[...] = pl.reciprocal(1.0 + jnp.exp(-h), approx=True)   # [TM, 256] f32


def instance_head_pallas(emb, loc, vis, params, *, max_tile_m=128):
    """Fused instance-head MLP. Returns the 256-d fused features [N, 256] (f32)."""
    n = emb.shape[0]
    # Adaptive tile: at most max_tile_m rows, at least a sublane-aligned cover of n.
    tile_m = int(min(max_tile_m, max(8, ((n + 7) // 8) * 8)))
    n_pad = pl.cdiv(n, tile_m) * tile_m
    pad = n_pad - n
    # Stream the wide activations as bf16 (halves the big input DMAs).
    emb = jnp.pad(emb, ((0, pad), (0, 0))).astype(jnp.bfloat16)
    vis = jnp.pad(vis, ((0, pad), (0, 0))).astype(jnp.bfloat16)
    loc = jnp.pad(loc, ((0, pad), (0, 0))).astype(jnp.float32)   # 4 lanes: keep f32

    def row_spec(c):
        return pl.BlockSpec((tile_m, c), lambda i: (i, 0))

    def full_spec(arr):
        return pl.BlockSpec(arr.shape, lambda i: (0, 0))

    weight_specs = [full_spec(p) for p in params]

    feat = pl.pallas_call(
        _instance_head_kernel,
        out_shape=jax.ShapeDtypeStruct((n_pad, 256), jnp.float32),
        grid_spec=pltpu.PrefetchScalarGridSpec(
            num_scalar_prefetch=0,
            grid=(n_pad // tile_m,),
            in_specs=[row_spec(emb.shape[1]), row_spec(loc.shape[1]), row_spec(vis.shape[1])]
            + weight_specs,
            out_specs=row_spec(256),
        ),
        compiler_params=pltpu.CompilerParams(
            dimension_semantics=("parallel",),
            vmem_limit_bytes=32 * 1024 * 1024,
        ),
    )(emb, loc, vis, *params)

    return feat[:n]


# --------------------------- parameter construction --------------------------


def _linear_params(key, fan_in, fan_out):
    # torch.nn.Linear default init: U(-1/sqrt(fan_in), 1/sqrt(fan_in)) for weight and bias.
    kw, kb = jax.random.split(key)
    bound = 1.0 / np.sqrt(fan_in)
    w = jax.random.uniform(kw, (fan_in, fan_out), jnp.float32, -bound, bound)
    b = jax.random.uniform(kb, (1, fan_out), jnp.float32, -bound, bound)
    return w, b


def make_instance_head_params(key, instance_num=10):
    keys = jax.random.split(key, 9)
    # TODO(synk): checkpoint load of semantic_embedding.pth replaced by deterministic init.
    emb_table = jax.random.normal(keys[0], (instance_num - 1, 300), jnp.float32) * 0.02

    wl1, bl1 = _linear_params(keys[1], 300, 512)
    wl2, bl2 = _linear_params(keys[2], 512, 256)
    wo1, bo1 = _linear_params(keys[3], 4, 32)
    wo2, bo2 = _linear_params(keys[4], 32, 256)
    wv1, bv1 = _linear_params(keys[5], 1024, 512)
    wv2, bv2 = _linear_params(keys[6], 512, 256)
    wf1, bf1 = _linear_params(keys[7], 256 * 3, 256)
    wf2, bf2 = _linear_params(keys[8], 256, 1)

    # split instance_fc1 weight over the concat([language, location, visual]) axis
    wf1a, wf1b, wf1c = wf1[:256], wf1[256:512], wf1[512:]

    bf16 = lambda w: w.astype(jnp.bfloat16)
    # Weights stored bf16 (MXU-native on v5e/v6e/v7x); biases stay f32 (added to f32 acc).
    # The tiny location_fc1 (4x32) stays f32 -- negligible, keeps the K=4 matmul simple.
    kernel_params = [
        bf16(wl1), bl1, bf16(wl2), bl2,
        wo1, bo1, bf16(wo2), bo2,
        bf16(wv1), bv1, bf16(wv2), bv2,
        bf16(wf1a), bf16(wf1b), bf16(wf1c), bf1,
    ]
    head_params = (wf2, bf2)   # 256 -> 1 interest head, applied outside the kernel
    return emb_table, kernel_params, head_params


# ------------------------------- forward glue --------------------------------


def instance_head14_forward(instance_features_list, pred_classes_list, pred_locations_list,
                            emb_table, kernel_params, head_params):
    """Inference-path (training=False) forward of InstanceHead14.

    instance_features_list: list of [Ni, 1024] visual features
    pred_classes_list:      list of [Ni] int classes in [1, instance_num-1]
    pred_locations_list:    list of [Ni, 4] box locations
    Returns per-image lists (instance_interest_preds, instance_features_256s).
    """
    nums = [f.shape[0] for f in instance_features_list]
    vis_mix = jnp.concatenate(instance_features_list, axis=0)
    loc_mix = jnp.concatenate(pred_locations_list, axis=0)
    cls_mix = jnp.concatenate(pred_classes_list, axis=0).astype(jnp.int32) - 1
    emb_mix = jnp.take(emb_table, cls_mix, axis=0)  # nn.Embedding lookup (glue)

    feat_256 = instance_head_pallas(emb_mix, loc_mix, vis_mix, kernel_params)

    # instance_fc2 + sigmoid: trivial 256->1 matvec kept out of the kernel on purpose
    # (a lane-width-1 kernel output would force masked partial stores).
    wf2, bf2 = head_params
    interest_pred = jax.nn.sigmoid(feat_256 @ wf2 + bf2)[:, 0]

    # compute_instance_result (training=False branch): split by per-image counts.
    # TODO(synk): training-time focal loss / top-k precision metrics (host prints,
    # data-dependent top-k) are not implemented.
    preds, feats = [], []
    off = 0
    for n in nums:
        preds.append(interest_pred[off:off + n])
        feats.append(feat_256[off:off + n])
        off += n
    return preds, feats


def _reference_forward(emb, loc, vis, kernel_params, head_params):
    (wl1, bl1, wl2, bl2, wo1, bo1, wo2, bo2, wv1, bv1, wv2, bv2,
     wf1a, wf1b, wf1c, bf1) = [jnp.asarray(p, jnp.float32) for p in kernel_params]
    wf2, bf2 = head_params
    relu = lambda x: jnp.maximum(x, 0.0)
    sig = jax.nn.sigmoid
    lang = relu(relu(emb @ wl1 + bl1) @ wl2 + bl2)
    locf = relu(relu(loc @ wo1 + bo1) @ wo2 + bo2)
    visf = relu(relu(vis @ wv1 + bv1) @ wv2 + bv2)
    feat = sig(lang @ wf1a + locf @ wf1b + visf @ wf1c + bf1)
    pred = sig(feat @ wf2 + bf2)[:, 0]
    return feat, pred


# ------------------------------------ main ------------------------------------

if __name__ == "__main__":
    key = jax.random.PRNGKey(0)
    k_par, k_v1, k_v2, k_l1, k_l2, k_c1, k_c2 = jax.random.split(key, 7)

    instance_num = 10
    emb_table, kernel_params, head_params = make_instance_head_params(
        k_par, instance_num=instance_num)

    # two "images" with 5 and 3 predicted instances
    nums = [5, 3]
    instance_features = [
        jax.random.normal(k_v1, (nums[0], 1024), jnp.float32),
        jax.random.normal(k_v2, (nums[1], 1024), jnp.float32),
    ]
    pred_locations = [
        jax.random.uniform(k_l1, (nums[0], 4), jnp.float32),
        jax.random.uniform(k_l2, (nums[1], 4), jnp.float32),
    ]
    pred_classes = [
        jax.random.randint(k_c1, (nums[0],), 1, instance_num),
        jax.random.randint(k_c2, (nums[1],), 1, instance_num),
    ]

    preds, feats = instance_head14_forward(
        instance_features, pred_classes, pred_locations, emb_table, kernel_params, head_params)
    preds = [jax.block_until_ready(p) for p in preds]
    feats = [jax.block_until_ready(f) for f in feats]

    # correctness check against a plain-JAX f32 reference (bf16 matmuls => loose tol)
    vis_mix = jnp.concatenate(instance_features, axis=0)
    loc_mix = jnp.concatenate(pred_locations, axis=0)
    cls_mix = jnp.concatenate(pred_classes).astype(jnp.int32) - 1
    emb_mix = jnp.take(emb_table, cls_mix, axis=0)
    ref_feat, ref_pred = _reference_forward(emb_mix, loc_mix, vis_mix, kernel_params, head_params)
    np.testing.assert_allclose(np.concatenate([np.asarray(f) for f in feats]),
                               np.asarray(ref_feat), rtol=2e-2, atol=2e-2)
    np.testing.assert_allclose(np.concatenate([np.asarray(p) for p in preds]),
                               np.asarray(ref_pred), rtol=2e-2, atol=2e-2)

    assert preds[0].shape == (5,) and preds[1].shape == (3,)
    assert feats[0].shape == (5, 256) and feats[1].shape == (3, 256)
    print("KERNEL_OK")
</pallas_src>

<mosaic_0001>
module attributes {stable_mosaic.version = 11 : i64} {
  func.func @_instance_head_kernel(%arg0: i32, %arg1: memref<8x300xbf16, #tpu.memory_space<vmem>>, %arg2: memref<8x4xf32, #tpu.memory_space<vmem>>, %arg3: memref<8x1024xbf16, #tpu.memory_space<vmem>>, %arg4: memref<300x512xbf16, #tpu.memory_space<vmem>>, %arg5: memref<1x512xf32, #tpu.memory_space<vmem>>, %arg6: memref<512x256xbf16, #tpu.memory_space<vmem>>, %arg7: memref<1x256xf32, #tpu.memory_space<vmem>>, %arg8: memref<4x32xf32, #tpu.memory_space<vmem>>, %arg9: memref<1x32xf32, #tpu.memory_space<vmem>>, %arg10: memref<32x256xbf16, #tpu.memory_space<vmem>>, %arg11: memref<1x256xf32, #tpu.memory_space<vmem>>, %arg12: memref<1024x512xbf16, #tpu.memory_space<vmem>>, %arg13: memref<1x512xf32, #tpu.memory_space<vmem>>, %arg14: memref<512x256xbf16, #tpu.memory_space<vmem>>, %arg15: memref<1x256xf32, #tpu.memory_space<vmem>>, %arg16: memref<256x256xbf16, #tpu.memory_space<vmem>>, %arg17: memref<256x256xbf16, #tpu.memory_space<vmem>>, %arg18: memref<256x256xbf16, #tpu.memory_space<vmem>>, %arg19: memref<1x256xf32, #tpu.memory_space<vmem>>, %arg20: memref<8x256xf32, #tpu.memory_space<vmem>>) attributes {dimension_semantics = [#tpu.dimension_semantics<parallel>], iteration_bounds = array<i64: 1>, scalar_prefetch = 0 : i64, scratch_operands = 0 : i64, tpu.core_type = #tpu.core_type<tc>, window_params = [{transform_indices = @transform_0, window_bounds = array<i64: 8, 300>}, {transform_indices = @transform_1, window_bounds = array<i64: 8, 4>}, {transform_indices = @transform_2, window_bounds = array<i64: 8, 1024>}, {pipeline_mode = #tpu.pipeline_mode<synchronous>, transform_indices = @transform_3, window_bounds = array<i64: 300, 512>}, {pipeline_mode = #tpu.pipeline_mode<synchronous>, transform_indices = @transform_4, window_bounds = array<i64: 1, 512>}, {pipeline_mode = #tpu.pipeline_mode<synchronous>, transform_indices = @transform_5, window_bounds = array<i64: 512, 256>}, {pipeline_mode = #tpu.pipeline_mode<synchronous>, transform_indices = @transform_6, window_bounds = array<i64: 1, 256>}, {pipeline_mode = #tpu.pipeline_mode<synchronous>, transform_indices = @transform_7, window_bounds = array<i64: 4, 32>}, {pipeline_mode = #tpu.pipeline_mode<synchronous>, transform_indices = @transform_8, window_bounds = array<i64: 1, 32>}, {pipeline_mode = #tpu.pipeline_mode<synchronous>, transform_indices = @transform_9, window_bounds = array<i64: 32, 256>}, {pipeline_mode = #tpu.pipeline_mode<synchronous>, transform_indices = @transform_10, window_bounds = array<i64: 1, 256>}, {pipeline_mode = #tpu.pipeline_mode<synchronous>, transform_indices = @transform_11, window_bounds = array<i64: 1024, 512>}, {pipeline_mode = #tpu.pipeline_mode<synchronous>, transform_indices = @transform_12, window_bounds = array<i64: 1, 512>}, {pipeline_mode = #tpu.pipeline_mode<synchronous>, transform_indices = @transform_13, window_bounds = array<i64: 512, 256>}, {pipeline_mode = #tpu.pipeline_mode<synchronous>, transform_indices = @transform_14, window_bounds = array<i64: 1, 256>}, {pipeline_mode = #tpu.pipeline_mode<synchronous>, transform_indices = @transform_15, window_bounds = array<i64: 256, 256>}, {pipeline_mode = #tpu.pipeline_mode<synchronous>, transform_indices = @transform_16, window_bounds = array<i64: 256, 256>}, {pipeline_mode = #tpu.pipeline_mode<synchronous>, transform_indices = @transform_17, window_bounds = array<i64: 256, 256>}, {pipeline_mode = #tpu.pipeline_mode<synchronous>, transform_indices = @transform_18, window_bounds = array<i64: 1, 256>}, {transform_indices = @transform_19, window_bounds = array<i64: 8, 256>}]} {
    %c0 = arith.constant 0 : index
    %c0_0 = arith.constant 0 : index
    %0 = vector.load %arg1[%c0, %c0_0] : memref<8x300xbf16, #tpu.memory_space<vmem>>, vector<8x300xbf16>
    %c0_1 = arith.constant 0 : index
    %c0_2 = arith.constant 0 : index
    %1 = vector.load %arg4[%c0_1, %c0_2] : memref<300x512xbf16, #tpu.memory_space<vmem>>, vector<300x512xbf16>
    %cst = arith.constant dense<0.000000e+00> : vector<8x512xf32>
    %2 = tpu.matmul %0, %1, %cst {dimension_numbers = #tpu.dot_dimension_numbers<[1], [0], [0], [1], [0, 0, 1, 1], [], []>} : vector<8x300xbf16>, vector<300x512xbf16>, vector<8x512xf32> -> vector<8x512xf32>
    %c0_3 = arith.constant 0 : index
    %c0_4 = arith.constant 0 : index
    %3 = vector.load %arg5[%c0_3, %c0_4] : memref<1x512xf32, #tpu.memory_space<vmem>>, vector<1x512xf32>
    %4 = vector.broadcast %3 : vector<1x512xf32> to vector<8x512xf32>
    %5 = arith.addf %2, %4 : vector<8x512xf32>
    %cst_5 = arith.constant 0.000000e+00 : f32
    %6 = vector.broadcast %cst_5 : f32 to vector<8x512xf32>
    %7 = arith.maximumf %5, %6 : vector<8x512xf32>
    %8 = arith.truncf %7 : vector<8x512xf32> to vector<8x512xbf16>
    %c0_6 = arith.constant 0 : index
    %c0_7 = arith.constant 0 : index
    %9 = vector.load %arg6[%c0_6, %c0_7] : memref<512x256xbf16, #tpu.memory_space<vmem>>, vector<512x256xbf16>
    %cst_8 = arith.constant dense<0.000000e+00> : vector<8x256xf32>
    %10 = tpu.matmul %8, %9, %cst_8 {dimension_numbers = #tpu.dot_dimension_numbers<[1], [0], [0], [1], [0, 0, 1, 1], [], []>} : vector<8x512xbf16>, vector<512x256xbf16>, vector<8x256xf32> -> vector<8x256xf32>
    %c0_9 = arith.constant 0 : index
    %c0_10 = arith.constant 0 : index
    %11 = vector.load %arg7[%c0_9, %c0_10] : memref<1x256xf32, #tpu.memory_space<vmem>>, vector<1x256xf32>
    %12 = vector.broadcast %11 : vector<1x256xf32> to vector<8x256xf32>
    %13 = arith.addf %10, %12 : vector<8x256xf32>
    %cst_11 = arith.constant 0.000000e+00 : f32
    %14 = vector.broadcast %cst_11 : f32 to vector<8x256xf32>
    %15 = arith.maximumf %13, %14 : vector<8x256xf32>
    %16 = arith.truncf %15 : vector<8x256xf32> to vector<8x256xbf16>
    %c0_12 = arith.constant 0 : index
    %c0_13 = arith.constant 0 : index
    %17 = vector.load %arg2[%c0_12, %c0_13] : memref<8x4xf32, #tpu.memory_space<vmem>>, vector<8x4xf32>
    %c0_14 = arith.constant 0 : index
    %c0_15 = arith.constant 0 : index
    %18 = vector.load %arg8[%c0_14, %c0_15] : memref<4x32xf32, #tpu.memory_space<vmem>>, vector<4x32xf32>
    %cst_16 = arith.constant dense<0.000000e+00> : vector<8x32xf32>
    %19 = tpu.matmul %17, %18, %cst_16 {dimension_numbers = #tpu.dot_dimension_numbers<[1], [0], [0], [1], [0, 0, 1, 1], [], []>} : vector<8x4xf32>, vector<4x32xf32>, vector<8x32xf32> -> vector<8x32xf32>
    %c0_17 = arith.constant 0 : index
    %c0_18 = arith.constant 0 : index
    %20 = vector.load %arg9[%c0_17, %c0_18] : memref<1x32xf32, #tpu.memory_space<vmem>>, vector<1x32xf32>
    %21 = vector.broadcast %20 : vector<1x32xf32> to vector<8x32xf32>
    %22 = arith.addf %19, %21 : vector<8x32xf32>
    %cst_19 = arith.constant 0.000000e+00 : f32
    %23 = vector.broadcast %cst_19 : f32 to vector<8x32xf32>
    %24 = arith.maximumf %22, %23 : vector<8x32xf32>
    %25 = arith.truncf %24 : vector<8x32xf32> to vector<8x32xbf16>
    %c0_20 = arith.constant 0 : index
    %c0_21 = arith.constant 0 : index
    %26 = vector.load %arg10[%c0_20, %c0_21] : memref<32x256xbf16, #tpu.memory_space<vmem>>, vector<32x256xbf16>
    %cst_22 = arith.constant dense<0.000000e+00> : vector<8x256xf32>
    %27 = tpu.matmul %25, %26, %cst_22 {dimension_numbers = #tpu.dot_dimension_numbers<[1], [0], [0], [1], [0, 0, 1, 1], [], []>} : vector<8x32xbf16>, vector<32x256xbf16>, vector<8x256xf32> -> vector<8x256xf32>
    %c0_23 = arith.constant 0 : index
    %c0_24 = arith.constant 0 : index
    %28 = vector.load %arg11[%c0_23, %c0_24] : memref<1x256xf32, #tpu.memory_space<vmem>>, vector<1x256xf32>
    %29 = vector.broadcast %28 : vector<1x256xf32> to vector<8x256xf32>
    %30 = arith.addf %27, %29 : vector<8x256xf32>
    %cst_25 = arith.constant 0.000000e+00 : f32
    %31 = vector.broadcast %cst_25 : f32 to vector<8x256xf32>
    %32 = arith.maximumf %30, %31 : vector<8x256xf32>
    %33 = arith.truncf %32 : vector<8x256xf32> to vector<8x256xbf16>
    %c0_26 = arith.constant 0 : index
    %c0_27 = arith.constant 0 : index
    %34 = vector.load %arg3[%c0_26, %c0_27] : memref<8x1024xbf16, #tpu.memory_space<vmem>>, vector<8x1024xbf16>
    %c0_28 = arith.constant 0 : index
    %c0_29 = arith.constant 0 : index
    %35 = vector.load %arg12[%c0_28, %c0_29] : memref<1024x512xbf16, #tpu.memory_space<vmem>>, vector<1024x512xbf16>
    %cst_30 = arith.constant dense<0.000000e+00> : vector<8x512xf32>
    %36 = tpu.matmul %34, %35, %cst_30 {dimension_numbers = #tpu.dot_dimension_numbers<[1], [0], [0], [1], [0, 0, 1, 1], [], []>} : vector<8x1024xbf16>, vector<1024x512xbf16>, vector<8x512xf32> -> vector<8x512xf32>
    %c0_31 = arith.constant 0 : index
    %c0_32 = arith.constant 0 : index
    %37 = vector.load %arg13[%c0_31, %c0_32] : memref<1x512xf32, #tpu.memory_space<vmem>>, vector<1x512xf32>
    %38 = vector.broadcast %37 : vector<1x512xf32> to vector<8x512xf32>
    %39 = arith.addf %36, %38 : vector<8x512xf32>
    %cst_33 = arith.constant 0.000000e+00 : f32
    %40 = vector.broadcast %cst_33 : f32 to vector<8x512xf32>
    %41 = arith.maximumf %39, %40 : vector<8x512xf32>
    %42 = arith.truncf %41 : vector<8x512xf32> to vector<8x512xbf16>
    %c0_34 = arith.constant 0 : index
    %c0_35 = arith.constant 0 : index
    %43 = vector.load %arg14[%c0_34, %c0_35] : memref<512x256xbf16, #tpu.memory_space<vmem>>, vector<512x256xbf16>
    %cst_36 = arith.constant dense<0.000000e+00> : vector<8x256xf32>
    %44 = tpu.matmul %42, %43, %cst_36 {dimension_numbers = #tpu.dot_dimension_numbers<[1], [0], [0], [1], [0, 0, 1, 1], [], []>} : vector<8x512xbf16>, vector<512x256xbf16>, vector<8x256xf32> -> vector<8x256xf32>
    %c0_37 = arith.constant 0 : index
    %c0_38 = arith.constant 0 : index
    %45 = vector.load %arg15[%c0_37, %c0_38] : memref<1x256xf32, #tpu.memory_space<vmem>>, vector<1x256xf32>
    %46 = vector.broadcast %45 : vector<1x256xf32> to vector<8x256xf32>
    %47 = arith.addf %44, %46 : vector<8x256xf32>
    %cst_39 = arith.constant 0.000000e+00 : f32
    %48 = vector.broadcast %cst_39 : f32 to vector<8x256xf32>
    %49 = arith.maximumf %47, %48 : vector<8x256xf32>
    %50 = arith.truncf %49 : vector<8x256xf32> to vector<8x256xbf16>
    %c0_40 = arith.constant 0 : index
    %c0_41 = arith.constant 0 : index
    %51 = vector.load %arg16[%c0_40, %c0_41] : memref<256x256xbf16, #tpu.memory_space<vmem>>, vector<256x256xbf16>
    %cst_42 = arith.constant dense<0.000000e+00> : vector<8x256xf32>
    %52 = tpu.matmul %16, %51, %cst_42 {dimension_numbers = #tpu.dot_dimension_numbers<[1], [0], [0], [1], [0, 0, 1, 1], [], []>} : vector<8x256xbf16>, vector<256x256xbf16>, vector<8x256xf32> -> vector<8x256xf32>
    %c0_43 = arith.constant 0 : index
    %c0_44 = arith.constant 0 : index
    %53 = vector.load %arg17[%c0_43, %c0_44] : memref<256x256xbf16, #tpu.memory_space<vmem>>, vector<256x256xbf16>
    %cst_45 = arith.constant dense<0.000000e+00> : vector<8x256xf32>
    %54 = tpu.matmul %33, %53, %cst_45 {dimension_numbers = #tpu.dot_dimension_numbers<[1], [0], [0], [1], [0, 0, 1, 1], [], []>} : vector<8x256xbf16>, vector<256x256xbf16>, vector<8x256xf32> -> vector<8x256xf32>
    %55 = arith.addf %52, %54 : vector<8x256xf32>
    %c0_46 = arith.constant 0 : index
    %c0_47 = arith.constant 0 : index
    %56 = vector.load %arg18[%c0_46, %c0_47] : memref<256x256xbf16, #tpu.memory_space<vmem>>, vector<256x256xbf16>
    %cst_48 = arith.constant dense<0.000000e+00> : vector<8x256xf32>
    %57 = tpu.matmul %50, %56, %cst_48 {dimension_numbers = #tpu.dot_dimension_numbers<[1], [0], [0], [1], [0, 0, 1, 1], [], []>} : vector<8x256xbf16>, vector<256x256xbf16>, vector<8x256xf32> -> vector<8x256xf32>
    %58 = arith.addf %55, %57 : vector<8x256xf32>
    %c0_49 = arith.constant 0 : index
    %c0_50 = arith.constant 0 : index
    %59 = vector.load %arg19[%c0_49, %c0_50] : memref<1x256xf32, #tpu.memory_space<vmem>>, vector<1x256xf32>
    %60 = vector.broadcast %59 : vector<1x256xf32> to vector<8x256xf32>
    %61 = arith.addf %58, %60 : vector<8x256xf32>
    %cst_51 = arith.constant 0.000000e+00 : f32
    %62 = vector.broadcast %cst_51 : f32 to vector<8x256xf32>
    %63 = arith.subf %62, %61 : vector<8x256xf32>
    %64 = math.exp %63 : vector<8x256xf32>
    %cst_52 = arith.constant 1.000000e+00 : f32
    %65 = vector.broadcast %cst_52 : f32 to vector<8x256xf32>
    %66 = arith.addf %65, %64 : vector<8x256xf32>
    %67 = tpu.reciprocal %66 {approx = true} : vector<8x256xf32> -> vector<8x256xf32>
    %c0_53 = arith.constant 0 : index
    %c0_54 = arith.constant 0 : index
    %68 = vector.load %arg20[%c0_53, %c0_54] : memref<8x256xf32, #tpu.memory_space<vmem>>, vector<8x256xf32>
    tpu.vector_store %arg20[%c0_53, %c0_54], %67 {strides = array<i32>} : memref<8x256xf32, #tpu.memory_space<vmem>>, vector<8x256xf32>,
    return
  }
  func.func @transform_0(%arg0: i32) -> (i32, i32) {
    %c0_i32 = arith.constant 0 : i32
    %c0_i32_0 = arith.constant 0 : i32
    return %arg0, %c0_i32 : i32, i32
  }
  func.func @transform_1(%arg0: i32) -> (i32, i32) {
    %c0_i32 = arith.constant 0 : i32
    %c0_i32_0 = arith.constant 0 : i32
    return %arg0, %c0_i32 : i32, i32
  }
  func.func @transform_2(%arg0: i32) -> (i32, i32) {
    %c0_i32 = arith.constant 0 : i32
    %c0_i32_0 = arith.constant 0 : i32
    return %arg0, %c0_i32 : i32, i32
  }
  func.func @transform_3(%arg0: i32) -> (i32, i32) {
    %c0_i32 = arith.constant 0 : i32
    %c0_i32_0 = arith.constant 0 : i32
    %c0_i32_1 = arith.constant 0 : i32
    return %c0_i32, %c0_i32_0 : i32, i32
  }
  func.func @transform_4(%arg0: i32) -> (i32, i32) {
    %c0_i32 = arith.constant 0 : i32
    %c0_i32_0 = arith.constant 0 : i32
    %c0_i32_1 = arith.constant 0 : i32
    return %c0_i32, %c0_i32_0 : i32, i32
  }
  func.func @transform_5(%arg0: i32) -> (i32, i32) {
    %c0_i32 = arith.constant 0 : i32
    %c0_i32_0 = arith.constant 0 : i32
    %c0_i32_1 = arith.constant 0 : i32
    return %c0_i32, %c0_i32_0 : i32, i32
  }
  func.func @transform_6(%arg0: i32) -> (i32, i32) {
    %c0_i32 = arith.constant 0 : i32
    %c0_i32_0 = arith.constant 0 : i32
    %c0_i32_1 = arith.constant 0 : i32
    return %c0_i32, %c0_i32_0 : i32, i32
  }
  func.func @transform_7(%arg0: i32) -> (i32, i32) {
    %c0_i32 = arith.constant 0 : i32
    %c0_i32_0 = arith.constant 0 : i32
    %c0_i32_1 = arith.constant 0 : i32
    return %c0_i32, %c0_i32_0 : i32, i32
  }
  func.func @transform_8(%arg0: i32) -> (i32, i32) {
    %c0_i32 = arith.constant 0 : i32
    %c0_i32_0 = arith.constant 0 : i32
    %c0_i32_1 = arith.constant 0 : i32
    return %c0_i32, %c0_i32_0 : i32, i32
  }
  func.func @transform_9(%arg0: i32) -> (i32, i32) {
    %c0_i32 = arith.constant 0 : i32
    %c0_i32_0 = arith.constant 0 : i32
    %c0_i32_1 = arith.constant 0 : i32
    return %c0_i32, %c0_i32_0 : i32, i32
  }
  func.func @transform_10(%arg0: i32) -> (i32, i32) {
    %c0_i32 = arith.constant 0 : i32
    %c0_i32_0 = arith.constant 0 : i32
    %c0_i32_1 = arith.constant 0 : i32
    return %c0_i32, %c0_i32_0 : i32, i32
  }
  func.func @transform_11(%arg0: i32) -> (i32, i32) {
    %c0_i32 = arith.constant 0 : i32
    %c0_i32_0 = arith.constant 0 : i32
    %c0_i32_1 = arith.constant 0 : i32
    return %c0_i32, %c0_i32_0 : i32, i32
  }
  func.func @transform_12(%arg0: i32) -> (i32, i32) {
    %c0_i32 = arith.constant 0 : i32
    %c0_i32_0 = arith.constant 0 : i32
    %c0_i32_1 = arith.constant 0 : i32
    return %c0_i32, %c0_i32_0 : i32, i32
  }
  func.func @transform_13(%arg0: i32) -> (i32, i32) {
    %c0_i32 = arith.constant 0 : i32
    %c0_i32_0 = arith.constant 0 : i32
    %c0_i32_1 = arith.constant 0 : i32
    return %c0_i32, %c0_i32_0 : i32, i32
  }
  func.func @transform_14(%arg0: i32) -> (i32, i32) {
    %c0_i32 = arith.constant 0 : i32
    %c0_i32_0 = arith.constant 0 : i32
    %c0_i32_1 = arith.constant 0 : i32
    return %c0_i32, %c0_i32_0 : i32, i32
  }
  func.func @transform_15(%arg0: i32) -> (i32, i32) {
    %c0_i32 = arith.constant 0 : i32
    %c0_i32_0 = arith.constant 0 : i32
    %c0_i32_1 = arith.constant 0 : i32
    return %c0_i32, %c0_i32_0 : i32, i32
  }
  func.func @transform_16(%arg0: i32) -> (i32, i32) {
    %c0_i32 = arith.constant 0 : i32
    %c0_i32_0 = arith.constant 0 : i32
    %c0_i32_1 = arith.constant 0 : i32
    return %c0_i32, %c0_i32_0 : i32, i32
  }
  func.func @transform_17(%arg0: i32) -> (i32, i32) {
    %c0_i32 = arith.constant 0 : i32
    %c0_i32_0 = arith.constant 0 : i32
    %c0_i32_1 = arith.constant 0 : i32
    return %c0_i32, %c0_i32_0 : i32, i32
  }
  func.func @transform_18(%arg0: i32) -> (i32, i32) {
    %c0_i32 = arith.constant 0 : i32
    %c0_i32_0 = arith.constant 0 : i32
    %c0_i32_1 = arith.constant 0 : i32
    return %c0_i32, %c0_i32_0 : i32, i32
  }
  func.func @transform_19(%arg0: i32) -> (i32, i32) {
    %c0_i32 = arith.constant 0 : i32
    %c0_i32_0 = arith.constant 0 : i32
    return %arg0, %c0_i32 : i32, i32
  }
}

</mosaic_0001>

<llo_original>
// kernel: tpu_custom_call.1
$region0: #{tpu_custom_call.1}
  #allocation0 [shape = 'u32[]', space=smem, size = 0x4, offset = 0x4, fixed_abs, tag = 'smem constant byte address 0x4 - core index']
  #allocation1 [shape = 'u32[144,128]{1,0:T(1,128)}', space=vmem, size = 0x12000, scoped, tag = 'internal scratch']
  %s0 = inlined_call_operand.vmem [shape: bf16[8,300], index: 0, kind: input, shape index: {}]
  %s1 = inlined_call_operand.vmem [shape: f32[8,4], index: 1, kind: input, shape index: {}]
  %s2 = inlined_call_operand.hbm [shape: bf16[8,1024], index: 2, kind: input, shape index: {}]
  %s3 = inlined_call_operand.hbm [shape: bf16[300,512], index: 3, kind: input, shape index: {}]
  %s4 = inlined_call_operand.hbm [shape: f32[1,512], index: 4, kind: input, shape index: {}]
  %s5 = inlined_call_operand.hbm [shape: bf16[512,256], index: 5, kind: input, shape index: {}]
  %s6 = inlined_call_operand.hbm [shape: f32[1,256], index: 6, kind: input, shape index: {}]
  %s7 = inlined_call_operand.hbm [shape: f32[4,32], index: 7, kind: input, shape index: {}]
  %s8 = inlined_call_operand.vmem [shape: f32[1,32], index: 8, kind: input, shape index: {}]
  %s9 = inlined_call_operand.vmem [shape: bf16[32,256], index: 9, kind: input, shape index: {}]
  %s10 = inlined_call_operand.hbm [shape: f32[1,256], index: 10, kind: input, shape index: {}]
  %s11 = inlined_call_operand.hbm [shape: bf16[1024,512], index: 11, kind: input, shape index: {}]
  %s12 = inlined_call_operand.vmem [shape: f32[1,512], index: 12, kind: input, shape index: {}]
  %s13 = inlined_call_operand.hbm [shape: bf16[512,256], index: 13, kind: input, shape index: {}]
  %s14 = inlined_call_operand.vmem [shape: f32[1,256], index: 14, kind: input, shape index: {}]
  %s15 = inlined_call_operand.hbm [shape: bf16[256,256], index: 15, kind: input, shape index: {}]
  %s16 = inlined_call_operand.hbm [shape: bf16[256,256], index: 16, kind: input, shape index: {}]
  %s17 = inlined_call_operand.hbm [shape: bf16[256,256], index: 17, kind: input, shape index: {}]
  %s18 = inlined_call_operand.vmem [shape: f32[1,256], index: 18, kind: input, shape index: {}]
  %s19 = inlined_call_operand.hbm [shape: f32[8,256], index: 19, kind: output, shape index: {}]
  %s20 = sld [smem:[#allocation0]]
  $region134: #{tpu_custom_call.1} parent=0
    _
  %s22 = ssub.s32 1, %s20
  %s23 = scalar_select 0, %s22, %s20
  $region1: #{tpu_custom_call.1} parent=0
    #allocation2 [shape = 'u8[16384]{0}', space=vmem, size = 0x4000, scoped, tag = 'input window, operand 2, single buffered']
    #allocation3 [shape = 's32[1]{0}', space=sflag, size = 0x4, scoped, tag = 'scoped memory for tpu_custom_call.1']
    #allocation4 [shape = 's32[1]{0}', space=sflag, size = 0x4, scoped, tag = 'scoped memory for tpu_custom_call.1']
    #allocation5 [shape = 'u8[311296]{0}', space=vmem, size = 0x4c000, scoped, tag = 'input window, operand 3, single buffered']
    #allocation6 [shape = 's32[1]{0}', space=sflag, size = 0x4, scoped, tag = 'scoped memory for tpu_custom_call.1']
    #allocation7 [shape = 'u8[2048]{0}', space=vmem, size = 0x800, scoped, tag = 'input window, operand 4, single buffered']
    #allocation8 [shape = 'u8[262144]{0}', space=vmem, size = 0x40000, scoped, tag = 'input window, operand 5, single buffered']
    #allocation9 [shape = 's32[1]{0}', space=sflag, size = 0x4, scoped, tag = 'scoped memory for tpu_custom_call.1']
    #allocation10 [shape = 'u8[1024]{0}', space=vmem, size = 0x400, scoped, tag = 'input window, operand 6, single buffered']
    #allocation11 [shape = 'u8[2048]{0}', space=vmem, size = 0x800, scoped, tag = 'input window, operand 7, single buffered']
    #allocation12 [shape = 's32[1]{0}', space=sflag, size = 0x4, scoped, tag = 'scoped memory for tpu_custom_call.1']
    #allocation13 [shape = 'u8[1024]{0}', space=vmem, size = 0x400, scoped, tag = 'input window, operand 10, single buffered']
    #allocation14 [shape = 'u8[1048576]{0}', space=vmem, size = 0x100000, scoped, tag = 'input window, operand 11, single buffered']
    #allocation15 [shape = 's32[1]{0}', space=sflag, size = 0x4, scoped, tag = 'scoped memory for tpu_custom_call.1']
    #allocation16 [shape = 'u8[262144]{0}', space=vmem, size = 0x40000, scoped, tag = 'input window, operand 13, single buffered']
    #allocation17 [shape = 'u8[131072]{0}', space=vmem, size = 0x20000, scoped, tag = 'input window, operand 15, single buffered']
    #allocation18 [shape = 's32[1]{0}', space=sflag, size = 0x4, scoped, tag = 'scoped memory for tpu_custom_call.1']
    #allocation19 [shape = 'u8[131072]{0}', space=vmem, size = 0x20000, scoped, tag = 'input window, operand 16, single buffered']
    #allocation20 [shape = 'u8[131072]{0}', space=vmem, size = 0x20000, scoped, tag = 'input window, operand 17, single buffered']
    #allocation21 [shape = 's32[1]{0}', space=sflag, size = 0x4, scoped, tag = 'scoped memory for tpu_custom_call.1']
    #allocation22 [shape = 'u8[8192]{0}', space=vmem, size = 0x2000, scoped, tag = 'output window, operand 0, single buffered']
    %24 = vsyncpa [#allocation3], 0
    %25 = vsyncpa [#allocation6], 0
    %26 = vsyncpa [#allocation9], 0
    %27 = vsyncpa [#allocation12], 0
    %28 = vsyncpa [#allocation15], 0
    %29 = vsyncpa [#allocation18], 0
    %30 = vsyncpa [#allocation21], 0
    %31 = vsyncpa [#allocation4], 0
    // Predicated region
    $region2: #{tpu_custom_call.1} parent=1 // pred_check
      _
    $region3: #{tpu_custom_call.1} parent=1 // pred_check_branch
      %33 = sbr.rel (0) target = $region5
    $region4: #{tpu_custom_call.1} parent=1 // pred_region
      _
    $region5: #{tpu_custom_call.1} parent=1 // pred_fallthru
      _
    // Predicated region
    $region6: #{tpu_custom_call.1} parent=1 // pred_check
      _
    $region7: #{tpu_custom_call.1} parent=1 // pred_check_branch
      %35 = sbr.rel (0) target = $region9
    $region8: #{tpu_custom_call.1} parent=1 // pred_region
      _
    $region9: #{tpu_custom_call.1} parent=1 // pred_fallthru
      _
    // Predicated region
    $region10: #{tpu_custom_call.1} parent=1 // pred_check
      _
    $region11: #{tpu_custom_call.1} parent=1 // pred_check_branch
      %37 = sbr.rel (0) target = $region13
    $region12: #{tpu_custom_call.1} parent=1 // pred_region
      %s39 = ssub.s32 512, 512
      %40 = vsyncadd [#allocation3], %s39
      %s42 = sshll.u32 [#allocation2], 4
      %s43 = int_to_ptr.vmem [resolvable:$true] %s42
      %45 = dma.hbm_to_vmem [thread:$0]  %s2, 512, %s43, [#allocation3]
    $region13: #{tpu_custom_call.1} parent=1 // pred_fallthru
      _
    // Predicated region
    $region14: #{tpu_custom_call.1} parent=1 // pred_check
      _
    $region15: #{tpu_custom_call.1} parent=1 // pred_check_branch
      %47 = sbr.rel (0) target = $region17
    $region16: #{tpu_custom_call.1} parent=1 // pred_region
      %s49 = ssub.s32 9728, 9728
      %50 = vsyncadd [#allocation6], %s49
      %s51 = sshll.u32 [#allocation5], 4
      %s52 = int_to_ptr.vmem [resolvable:$true] %s51
      %57 = dma.hbm_to_vmem [thread:$0]  %s3, 9728, %s52, [#allocation6], 256, 256, 16
    $region17: #{tpu_custom_call.1} parent=1 // pred_fallthru
      _
    // Predicated region
    $region18: #{tpu_custom_call.1} parent=1 // pred_check
      _
    $region19: #{tpu_custom_call.1} parent=1 // pred_check_branch
      %59 = sbr.rel (0) target = $region21
    $region20: #{tpu_custom_call.1} parent=1 // pred_region
      %s61 = ssub.s32 64, 64
      %62 = vsyncadd [#allocation6], %s61
      %s64 = sshll.u32 [#allocation7], 4
      %s65 = int_to_ptr.vmem [resolvable:$true] %s64
      %67 = dma.hbm_to_vmem [thread:$0]  %s4, 64, %s65, [#allocation6]
    $region21: #{tpu_custom_call.1} parent=1 // pred_fallthru
      _
    // Predicated region
    $region22: #{tpu_custom_call.1} parent=1 // pred_check
      _
    $region23: #{tpu_custom_call.1} parent=1 // pred_check_branch
      %69 = sbr.rel (0) target = $region25
    $region24: #{tpu_custom_call.1} parent=1 // pred_region
      %s71 = ssub.s32 8192, 8192
      %72 = vsyncadd [#allocation9], %s71
      %s73 = sshll.u32 [#allocation8], 4
      %s74 = int_to_ptr.vmem [resolvable:$true] %s73
      %79 = dma.hbm_to_vmem [thread:$0]  %s5, 8192, %s74, [#allocation9], 128, 128, 8
    $region25: #{tpu_custom_call.1} parent=1 // pred_fallthru
      _
    // Predicated region
    $region26: #{tpu_custom_call.1} parent=1 // pred_check
      _
    $region27: #{tpu_custom_call.1} parent=1 // pred_check_branch
      %81 = sbr.rel (0) target = $region29
    $region28: #{tpu_custom_call.1} parent=1 // pred_region
      %s83 = ssub.s32 32, 32
      %84 = vsyncadd [#allocation9], %s83
      %s86 = sshll.u32 [#allocation10], 4
      %s87 = int_to_ptr.vmem [resolvable:$true] %s86
      %89 = dma.hbm_to_vmem [thread:$0]  %s6, 32, %s87, [#allocation9]
    $region29: #{tpu_custom_call.1} parent=1 // pred_fallthru
      _
    // Predicated region
    $region30: #{tpu_custom_call.1} parent=1 // pred_check
      _
    $region31: #{tpu_custom_call.1} parent=1 // pred_check_branch
      %91 = sbr.rel (0) target = $region33
    $region32: #{tpu_custom_call.1} parent=1 // pred_region
      %s93 = ssub.s32 64, 64
      %94 = vsyncadd [#allocation12], %s93
      %s96 = sshll.u32 [#allocation11], 4
      %s97 = int_to_ptr.vmem [resolvable:$true] %s96
      %99 = dma.hbm_to_vmem [thread:$0]  %s7, 64, %s97, [#allocation12]
    $region33: #{tpu_custom_call.1} parent=1 // pred_fallthru
      _
    // Predicated region
    $region34: #{tpu_custom_call.1} parent=1 // pred_check
      _
    $region35: #{tpu_custom_call.1} parent=1 // pred_check_branch
      %101 = sbr.rel (0) target = $region37
    $region36: #{tpu_custom_call.1} parent=1 // pred_region
      _
    $region37: #{tpu_custom_call.1} parent=1 // pred_fallthru
      _
    // Predicated region
    $region38: #{tpu_custom_call.1} parent=1 // pred_check
      _
    $region39: #{tpu_custom_call.1} parent=1 // pred_check_branch
      %103 = sbr.rel (0) target = $region41
    $region40: #{tpu_custom_call.1} parent=1 // pred_region
      _
    $region41: #{tpu_custom_call.1} parent=1 // pred_fallthru
      _
    // Predicated region
    $region42: #{tpu_custom_call.1} parent=1 // pred_check
      _
    $region43: #{tpu_custom_call.1} parent=1 // pred_check_branch
      %105 = sbr.rel (0) target = $region45
    $region44: #{tpu_custom_call.1} parent=1 // pred_region
      %s107 = ssub.s32 32, 32
      %108 = vsyncadd [#allocation12], %s107
      %s110 = sshll.u32 [#allocation13], 4
      %s111 = int_to_ptr.vmem [resolvable:$true] %s110
      %113 = dma.hbm_to_vmem [thread:$0]  %s10, 32, %s111, [#allocation12]
    $region45: #{tpu_custom_call.1} parent=1 // pred_fallthru
      _
    // Predicated region
    $region46: #{tpu_custom_call.1} parent=1 // pred_check
      _
    $region47: #{tpu_custom_call.1} parent=1 // pred_check_branch
      %115 = sbr.rel (0) target = $region49
    $region48: #{tpu_custom_call.1} parent=1 // pred_region
      %s117 = ssub.s32 32768, 32768
      %118 = vsyncadd [#allocation15], %s117
      %s119 = sshll.u32 [#allocation14], 4
      %s120 = int_to_ptr.vmem [resolvable:$true] %s119
      %125 = dma.hbm_to_vmem [thread:$0]  %s11, 32768, %s120, [#allocation15], 256, 256, 16
    $region49: #{tpu_custom_call.1} parent=1 // pred_fallthru
      _
    // Predicated region
    $region50: #{tpu_custom_call.1} parent=1 // pred_check
      _
    $region51: #{tpu_custom_call.1} parent=1 // pred_check_branch
      %127 = sbr.rel (0) target = $region53
    $region52: #{tpu_custom_call.1} parent=1 // pred_region
      _
    $region53: #{tpu_custom_call.1} parent=1 // pred_fallthru
      _
    // Predicated region
    $region54: #{tpu_custom_call.1} parent=1 // pred_check
      _
    $region55: #{tpu_custom_call.1} parent=1 // pred_check_branch
      %129 = sbr.rel (0) target = $region57
    $region56: #{tpu_custom_call.1} parent=1 // pred_region
      %s131 = ssub.s32 8192, 8192
      %132 = vsyncadd [#allocation15], %s131
      %s133 = sshll.u32 [#allocation16], 4
      %s134 = int_to_ptr.vmem [resolvable:$true] %s133
      %139 = dma.hbm_to_vmem [thread:$0]  %s13, 8192, %s134, [#allocation15], 128, 128, 8
    $region57: #{tpu_custom_call.1} parent=1 // pred_fallthru
      _
    // Predicated region
    $region58: #{tpu_custom_call.1} parent=1 // pred_check
      _
    $region59: #{tpu_custom_call.1} parent=1 // pred_check_branch
      %141 = sbr.rel (0) target = $region61
    $region60: #{tpu_custom_call.1} parent=1 // pred_region
      _
    $region61: #{tpu_custom_call.1} parent=1 // pred_fallthru
      _
    // Predicated region
    $region62: #{tpu_custom_call.1} parent=1 // pred_check
      _
    $region63: #{tpu_custom_call.1} parent=1 // pred_check_branch
      %143 = sbr.rel (0) target = $region65
    $region64: #{tpu_custom_call.1} parent=1 // pred_region
      %s145 = ssub.s32 4096, 4096
      %146 = vsyncadd [#allocation18], %s145
      %s147 = sshll.u32 [#allocation17], 4
      %s148 = int_to_ptr.vmem [resolvable:$true] %s147
      %153 = dma.hbm_to_vmem [thread:$0]  %s15, 4096, %s148, [#allocation18], 128, 128, 8
    $region65: #{tpu_custom_call.1} parent=1 // pred_fallthru
      _
    // Predicated region
    $region66: #{tpu_custom_call.1} parent=1 // pred_check
      _
    $region67: #{tpu_custom_call.1} parent=1 // pred_check_branch
      %155 = sbr.rel (0) target = $region69
    $region68: #{tpu_custom_call.1} parent=1 // pred_region
      %s157 = ssub.s32 4096, 4096
      %158 = vsyncadd [#allocation18], %s157
      %s159 = sshll.u32 [#allocation19], 4
      %s160 = int_to_ptr.vmem [resolvable:$true] %s159
      %165 = dma.hbm_to_vmem [thread:$0]  %s16, 4096, %s160, [#allocation18], 128, 128, 8
    $region69: #{tpu_custom_call.1} parent=1 // pred_fallthru
      _
    // Predicated region
    $region70: #{tpu_custom_call.1} parent=1 // pred_check
      _
    $region71: #{tpu_custom_call.1} parent=1 // pred_check_branch
      %167 = sbr.rel (0) target = $region73
    $region72: #{tpu_custom_call.1} parent=1 // pred_region
      %s169 = ssub.s32 4096, 4096
      %170 = vsyncadd [#allocation21], %s169
      %s171 = sshll.u32 [#allocation20], 4
      %s172 = int_to_ptr.vmem [resolvable:$true] %s171
      %177 = dma.hbm_to_vmem [thread:$0]  %s17, 4096, %s172, [#allocation21], 128, 128, 8
    $region73: #{tpu_custom_call.1} parent=1 // pred_fallthru
      _
    // Predicated region
    $region74: #{tpu_custom_call.1} parent=1 // pred_check
      _
    $region75: #{tpu_custom_call.1} parent=1 // pred_check_branch
      %179 = sbr.rel (0) target = $region77
    $region76: #{tpu_custom_call.1} parent=1 // pred_region
      _
    $region77: #{tpu_custom_call.1} parent=1 // pred_fallthru
      _
    // Predicated region
    $region78: #{tpu_custom_call.1} parent=1 // pred_check
      _
    $region79: #{tpu_custom_call.1} parent=1 // pred_check_branch
      %181 = sbr.rel (0) target = $region81
    $region80: #{tpu_custom_call.1} parent=1 // pred_region
      %182 = dma.done [#allocation3], 512
    $region81: #{tpu_custom_call.1} parent=1 // pred_fallthru
      _
    // Predicated region
    $region82: #{tpu_custom_call.1} parent=1 // pred_check
      _
    $region83: #{tpu_custom_call.1} parent=1 // pred_check_branch
      %184 = sbr.rel (0) target = $region85
    $region84: #{tpu_custom_call.1} parent=1 // pred_region
      %185 = dma.done [#allocation6], 9728
    $region85: #{tpu_custom_call.1} parent=1 // pred_fallthru
      _
    // Predicated region
    $region86: #{tpu_custom_call.1} parent=1 // pred_check
      _
    $region87: #{tpu_custom_call.1} parent=1 // pred_check_branch
      %187 = sbr.rel (0) target = $region89
    $region88: #{tpu_custom_call.1} parent=1 // pred_region
      %188 = dma.done [#allocation6], 64
    $region89: #{tpu_custom_call.1} parent=1 // pred_fallthru
      _
    // Predicated region
    $region90: #{tpu_custom_call.1} parent=1 // pred_check
      _
    $region91: #{tpu_custom_call.1} parent=1 // pred_check_branch
      %190 = sbr.rel (0) target = $region93
    $region92: #{tpu_custom_call.1} parent=1 // pred_region
      %191 = dma.done [#allocation9], 8192
    $region93: #{tpu_custom_call.1} parent=1 // pred_fallthru
      _
    // Predicated region
    $region94: #{tpu_custom_call.1} parent=1 // pred_check
      _
    $region95: #{tpu_custom_call.1} parent=1 // pred_check_branch
      %193 = sbr.rel (0) target = $region97
    $region96: #{tpu_custom_call.1} parent=1 // pred_region
      %194 = dma.done [#allocation9], 32
    $region97: #{tpu_custom_call.1} parent=1 // pred_fallthru
      _
    // Predicated region
    $region98: #{tpu_custom_call.1} parent=1 // pred_check
      _
    $region99: #{tpu_custom_call.1} parent=1 // pred_check_branch
      %196 = sbr.rel (0) target = $region101
    $region100: #{tpu_custom_call.1} parent=1 // pred_region
      %197 = dma.done [#allocation12], 64
    $region101: #{tpu_custom_call.1} parent=1 // pred_fallthru
      _
    // Predicated region
    $region102: #{tpu_custom_call.1} parent=1 // pred_check
      _
    $region103: #{tpu_custom_call.1} parent=1 // pred_check_branch
      %199 = sbr.rel (0) target = $region105
    $region104: #{tpu_custom_call.1} parent=1 // pred_region
      %200 = dma.done [#allocation12], 32
    $region105: #{tpu_custom_call.1} parent=1 // pred_fallthru
      _
    // Predicated region
    $region106: #{tpu_custom_call.1} parent=1 // pred_check
      _
    $region107: #{tpu_custom_call.1} parent=1 // pred_check_branch
      %202 = sbr.rel (0) target = $region109
    $region108: #{tpu_custom_call.1} parent=1 // pred_region
      %203 = dma.done [#allocation15], 32768
    $region109: #{tpu_custom_call.1} parent=1 // pred_fallthru
      _
    // Predicated region
    $region110: #{tpu_custom_call.1} parent=1 // pred_check
      _
    $region111: #{tpu_custom_call.1} parent=1 // pred_check_branch
      %205 = sbr.rel (0) target = $region113
    $region112: #{tpu_custom_call.1} parent=1 // pred_region
      %206 = dma.done [#allocation15], 8192
    $region113: #{tpu_custom_call.1} parent=1 // pred_fallthru
      _
    // Predicated region
    $region114: #{tpu_custom_call.1} parent=1 // pred_check
      _
    $region115: #{tpu_custom_call.1} parent=1 // pred_check_branch
      %208 = sbr.rel (0) target = $region117
    $region116: #{tpu_custom_call.1} parent=1 // pred_region
      %209 = dma.done [#allocation18], 4096
    $region117: #{tpu_custom_call.1} parent=1 // pred_fallthru
      _
    // Predicated region
    $region118: #{tpu_custom_call.1} parent=1 // pred_check
      _
    $region119: #{tpu_custom_call.1} parent=1 // pred_check_branch
      %211 = sbr.rel (0) target = $region121
    $region120: #{tpu_custom_call.1} parent=1 // pred_region
      %212 = dma.done [#allocation18], 4096
    $region121: #{tpu_custom_call.1} parent=1 // pred_fallthru
      _
    // Predicated region
    $region122: #{tpu_custom_call.1} parent=1 // pred_check
      _
    $region123: #{tpu_custom_call.1} parent=1 // pred_check_branch
      %214 = sbr.rel (0) target = $region125
    $region124: #{tpu_custom_call.1} parent=1 // pred_region
      %215 = dma.done [#allocation21], 4096
    $region125: #{tpu_custom_call.1} parent=1 // pred_fallthru
      _
    %v217 = vld [vmem:[%s0] sm:$0xff]
    %v218 = vld [vmem:[%s0 + $0x8] sm:$0xf]
    %v219 = vld [vmem:[#allocation5] sm:$0xff]
    %v220 = vld [vmem:[#allocation5 + $0x8] sm:$0xff]
    %v221 = vld [vmem:[#allocation5 + $0x10] sm:$0xff]
    %v222 = vld [vmem:[#allocation5 + $0x18] sm:$0xff]
    %v223 = vld [vmem:[#allocation5 + $0x20] sm:$0xff]
    %v224 = vld [vmem:[#allocation5 + $0x28] sm:$0xff]
    %v225 = vld [vmem:[#allocation5 + $0x30] sm:$0xff]
    %v226 = vld [vmem:[#allocation5 + $0x38] sm:$0xff]
    %v227 = vld [vmem:[#allocation5 + $0x40] sm:$0xff]
    %v228 = vld [vmem:[#allocation5 + $0x48] sm:$0xff]
    %v229 = vld [vmem:[#allocation5 + $0x50] sm:$0xff]
    %v230 = vld [vmem:[#allocation5 + $0x58] sm:$0xff]
    %v231 = vld [vmem:[#allocation5 + $0x60] sm:$0xff]
    %v232 = vld [vmem:[#allocation5 + $0x68] sm:$0xff]
    %v233 = vld [vmem:[#allocation5 + $0x70] sm:$0xff]
    %v234 = vld [vmem:[#allocation5 + $0x78] sm:$0xff]
    %v235 = vld [vmem:[#allocation5 + $0x80] sm:$0xff]
    %v236 = vld [vmem:[#allocation5 + $0x88] sm:$0xff]
    %v237 = vld [vmem:[#allocation5 + $0x90] sm:$0xff]
    %v238 = vld [vmem:[#allocation5 + $0x98] sm:$0xff]
    %v239 = vld [vmem:[#allocation5 + $0xa0] sm:$0xff]
    %v240 = vld [vmem:[#allocation5 + $0xa8] sm:$0xff]
    %v241 = vld [vmem:[#allocation5 + $0xb0] sm:$0xff]
    %v242 = vld [vmem:[#allocation5 + $0xb8] sm:$0xff]
    %v243 = vld [vmem:[#allocation5 + $0xc0] sm:$0xff]
    %v244 = vld [vmem:[#allocation5 + $0xc8] sm:$0xff]
    %v245 = vld [vmem:[#allocation5 + $0xd0] sm:$0xff]
    %v246 = vld [vmem:[#allocation5 + $0xd8] sm:$0xff]
    %v247 = vld [vmem:[#allocation5 + $0xe0] sm:$0xff]
    %v248 = vld [vmem:[#allocation5 + $0xe8] sm:$0xff]
    %v249 = vld [vmem:[#allocation5 + $0xf0] sm:$0xff]
    %v250 = vld [vmem:[#allocation5 + $0xf8] sm:$0xff]
    %v251 = vld [vmem:[#allocation5 + $0x100] sm:$0xff]
    %v252 = vld [vmem:[#allocation5 + $0x108] sm:$0xff]
    %v253 = vld [vmem:[#allocation5 + $0x110] sm:$0xff]
    %v254 = vld [vmem:[#allocation5 + $0x118] sm:$0xff]
    %v255 = vld [vmem:[#allocation5 + $0x120] sm:$0xff]
    %v256 = vld [vmem:[#allocation5 + $0x128] sm:$0xff]
    %v257 = vld [vmem:[#allocation5 + $0x130] sm:$0xff]
    %v258 = vld [vmem:[#allocation5 + $0x138] sm:$0xff]
    %v259 = vld [vmem:[#allocation5 + $0x140] sm:$0xff]
    %v260 = vld [vmem:[#allocation5 + $0x148] sm:$0xff]
    %v261 = vld [vmem:[#allocation5 + $0x150] sm:$0xff]
    %v262 = vld [vmem:[#allocation5 + $0x158] sm:$0xff]
    %v263 = vld [vmem:[#allocation5 + $0x160] sm:$0xff]
    %v264 = vld [vmem:[#allocation5 + $0x168] sm:$0xff]
    %v265 = vld [vmem:[#allocation5 + $0x170] sm:$0xff]
    %v266 = vld [vmem:[#allocation5 + $0x178] sm:$0xff]
    %v267 = vld [vmem:[#allocation5 + $0x180] sm:$0xff]
    %v268 = vld [vmem:[#allocation5 + $0x188] sm:$0xff]
    %v269 = vld [vmem:[#allocation5 + $0x190] sm:$0xff]
    %v270 = vld [vmem:[#allocation5 + $0x198] sm:$0xff]
    %v271 = vld [vmem:[#allocation5 + $0x1a0] sm:$0xff]
    %v272 = vld [vmem:[#allocation5 + $0x1a8] sm:$0xff]
    %v273 = vld [vmem:[#allocation5 + $0x1b0] sm:$0xff]
    %v274 = vld [vmem:[#allocation5 + $0x1b8] sm:$0xff]
    %v275 = vld [vmem:[#allocation5 + $0x1c0] sm:$0xff]
    %v276 = vld [vmem:[#allocation5 + $0x1c8] sm:$0xff]
    %v277 = vld [vmem:[#allocation5 + $0x1d0] sm:$0xff]
    %v278 = vld [vmem:[#allocation5 + $0x1d8] sm:$0xff]
    %v279 = vld [vmem:[#allocation5 + $0x1e0] sm:$0xff]
    %v280 = vld [vmem:[#allocation5 + $0x1e8] sm:$0xff]
    %v281 = vld [vmem:[#allocation5 + $0x1f0] sm:$0xff]
    %v282 = vld [vmem:[#allocation5 + $0x1f8] sm:$0xff]
    %v283 = vld [vmem:[#allocation5 + $0x200] sm:$0xff]
    %v284 = vld [vmem:[#allocation5 + $0x208] sm:$0xff]
    %v285 = vld [vmem:[#allocation5 + $0x210] sm:$0xff]
    %v286 = vld [vmem:[#allocation5 + $0x218] sm:$0xff]
    %v287 = vld [vmem:[#allocation5 + $0x220] sm:$0xff]
    %v288 = vld [vmem:[#allocation5 + $0x228] sm:$0xff]
    %v289 = vld [vmem:[#allocation5 + $0x230] sm:$0xff]
    %v290 = vld [vmem:[#allocation5 + $0x238] sm:$0xff]
    %v291 = vld [vmem:[#allocation5 + $0x240] sm:$0xff]
    %v292 = vld [vmem:[#allocation5 + $0x248] sm:$0xff]
    %v293 = vld [vmem:[#allocation5 + $0x250] sm:$0x33]
    %v294 = vld [vmem:[#allocation5 + $0x258] sm:$0x33]
    %v295 = vld [vmem:[#allocation7] sm:$0xf]
    %v297 = vlaneseq
    %v298 = vshrl.u32 %v297, 7
    %v299 = vsub.s32 0, %v298
    %v300 = vrot.slane %v295, %v299
    %v301 = vlaneseq
    %v302 = vshrl.u32 %v301, 7
    %v303 = vsub.s32 1, %v302
    %v304 = vrot.slane %v295, %v303
    %v305 = vlaneseq
    %v306 = vshrl.u32 %v305, 7
    %v307 = vsub.s32 2, %v306
    %v308 = vrot.slane %v295, %v307
    %v309 = vlaneseq
    %v310 = vshrl.u32 %v309, 7
    %v311 = vsub.s32 3, %v310
    %v312 = vrot.slane %v295, %v311
    %v319 = vunpack.c.l.b16 %v217
    %v320 = vunpack.c.h.b16 %v217
    %v321 = vunpack.c.l.b16 %v218
    %v322 = vpack.c.b16 %v319, %v319
    %v323 = vpack.c.b16 %v320, %v320
    %v324 = vpack.c.b16 %v321, %v321
    %v403 = vunpack.c.l.b16 %v219
    %v404 = vunpack.c.h.b16 %v219
    %v405 = vunpack.c.l.b16 %v220
    %v406 = vunpack.c.h.b16 %v220
    %v407 = vunpack.c.l.b16 %v221
    %v408 = vunpack.c.h.b16 %v221
    %v409 = vunpack.c.l.b16 %v222
    %v410 = vunpack.c.h.b16 %v222
    %v411 = vunpack.c.l.b16 %v223
    %v412 = vunpack.c.h.b16 %v223
    %v413 = vunpack.c.l.b16 %v224
    %v414 = vunpack.c.h.b16 %v224
    %v415 = vunpack.c.l.b16 %v225
    %v416 = vunpack.c.h.b16 %v225
    %v417 = vunpack.c.l.b16 %v226
    %v418 = vunpack.c.h.b16 %v226
    %v419 = vunpack.c.l.b16 %v227
    %v420 = vunpack.c.h.b16 %v227
    %v421 = vunpack.c.l.b16 %v228
    %v422 = vunpack.c.h.b16 %v228
    %v423 = vunpack.c.l.b16 %v229
    %v424 = vunpack.c.h.b16 %v229
    %v425 = vunpack.c.l.b16 %v230
    %v426 = vunpack.c.h.b16 %v230
    %v427 = vunpack.c.l.b16 %v231
    %v428 = vunpack.c.h.b16 %v231
    %v429 = vunpack.c.l.b16 %v232
    %v430 = vunpack.c.h.b16 %v232
    %v431 = vunpack.c.l.b16 %v233
    %v432 = vunpack.c.h.b16 %v233
    %v433 = vunpack.c.l.b16 %v234
    %v434 = vunpack.c.h.b16 %v234
    %v435 = vunpack.c.l.b16 %v235
    %v436 = vunpack.c.h.b16 %v235
    %v437 = vunpack.c.l.b16 %v236
    %v438 = vunpack.c.h.b16 %v236
    %v439 = vunpack.c.l.b16 %v237
    %v440 = vunpack.c.h.b16 %v237
    %v441 = vunpack.c.l.b16 %v238
    %v442 = vunpack.c.h.b16 %v238
    %v443 = vunpack.c.l.b16 %v239
    %v444 = vunpack.c.h.b16 %v239
    %v445 = vunpack.c.l.b16 %v240
    %v446 = vunpack.c.h.b16 %v240
    %v447 = vunpack.c.l.b16 %v241
    %v448 = vunpack.c.h.b16 %v241
    %v449 = vunpack.c.l.b16 %v242
    %v450 = vunpack.c.h.b16 %v242
    %v451 = vunpack.c.l.b16 %v243
    %v452 = vunpack.c.h.b16 %v243
    %v453 = vunpack.c.l.b16 %v244
    %v454 = vunpack.c.h.b16 %v244
    %v455 = vunpack.c.l.b16 %v245
    %v456 = vunpack.c.h.b16 %v245
    %v457 = vunpack.c.l.b16 %v246
    %v458 = vunpack.c.h.b16 %v246
    %v459 = vunpack.c.l.b16 %v247
    %v460 = vunpack.c.h.b16 %v247
    %v461 = vunpack.c.l.b16 %v248
    %v462 = vunpack.c.h.b16 %v248
    %v463 = vunpack.c.l.b16 %v249
    %v464 = vunpack.c.h.b16 %v249
    %v465 = vunpack.c.l.b16 %v250
    %v466 = vunpack.c.h.b16 %v250
    %v467 = vunpack.c.l.b16 %v251
    %v468 = vunpack.c.h.b16 %v251
    %v469 = vunpack.c.l.b16 %v252
    %v470 = vunpack.c.h.b16 %v252
    %v471 = vunpack.c.l.b16 %v253
    %v472 = vunpack.c.h.b16 %v253
    %v473 = vunpack.c.l.b16 %v254
    %v474 = vunpack.c.h.b16 %v254
    %v475 = vunpack.c.l.b16 %v255
    %v476 = vunpack.c.h.b16 %v255
    %v477 = vunpack.c.l.b16 %v256
    %v478 = vunpack.c.h.b16 %v256
    %v479 = vunpack.c.l.b16 %v257
    %v480 = vunpack.c.h.b16 %v257
    %v481 = vunpack.c.l.b16 %v258
    %v482 = vunpack.c.h.b16 %v258
    %v483 = vunpack.c.l.b16 %v259
    %v484 = vunpack.c.h.b16 %v259
    %v485 = vunpack.c.l.b16 %v260
    %v486 = vunpack.c.h.b16 %v260
    %v487 = vunpack.c.l.b16 %v261
    %v488 = vunpack.c.h.b16 %v261
    %v489 = vunpack.c.l.b16 %v262
    %v490 = vunpack.c.h.b16 %v262
    %v491 = vunpack.c.l.b16 %v263
    %v492 = vunpack.c.h.b16 %v263
    %v493 = vunpack.c.l.b16 %v264
    %v494 = vunpack.c.h.b16 %v264
    %v495 = vunpack.c.l.b16 %v265
    %v496 = vunpack.c.h.b16 %v265
    %v497 = vunpack.c.l.b16 %v266
    %v498 = vunpack.c.h.b16 %v266
    %v499 = vunpack.c.l.b16 %v267
    %v500 = vunpack.c.h.b16 %v267
    %v501 = vunpack.c.l.b16 %v268
    %v502 = vunpack.c.h.b16 %v268
    %v503 = vunpack.c.l.b16 %v269
    %v504 = vunpack.c.h.b16 %v269
    %v505 = vunpack.c.l.b16 %v270
    %v506 = vunpack.c.h.b16 %v270
    %v507 = vunpack.c.l.b16 %v271
    %v508 = vunpack.c.h.b16 %v271
    %v509 = vunpack.c.l.b16 %v272
    %v510 = vunpack.c.h.b16 %v272
    %v511 = vunpack.c.l.b16 %v273
    %v512 = vunpack.c.h.b16 %v273
    %v513 = vunpack.c.l.b16 %v274
    %v514 = vunpack.c.h.b16 %v274
    %v515 = vunpack.c.l.b16 %v275
    %v516 = vunpack.c.h.b16 %v275
    %v517 = vunpack.c.l.b16 %v276
    %v518 = vunpack.c.h.b16 %v276
    %v519 = vunpack.c.l.b16 %v277
    %v520 = vunpack.c.h.b16 %v277
    %v521 = vunpack.c.l.b16 %v278
    %v522 = vunpack.c.h.b16 %v278
    %v523 = vunpack.c.l.b16 %v279
    %v524 = vunpack.c.h.b16 %v279
    %v525 = vunpack.c.l.b16 %v280
    %v526 = vunpack.c.h.b16 %v280
    %v527 = vunpack.c.l.b16 %v281
    %v528 = vunpack.c.h.b16 %v281
    %v529 = vunpack.c.l.b16 %v282
    %v530 = vunpack.c.h.b16 %v282
    %v531 = vunpack.c.l.b16 %v283
    %v532 = vunpack.c.h.b16 %v283
    %v533 = vunpack.c.l.b16 %v284
    %v534 = vunpack.c.h.b16 %v284
    %v535 = vunpack.c.l.b16 %v285
    %v536 = vunpack.c.h.b16 %v285
    %v537 = vunpack.c.l.b16 %v286
    %v538 = vunpack.c.h.b16 %v286
    %v539 = vunpack.c.l.b16 %v287
    %v540 = vunpack.c.h.b16 %v287
    %v541 = vunpack.c.l.b16 %v288
    %v542 = vunpack.c.h.b16 %v288
    %v543 = vunpack.c.l.b16 %v289
    %v544 = vunpack.c.h.b16 %v289
    %v545 = vunpack.c.l.b16 %v290
    %v546 = vunpack.c.h.b16 %v290
    %v547 = vunpack.c.l.b16 %v291
    %v548 = vunpack.c.h.b16 %v291
    %v549 = vunpack.c.l.b16 %v292
    %v550 = vunpack.c.h.b16 %v292
    %v551 = vunpack.c.l.b16 %v293
    %v552 = vunpack.c.h.b16 %v293
    %v553 = vunpack.c.l.b16 %v294
    %v554 = vunpack.c.h.b16 %v294
    %v555 = vpack.c.b16 %v407, %v403
    %v556 = vpack.c.b16 %v408, %v404
    %v557 = vpack.c.b16 %v409, %v405
    %v558 = vpack.c.b16 %v410, %v406
    %v559 = vpack.c.b16 %v415, %v411
    %v560 = vpack.c.b16 %v416, %v412
    %v561 = vpack.c.b16 %v417, %v413
    %v562 = vpack.c.b16 %v418, %v414
    %v563 = vpack.c.b16 %v423, %v419
    %v564 = vpack.c.b16 %v424, %v420
    %v565 = vpack.c.b16 %v425, %v421
    %v566 = vpack.c.b16 %v426, %v422
    %v567 = vpack.c.b16 %v431, %v427
    %v568 = vpack.c.b16 %v432, %v428
    %v569 = vpack.c.b16 %v433, %v429
    %v570 = vpack.c.b16 %v434, %v430
    %v571 = vpack.c.b16 %v439, %v435
    %v572 = vpack.c.b16 %v440, %v436
    %v573 = vpack.c.b16 %v441, %v437
    %v574 = vpack.c.b16 %v442, %v438
    %v575 = vpack.c.b16 %v447, %v443
    %v576 = vpack.c.b16 %v448, %v444
    %v577 = vpack.c.b16 %v449, %v445
    %v578 = vpack.c.b16 %v450, %v446
    %v579 = vpack.c.b16 %v455, %v451
    %v580 = vpack.c.b16 %v456, %v452
    %v581 = vpack.c.b16 %v457, %v453
    %v582 = vpack.c.b16 %v458, %v454
    %v583 = vpack.c.b16 %v463, %v459
    %v584 = vpack.c.b16 %v464, %v460
    %v585 = vpack.c.b16 %v465, %v461
    %v586 = vpack.c.b16 %v466, %v462
    %v587 = vpack.c.b16 %v471, %v467
    %v588 = vpack.c.b16 %v472, %v468
    %v589 = vpack.c.b16 %v473, %v469
    %v590 = vpack.c.b16 %v474, %v470
    %v591 = vpack.c.b16 %v479, %v475
    %v592 = vpack.c.b16 %v480, %v476
    %v593 = vpack.c.b16 %v481, %v477
    %v594 = vpack.c.b16 %v482, %v478
    %v595 = vpack.c.b16 %v487, %v483
    %v596 = vpack.c.b16 %v488, %v484
    %v597 = vpack.c.b16 %v489, %v485
    %v598 = vpack.c.b16 %v490, %v486
    %v599 = vpack.c.b16 %v495, %v491
    %v600 = vpack.c.b16 %v496, %v492
    %v601 = vpack.c.b16 %v497, %v493
    %v602 = vpack.c.b16 %v498, %v494
    %v603 = vpack.c.b16 %v503, %v499
    %v604 = vpack.c.b16 %v504, %v500
    %v605 = vpack.c.b16 %v505, %v501
    %v606 = vpack.c.b16 %v506, %v502
    %v607 = vpack.c.b16 %v511, %v507
    %v608 = vpack.c.b16 %v512, %v508
    %v609 = vpack.c.b16 %v513, %v509
    %v610 = vpack.c.b16 %v514, %v510
    %v611 = vpack.c.b16 %v519, %v515
    %v612 = vpack.c.b16 %v520, %v516
    %v613 = vpack.c.b16 %v521, %v517
    %v614 = vpack.c.b16 %v522, %v518
    %v615 = vpack.c.b16 %v527, %v523
    %v616 = vpack.c.b16 %v528, %v524
    %v617 = vpack.c.b16 %v529, %v525
    %v618 = vpack.c.b16 %v530, %v526
    %v619 = vpack.c.b16 %v535, %v531
    %v620 = vpack.c.b16 %v536, %v532
    %v621 = vpack.c.b16 %v537, %v533
    %v622 = vpack.c.b16 %v538, %v534
    %v623 = vpack.c.b16 %v543, %v539
    %v624 = vpack.c.b16 %v544, %v540
    %v625 = vpack.c.b16 %v545, %v541
    %v626 = vpack.c.b16 %v546, %v542
    %v627 = vpack.c.b16 %v551, %v547
    %v628 = vpack.c.b16 %v552, %v548
    %v629 = vpack.c.b16 %v553, %v549
    %v630 = vpack.c.b16 %v554, %v550
    %vm703 = vcmask 359424
    %v705 = vsel %vm703, %v324, 0
    %vm707 = vcmask 1045504
    %v709 = vsel %vm707, %v627, 0
    %v712 = vsel %vm707, %v628, 0
    %v715 = vsel %vm707, %v629, 0
    %v718 = vsel %vm707, %v630, 0
    %720 = vmatprep.subr.bf16.mxu0 %v556
    %721 = vmatpush1.bf16.msra.mxu0 %v555
    %722 = vmatprep.subr.bf16.mxu0 %v560
    %723 = vmatpush1.bf16.msra.mxu0 %v559
    %724 = vmatprep.subr.bf16.mxu0 %v564
    %725 = vmatpush1.bf16.msra.mxu0 %v563
    %726 = vmatprep.subr.bf16.mxu0 %v568
    %727 = vmatpush1.bf16.msra.mxu0 %v567
    %728 = vmatprep.subr.bf16.mxu0 %v572
    %729 = vmatpush1.bf16.msra.mxu0 %v571
    %730 = vmatprep.subr.bf16.mxu0 %v576
    %731 = vmatpush1.bf16.msra.mxu0 %v575
    %732 = vmatprep.subr.bf16.mxu0 %v580
    %733 = vmatpush1.bf16.msra.mxu0 %v579
    %734 = vmatprep.subr.bf16.mxu0 %v584
    %735 = vmatpush1.bf16.msra.mxu0 %v583
    %736 = vmatprep.subr.bf16.mxu0 %v588
    %737 = vmatpush1.bf16.msra.mxu0 %v587
    %738 = vmatprep.subr.bf16.mxu0 %v592
    %739 = vmatpush1.bf16.msra.mxu0 %v591
    %740 = vmatprep.subr.bf16.mxu0 %v596
    %741 = vmatpush1.bf16.msra.mxu0 %v595
    %742 = vmatprep.subr.bf16.mxu0 %v600
    %743 = vmatpush1.bf16.msra.mxu0 %v599
    %744 = vmatprep.subr.bf16.mxu0 %v604
    %745 = vmatpush1.bf16.msra.mxu0 %v603
    %746 = vmatprep.subr.bf16.mxu0 %v608
    %747 = vmatpush1.bf16.msra.mxu0 %v607
    %748 = vmatprep.subr.bf16.mxu0 %v612
    %749 = vmatpush1.bf16.msra.mxu0 %v611
    %750 = vmatprep.subr.bf16.mxu0 %v616
    %751 = vmatpush1.bf16.msra.mxu0 %v615
    %752 = vmatprep.mubr.bf16.mxu0 %v323
    %753 = vmatmul.mubr.bf16.gmra.mrb[0].mxu0 %v322
    %v754 = vpop.f32.mrb[0].mxu0
    %v755 = vadd.f32 %v300, %v754
    %v756 = vpop.f32.mrb[0].mxu0
    %v757 = vadd.f32 %v304, %v756
    %v758 = vpop.f32.mrb[0].mxu0
    %v759 = vpop.f32.mrb[0].mxu0
    %760 = vdwg.mxu0
    %761 = vmatprep.subr.bf16.mxu0 %v620
    %762 = vmatpush1.bf16.msra.mxu0 %v619
    %763 = vmatprep.subr.bf16.mxu0 %v624
    %764 = vmatpush1.bf16.msra.mxu0 %v623
    %765 = vmatprep.subr.bf16.mxu0 %v712
    %766 = vmatpush1.bf16.msra.mxu0 %v709
    %767 = vmatprep.subr.bf16.mxu0 0
    %768 = vmatpush1.bf16.msra.mxu0 0
    %769 = vmatprep.subr.bf16.mxu0 0
    %770 = vmatpush1.bf16.msra.mxu0 0
    %771 = vmatprep.subr.bf16.mxu0 0
    %772 = vmatpush1.bf16.msra.mxu0 0
    %773 = vmatprep.subr.bf16.mxu0 0
    %774 = vmatpush1.bf16.msra.mxu0 0
    %775 = vmatprep.subr.bf16.mxu0 0
    %776 = vmatpush1.bf16.msra.mxu0 0
    %777 = vmatprep.subr.bf16.mxu0 0
    %778 = vmatpush1.bf16.msra.mxu0 0
    %779 = vmatprep.subr.bf16.mxu0 0
    %780 = vmatpush1.bf16.msra.mxu0 0
    %781 = vmatprep.subr.bf16.mxu0 0
    %782 = vmatpush1.bf16.msra.mxu0 0
    %783 = vmatprep.subr.bf16.mxu0 0
    %784 = vmatpush1.bf16.msra.mxu0 0
    %785 = vmatprep.subr.bf16.mxu0 0
    %786 = vmatpush1.bf16.msra.mxu0 0
    %787 = vmatprep.subr.bf16.mxu0 0
    %788 = vmatpush1.bf16.msra.mxu0 0
    %789 = vmatprep.subr.bf16.mxu0 0
    %790 = vmatpush1.bf16.msra.mxu0 0
    %791 = vmatprep.subr.bf16.mxu0 0
    %792 = vmatpush1.bf16.msra.mxu0 0
    %793 = vmatprep.mubr.bf16.mxu0 0
    %794 = vmatmul.mubr.bf16.gmra.mrb[0].mxu0 %v705
    %v795 = vpop.f32.mrb[0].mxu0
    %v796 = vadd.f32 %v755, %v795
    %v797 = vpop.f32.mrb[0].mxu0
    %v798 = vadd.f32 %v757, %v797
    %v799 = vpop.f32.mrb[0].mxu0
    %v800 = vpop.f32.mrb[0].mxu0
    %801 = vdwg.mxu0
    %802 = vmatprep.subr.bf16.mxu0 %v558
    %803 = vmatpush1.bf16.msra.mxu0 %v557
    %804 = vmatprep.subr.bf16.mxu0 %v562
    %805 = vmatpush1.bf16.msra.mxu0 %v561
    %806 = vmatprep.subr.bf16.mxu0 %v566
    %807 = vmatpush1.bf16.msra.mxu0 %v565
    %808 = vmatprep.subr.bf16.mxu0 %v570
    %809 = vmatpush1.bf16.msra.mxu0 %v569
    %810 = vmatprep.subr.bf16.mxu0 %v574
    %811 = vmatpush1.bf16.msra.mxu0 %v573
    %812 = vmatprep.subr.bf16.mxu0 %v578
    %813 = vmatpush1.bf16.msra.mxu0 %v577
    %814 = vmatprep.subr.bf16.mxu0 %v582
    %815 = vmatpush1.bf16.msra.mxu0 %v581
    %816 = vmatprep.subr.bf16.mxu0 %v586
    %817 = vmatpush1.bf16.msra.mxu0 %v585
    %818 = vmatprep.subr.bf16.mxu0 %v590
    %819 = vmatpush1.bf16.msra.mxu0 %v589
    %820 = vmatprep.subr.bf16.mxu0 %v594
    %821 = vmatpush1.bf16.msra.mxu0 %v593
    %822 = vmatprep.subr.bf16.mxu0 %v598
    %823 = vmatpush1.bf16.msra.mxu0 %v597
    %824 = vmatprep.subr.bf16.mxu0 %v602
    %825 = vmatpush1.bf16.msra.mxu0 %v601
    %826 = vmatprep.subr.bf16.mxu0 %v606
    %827 = vmatpush1.bf16.msra.mxu0 %v605
    %828 = vmatprep.subr.bf16.mxu0 %v610
    %829 = vmatpush1.bf16.msra.mxu0 %v609
    %830 = vmatprep.subr.bf16.mxu0 %v614
    %831 = vmatpush1.bf16.msra.mxu0 %v613
    %832 = vmatprep.subr.bf16.mxu0 %v618
    %833 = vmatpush1.bf16.msra.mxu0 %v617
    %834 = vmatprep.mubr.bf16.mxu0 %v323
    %835 = vmatmul.mubr.bf16.gmra.mrb[0].mxu0 %v322
    %v836 = vpop.f32.mrb[0].mxu0
    %v837 = vadd.f32 %v308, %v836
    %v838 = vpop.f32.mrb[0].mxu0
    %v839 = vadd.f32 %v312, %v838
    %v840 = vpop.f32.mrb[0].mxu0
    %v841 = vpop.f32.mrb[0].mxu0
    %842 = vdwg.mxu0
    %843 = vmatprep.subr.bf16.mxu0 %v622
    %844 = vmatpush1.bf16.msra.mxu0 %v621
    %845 = vmatprep.subr.bf16.mxu0 %v626
    %846 = vmatpush1.bf16.msra.mxu0 %v625
    %847 = vmatprep.subr.bf16.mxu0 %v718
    %848 = vmatpush1.bf16.msra.mxu0 %v715
    %849 = vmatprep.subr.bf16.mxu0 0
    %850 = vmatpush1.bf16.msra.mxu0 0
    %851 = vmatprep.subr.bf16.mxu0 0
    %852 = vmatpush1.bf16.msra.mxu0 0
    %853 = vmatprep.subr.bf16.mxu0 0
    %854 = vmatpush1.bf16.msra.mxu0 0
    %855 = vmatprep.subr.bf16.mxu0 0
    %856 = vmatpush1.bf16.msra.mxu0 0
    %857 = vmatprep.subr.bf16.mxu0 0
    %858 = vmatpush1.bf16.msra.mxu0 0
    %859 = vmatprep.subr.bf16.mxu0 0
    %860 = vmatpush1.bf16.msra.mxu0 0
    %861 = vmatprep.subr.bf16.mxu0 0
    %862 = vmatpush1.bf16.msra.mxu0 0
    %863 = vmatprep.subr.bf16.mxu0 0
    %864 = vmatpush1.bf16.msra.mxu0 0
    %865 = vmatprep.subr.bf16.mxu0 0
    %866 = vmatpush1.bf16.msra.mxu0 0
    %867 = vmatprep.subr.bf16.mxu0 0
    %868 = vmatpush1.bf16.msra.mxu0 0
    %869 = vmatprep.subr.bf16.mxu0 0
    %870 = vmatpush1.bf16.msra.mxu0 0
    %871 = vmatprep.subr.bf16.mxu0 0
    %872 = vmatpush1.bf16.msra.mxu0 0
    %873 = vmatprep.subr.bf16.mxu0 0
    %874 = vmatpush1.bf16.msra.mxu0 0
    %875 = vmatprep.mubr.bf16.mxu0 0
    %876 = vmatmul.mubr.bf16.gmra.mrb[0].mxu0 %v705
    %v877 = vpop.f32.mrb[0].mxu0
    %v878 = vadd.f32 %v837, %v877
    %v879 = vpop.f32.mrb[0].mxu0
    %v880 = vadd.f32 %v839, %v879
    %v881 = vpop.f32.mrb[0].mxu0
    %v882 = vpop.f32.mrb[0].mxu0
    %883 = vdwg.mxu0
    %v884 = vmax.f32 %v796, 0.0
    %v885 = vmax.f32 %v798, 0.0
    %v886 = vmax.f32 %v878, 0.0
    %v887 = vmax.f32 %v880, 0.0
    %v888 = vpack.c.bf16 %v884, %v884
    %v889 = vpack.c.bf16 %v885, %v885
    %v890 = vpack.c.bf16 %v886, %v886
    %v891 = vpack.c.bf16 %v887, %v887
    %v892 = vld [vmem:[#allocation8] sm:$0xff]
    %v893 = vld [vmem:[#allocation8 + $0x8] sm:$0xff]
    %v894 = vld [vmem:[#allocation8 + $0x10] sm:$0xff]
    %v895 = vld [vmem:[#allocation8 + $0x18] sm:$0xff]
    %v896 = vld [vmem:[#allocation8 + $0x20] sm:$0xff]
    %v897 = vld [vmem:[#allocation8 + $0x28] sm:$0xff]
    %v898 = vld [vmem:[#allocation8 + $0x30] sm:$0xff]
    %v899 = vld [vmem:[#allocation8 + $0x38] sm:$0xff]
    %v900 = vld [vmem:[#allocation8 + $0x40] sm:$0xff]
    %v901 = vld [vmem:[#allocation8 + $0x48] sm:$0xff]
    %v902 = vld [vmem:[#allocation8 + $0x50] sm:$0xff]
    %v903 = vld [vmem:[#allocation8 + $0x58] sm:$0xff]
    %v904 = vld [vmem:[#allocation8 + $0x60] sm:$0xff]
    %v905 = vld [vmem:[#allocation8 + $0x68] sm:$0xff]
    %v906 = vld [vmem:[#allocation8 + $0x70] sm:$0xff]
    %v907 = vld [vmem:[#allocation8 + $0x78] sm:$0xff]
    %v908 = vld [vmem:[#allocation8 + $0x80] sm:$0xff]
    %v909 = vld [vmem:[#allocation8 + $0x88] sm:$0xff]
    %v910 = vld [vmem:[#allocation8 + $0x90] sm:$0xff]
    %v911 = vld [vmem:[#allocation8 + $0x98] sm:$0xff]
    %v912 = vld [vmem:[#allocation8 + $0xa0] sm:$0xff]
    %v913 = vld [vmem:[#allocation8 + $0xa8] sm:$0xff]
    %v914 = vld [vmem:[#allocation8 + $0xb0] sm:$0xff]
    %v915 = vld [vmem:[#allocation8 + $0xb8] sm:$0xff]
    %v916 = vld [vmem:[#allocation8 + $0xc0] sm:$0xff]
    %v917 = vld [vmem:[#allocation8 + $0xc8] sm:$0xff]
    %v918 = vld [vmem:[#allocation8 + $0xd0] sm:$0xff]
    %v919 = vld [vmem:[#allocation8 + $0xd8] sm:$0xff]
    %v920 = vld [vmem:[#allocation8 + $0xe0] sm:$0xff]
    %v921 = vld [vmem:[#allocation8 + $0xe8] sm:$0xff]
    %v922 = vld [vmem:[#allocation8 + $0xf0] sm:$0xff]
    %v923 = vld [vmem:[#allocation8 + $0xf8] sm:$0xff]
    %v924 = vld [vmem:[#allocation8 + $0x100] sm:$0xff]
    %v925 = vld [vmem:[#allocation8 + $0x108] sm:$0xff]
    %v926 = vld [vmem:[#allocation8 + $0x110] sm:$0xff]
    %v927 = vld [vmem:[#allocation8 + $0x118] sm:$0xff]
    %v928 = vld [vmem:[#allocation8 + $0x120] sm:$0xff]
    %v929 = vld [vmem:[#allocation8 + $0x128] sm:$0xff]
    %v930 = vld [vmem:[#allocation8 + $0x130] sm:$0xff]
    %v931 = vld [vmem:[#allocation8 + $0x138] sm:$0xff]
    %v932 = vld [vmem:[#allocation8 + $0x140] sm:$0xff]
    %v933 = vld [vmem:[#allocation8 + $0x148] sm:$0xff]
    %v934 = vld [vmem:[#allocation8 + $0x150] sm:$0xff]
    %v935 = vld [vmem:[#allocation8 + $0x158] sm:$0xff]
    %v936 = vld [vmem:[#allocation8 + $0x160] sm:$0xff]
    %v937 = vld [vmem:[#allocation8 + $0x168] sm:$0xff]
    %v938 = vld [vmem:[#allocation8 + $0x170] sm:$0xff]
    %v939 = vld [vmem:[#allocation8 + $0x178] sm:$0xff]
    %v940 = vld [vmem:[#allocation8 + $0x180] sm:$0xff]
    %v941 = vld [vmem:[#allocation8 + $0x188] sm:$0xff]
    %v942 = vld [vmem:[#allocation8 + $0x190] sm:$0xff]
    %v943 = vld [vmem:[#allocation8 + $0x198] sm:$0xff]
    %v944 = vld [vmem:[#allocation8 + $0x1a0] sm:$0xff]
    %v945 = vld [vmem:[#allocation8 + $0x1a8] sm:$0xff]
    %v946 = vld [vmem:[#allocation8 + $0x1b0] sm:$0xff]
    %v947 = vld [vmem:[#allocation8 + $0x1b8] sm:$0xff]
    %v948 = vld [vmem:[#allocation8 + $0x1c0] sm:$0xff]
    %v949 = vld [vmem:[#allocation8 + $0x1c8] sm:$0xff]
    %v950 = vld [vmem:[#allocation8 + $0x1d0] sm:$0xff]
    %v951 = vld [vmem:[#allocation8 + $0x1d8] sm:$0xff]
    %v952 = vld [vmem:[#allocation8 + $0x1e0] sm:$0xff]
    %v953 = vld [vmem:[#allocation8 + $0x1e8] sm:$0xff]
    %v954 = vld [vmem:[#allocation8 + $0x1f0] sm:$0xff]
    %v955 = vld [vmem:[#allocation8 + $0x1f8] sm:$0xff]
    %v956 = vld [vmem:[#allocation10] sm:$0x3]
    %v958 = vlaneseq
    %v959 = vshrl.u32 %v958, 7
    %v960 = vsub.s32 0, %v959
    %v961 = vrot.slane %v956, %v960
    %v962 = vlaneseq
    %v963 = vshrl.u32 %v962, 7
    %v964 = vsub.s32 1, %v963
    %v965 = vrot.slane %v956, %v964
    %v1032 = vunpack.c.l.b16 %v892
    %v1033 = vunpack.c.h.b16 %v892
    %v1034 = vunpack.c.l.b16 %v893
    %v1035 = vunpack.c.h.b16 %v893
    %v1036 = vunpack.c.l.b16 %v894
    %v1037 = vunpack.c.h.b16 %v894
    %v1038 = vunpack.c.l.b16 %v895
    %v1039 = vunpack.c.h.b16 %v895
    %v1040 = vunpack.c.l.b16 %v896
    %v1041 = vunpack.c.h.b16 %v896
    %v1042 = vunpack.c.l.b16 %v897
    %v1043 = vunpack.c.h.b16 %v897
    %v1044 = vunpack.c.l.b16 %v898
    %v1045 = vunpack.c.h.b16 %v898
    %v1046 = vunpack.c.l.b16 %v899
    %v1047 = vunpack.c.h.b16 %v899
    %v1048 = vunpack.c.l.b16 %v900
    %v1049 = vunpack.c.h.b16 %v900
    %v1050 = vunpack.c.l.b16 %v901
    %v1051 = vunpack.c.h.b16 %v901
    %v1052 = vunpack.c.l.b16 %v902
    %v1053 = vunpack.c.h.b16 %v902
    %v1054 = vunpack.c.l.b16 %v903
    %v1055 = vunpack.c.h.b16 %v903
    %v1056 = vunpack.c.l.b16 %v904
    %v1057 = vunpack.c.h.b16 %v904
    %v1058 = vunpack.c.l.b16 %v905
    %v1059 = vunpack.c.h.b16 %v905
    %v1060 = vunpack.c.l.b16 %v906
    %v1061 = vunpack.c.h.b16 %v906
    %v1062 = vunpack.c.l.b16 %v907
    %v1063 = vunpack.c.h.b16 %v907
    %v1064 = vunpack.c.l.b16 %v908
    %v1065 = vunpack.c.h.b16 %v908
    %v1066 = vunpack.c.l.b16 %v909
    %v1067 = vunpack.c.h.b16 %v909
    %v1068 = vunpack.c.l.b16 %v910
    %v1069 = vunpack.c.h.b16 %v910
    %v1070 = vunpack.c.l.b16 %v911
    %v1071 = vunpack.c.h.b16 %v911
    %v1072 = vunpack.c.l.b16 %v912
    %v1073 = vunpack.c.h.b16 %v912
    %v1074 = vunpack.c.l.b16 %v913
    %v1075 = vunpack.c.h.b16 %v913
    %v1076 = vunpack.c.l.b16 %v914
    %v1077 = vunpack.c.h.b16 %v914
    %v1078 = vunpack.c.l.b16 %v915
    %v1079 = vunpack.c.h.b16 %v915
    %v1080 = vunpack.c.l.b16 %v916
    %v1081 = vunpack.c.h.b16 %v916
    %v1082 = vunpack.c.l.b16 %v917
    %v1083 = vunpack.c.h.b16 %v917
    %v1084 = vunpack.c.l.b16 %v918
    %v1085 = vunpack.c.h.b16 %v918
    %v1086 = vunpack.c.l.b16 %v919
    %v1087 = vunpack.c.h.b16 %v919
    %v1088 = vunpack.c.l.b16 %v920
    %v1089 = vunpack.c.h.b16 %v920
    %v1090 = vunpack.c.l.b16 %v921
    %v1091 = vunpack.c.h.b16 %v921
    %v1092 = vunpack.c.l.b16 %v922
    %v1093 = vunpack.c.h.b16 %v922
    %v1094 = vunpack.c.l.b16 %v923
    %v1095 = vunpack.c.h.b16 %v923
    %v1096 = vunpack.c.l.b16 %v924
    %v1097 = vunpack.c.h.b16 %v924
    %v1098 = vunpack.c.l.b16 %v925
    %v1099 = vunpack.c.h.b16 %v925
    %v1100 = vunpack.c.l.b16 %v926
    %v1101 = vunpack.c.h.b16 %v926
    %v1102 = vunpack.c.l.b16 %v927
    %v1103 = vunpack.c.h.b16 %v927
    %v1104 = vunpack.c.l.b16 %v928
    %v1105 = vunpack.c.h.b16 %v928
    %v1106 = vunpack.c.l.b16 %v929
    %v1107 = vunpack.c.h.b16 %v929
    %v1108 = vunpack.c.l.b16 %v930
    %v1109 = vunpack.c.h.b16 %v930
    %v1110 = vunpack.c.l.b16 %v931
    %v1111 = vunpack.c.h.b16 %v931
    %v1112 = vunpack.c.l.b16 %v932
    %v1113 = vunpack.c.h.b16 %v932
    %v1114 = vunpack.c.l.b16 %v933
    %v1115 = vunpack.c.h.b16 %v933
    %v1116 = vunpack.c.l.b16 %v934
    %v1117 = vunpack.c.h.b16 %v934
    %v1118 = vunpack.c.l.b16 %v935
    %v1119 = vunpack.c.h.b16 %v935
    %v1120 = vunpack.c.l.b16 %v936
    %v1121 = vunpack.c.h.b16 %v936
    %v1122 = vunpack.c.l.b16 %v937
    %v1123 = vunpack.c.h.b16 %v937
    %v1124 = vunpack.c.l.b16 %v938
    %v1125 = vunpack.c.h.b16 %v938
    %v1126 = vunpack.c.l.b16 %v939
    %v1127 = vunpack.c.h.b16 %v939
    %v1128 = vunpack.c.l.b16 %v940
    %v1129 = vunpack.c.h.b16 %v940
    %v1130 = vunpack.c.l.b16 %v941
    %v1131 = vunpack.c.h.b16 %v941
    %v1132 = vunpack.c.l.b16 %v942
    %v1133 = vunpack.c.h.b16 %v942
    %v1134 = vunpack.c.l.b16 %v943
    %v1135 = vunpack.c.h.b16 %v943
    %v1136 = vunpack.c.l.b16 %v944
    %v1137 = vunpack.c.h.b16 %v944
    %v1138 = vunpack.c.l.b16 %v945
    %v1139 = vunpack.c.h.b16 %v945
    %v1140 = vunpack.c.l.b16 %v946
    %v1141 = vunpack.c.h.b16 %v946
    %v1142 = vunpack.c.l.b16 %v947
    %v1143 = vunpack.c.h.b16 %v947
    %v1144 = vunpack.c.l.b16 %v948
    %v1145 = vunpack.c.h.b16 %v948
    %v1146 = vunpack.c.l.b16 %v949
    %v1147 = vunpack.c.h.b16 %v949
    %v1148 = vunpack.c.l.b16 %v950
    %v1149 = vunpack.c.h.b16 %v950
    %v1150 = vunpack.c.l.b16 %v951
    %v1151 = vunpack.c.h.b16 %v951
    %v1152 = vunpack.c.l.b16 %v952
    %v1153 = vunpack.c.h.b16 %v952
    %v1154 = vunpack.c.l.b16 %v953
    %v1155 = vunpack.c.h.b16 %v953
    %v1156 = vunpack.c.l.b16 %v954
    %v1157 = vunpack.c.h.b16 %v954
    %v1158 = vunpack.c.l.b16 %v955
    %v1159 = vunpack.c.h.b16 %v955
    %v1160 = vpack.c.b16 %v1034, %v1032
    %v1161 = vpack.c.b16 %v1035, %v1033
    %v1162 = vpack.c.b16 %v1038, %v1036
    %v1163 = vpack.c.b16 %v1039, %v1037
    %v1164 = vpack.c.b16 %v1042, %v1040
    %v1165 = vpack.c.b16 %v1043, %v1041
    %v1166 = vpack.c.b16 %v1046, %v1044
    %v1167 = vpack.c.b16 %v1047, %v1045
    %v1168 = vpack.c.b16 %v1050, %v1048
    %v1169 = vpack.c.b16 %v1051, %v1049
    %v1170 = vpack.c.b16 %v1054, %v1052
    %v1171 = vpack.c.b16 %v1055, %v1053
    %v1172 = vpack.c.b16 %v1058, %v1056
    %v1173 = vpack.c.b16 %v1059, %v1057
    %v1174 = vpack.c.b16 %v1062, %v1060
    %v1175 = vpack.c.b16 %v1063, %v1061
    %v1176 = vpack.c.b16 %v1066, %v1064
    %v1177 = vpack.c.b16 %v1067, %v1065
    %v1178 = vpack.c.b16 %v1070, %v1068
    %v1179 = vpack.c.b16 %v1071, %v1069
    %v1180 = vpack.c.b16 %v1074, %v1072
    %v1181 = vpack.c.b16 %v1075, %v1073
    %v1182 = vpack.c.b16 %v1078, %v1076
    %v1183 = vpack.c.b16 %v1079, %v1077
    %v1184 = vpack.c.b16 %v1082, %v1080
    %v1185 = vpack.c.b16 %v1083, %v1081
    %v1186 = vpack.c.b16 %v1086, %v1084
    %v1187 = vpack.c.b16 %v1087, %v1085
    %v1188 = vpack.c.b16 %v1090, %v1088
    %v1189 = vpack.c.b16 %v1091, %v1089
    %v1190 = vpack.c.b16 %v1094, %v1092
    %v1191 = vpack.c.b16 %v1095, %v1093
    %v1192 = vpack.c.b16 %v1098, %v1096
    %v1193 = vpack.c.b16 %v1099, %v1097
    %v1194 = vpack.c.b16 %v1102, %v1100
    %v1195 = vpack.c.b16 %v1103, %v1101
    %v1196 = vpack.c.b16 %v1106, %v1104
    %v1197 = vpack.c.b16 %v1107, %v1105
    %v1198 = vpack.c.b16 %v1110, %v1108
    %v1199 = vpack.c.b16 %v1111, %v1109
    %v1200 = vpack.c.b16 %v1114, %v1112
    %v1201 = vpack.c.b16 %v1115, %v1113
    %v1202 = vpack.c.b16 %v1118, %v1116
    %v1203 = vpack.c.b16 %v1119, %v1117
    %v1204 = vpack.c.b16 %v1122, %v1120
    %v1205 = vpack.c.b16 %v1123, %v1121
    %v1206 = vpack.c.b16 %v1126, %v1124
    %v1207 = vpack.c.b16 %v1127, %v1125
    %v1208 = vpack.c.b16 %v1130, %v1128
    %v1209 = vpack.c.b16 %v1131, %v1129
    %v1210 = vpack.c.b16 %v1134, %v1132
    %v1211 = vpack.c.b16 %v1135, %v1133
    %v1212 = vpack.c.b16 %v1138, %v1136
    %v1213 = vpack.c.b16 %v1139, %v1137
    %v1214 = vpack.c.b16 %v1142, %v1140
    %v1215 = vpack.c.b16 %v1143, %v1141
    %v1216 = vpack.c.b16 %v1146, %v1144
    %v1217 = vpack.c.b16 %v1147, %v1145
    %v1218 = vpack.c.b16 %v1150, %v1148
    %v1219 = vpack.c.b16 %v1151, %v1149
    %v1220 = vpack.c.b16 %v1154, %v1152
    %v1221 = vpack.c.b16 %v1155, %v1153
    %v1222 = vpack.c.b16 %v1158, %v1156
    %v1223 = vpack.c.b16 %v1159, %v1157
    %1288 = vmatprep.subr.bf16.mxu0 %v1161
    %1289 = vmatpush1.bf16.msra.mxu0 %v1160
    %1290 = vmatprep.subr.bf16.mxu0 %v1163
    %1291 = vmatpush1.bf16.msra.mxu0 %v1162
    %1292 = vmatprep.subr.bf16.mxu0 %v1165
    %1293 = vmatpush1.bf16.msra.mxu0 %v1164
    %1294 = vmatprep.subr.bf16.mxu0 %v1167
    %1295 = vmatpush1.bf16.msra.mxu0 %v1166
    %1296 = vmatprep.subr.bf16.mxu0 %v1169
    %1297 = vmatpush1.bf16.msra.mxu0 %v1168
    %1298 = vmatprep.subr.bf16.mxu0 %v1171
    %1299 = vmatpush1.bf16.msra.mxu0 %v1170
    %1300 = vmatprep.subr.bf16.mxu0 %v1173
    %1301 = vmatpush1.bf16.msra.mxu0 %v1172
    %1302 = vmatprep.subr.bf16.mxu0 %v1175
    %1303 = vmatpush1.bf16.msra.mxu0 %v1174
    %1304 = vmatprep.subr.bf16.mxu0 %v1177
    %1305 = vmatpush1.bf16.msra.mxu0 %v1176
    %1306 = vmatprep.subr.bf16.mxu0 %v1179
    %1307 = vmatpush1.bf16.msra.mxu0 %v1178
    %1308 = vmatprep.subr.bf16.mxu0 %v1181
    %1309 = vmatpush1.bf16.msra.mxu0 %v1180
    %1310 = vmatprep.subr.bf16.mxu0 %v1183
    %1311 = vmatpush1.bf16.msra.mxu0 %v1182
    %1312 = vmatprep.subr.bf16.mxu0 %v1185
    %1313 = vmatpush1.bf16.msra.mxu0 %v1184
    %1314 = vmatprep.subr.bf16.mxu0 %v1187
    %1315 = vmatpush1.bf16.msra.mxu0 %v1186
    %1316 = vmatprep.subr.bf16.mxu0 %v1189
    %1317 = vmatpush1.bf16.msra.mxu0 %v1188
    %1318 = vmatprep.subr.bf16.mxu0 %v1191
    %1319 = vmatpush1.bf16.msra.mxu0 %v1190
    %1320 = vmatprep.mubr.bf16.mxu0 %v889
    %1321 = vmatmul.mubr.bf16.gmra.mrb[0].mxu0 %v888
    %v1322 = vpop.f32.mrb[0].mxu0
    %v1323 = vadd.f32 %v961, %v1322
    %v1324 = vpop.f32.mrb[0].mxu0
    %v1325 = vadd.f32 %v965, %v1324
    %v1326 = vpop.f32.mrb[0].mxu0
    %v1327 = vpop.f32.mrb[0].mxu0
    %1328 = vdwg.mxu0
    %1329 = vmatprep.subr.bf16.mxu0 %v1193
    %1330 = vmatpush1.bf16.msra.mxu0 %v1192
    %1331 = vmatprep.subr.bf16.mxu0 %v1195
    %1332 = vmatpush1.bf16.msra.mxu0 %v1194
    %1333 = vmatprep.subr.bf16.mxu0 %v1197
    %1334 = vmatpush1.bf16.msra.mxu0 %v1196
    %1335 = vmatprep.subr.bf16.mxu0 %v1199
    %1336 = vmatpush1.bf16.msra.mxu0 %v1198
    %1337 = vmatprep.subr.bf16.mxu0 %v1201
    %1338 = vmatpush1.bf16.msra.mxu0 %v1200
    %1339 = vmatprep.subr.bf16.mxu0 %v1203
    %1340 = vmatpush1.bf16.msra.mxu0 %v1202
    %1341 = vmatprep.subr.bf16.mxu0 %v1205
    %1342 = vmatpush1.bf16.msra.mxu0 %v1204
    %1343 = vmatprep.subr.bf16.mxu0 %v1207
    %1344 = vmatpush1.bf16.msra.mxu0 %v1206
    %1345 = vmatprep.subr.bf16.mxu0 %v1209
    %1346 = vmatpush1.bf16.msra.mxu0 %v1208
    %1347 = vmatprep.subr.bf16.mxu0 %v1211
    %1348 = vmatpush1.bf16.msra.mxu0 %v1210
    %1349 = vmatprep.subr.bf16.mxu0 %v1213
    %1350 = vmatpush1.bf16.msra.mxu0 %v1212
    %1351 = vmatprep.subr.bf16.mxu0 %v1215
    %1352 = vmatpush1.bf16.msra.mxu0 %v1214
    %1353 = vmatprep.subr.bf16.mxu0 %v1217
    %1354 = vmatpush1.bf16.msra.mxu0 %v1216
    %1355 = vmatprep.subr.bf16.mxu0 %v1219
    %1356 = vmatpush1.bf16.msra.mxu0 %v1218
    %1357 = vmatprep.subr.bf16.mxu0 %v1221
    %1358 = vmatpush1.bf16.msra.mxu0 %v1220
    %1359 = vmatprep.subr.bf16.mxu0 %v1223
    %1360 = vmatpush1.bf16.msra.mxu0 %v1222
    %1361 = vmatprep.mubr.bf16.mxu0 %v891
    %1362 = vmatmul.mubr.bf16.gmra.mrb[0].mxu0 %v890
    %v1363 = vpop.f32.mrb[0].mxu0
    %v1364 = vadd.f32 %v1323, %v1363
    %v1365 = vpop.f32.mrb[0].mxu0
    %v1366 = vadd.f32 %v1325, %v1365
    %v1367 = vpop.f32.mrb[0].mxu0
    %v1368 = vpop.f32.mrb[0].mxu0
    %1369 = vdwg.mxu0
    %v1370 = vmax.f32 %v1364, 0.0
    %v1371 = vmax.f32 %v1366, 0.0
    %v1372 = vpack.c.bf16 %v1370, %v1370
    %v1373 = vpack.c.bf16 %v1371, %v1371
    %v1374 = vld [vmem:[%s1] sm:$0xff]
    %v1375 = vld [vmem:[#allocation11] sm:$0xf]
    %v1376 = vld [vmem:[%s8] sm:$0x1]
    %v1378 = vlaneseq
    %v1379 = vshrl.u32 %v1378, 7
    %v1380 = vsub.s32 0, %v1379
    %v1381 = vrot.slane %v1376, %v1380
    %vm1383 = vcmask 31744
    %v1385 = vsel %vm1383, %v1374, 0
    %vm1387 = vcmask 1043456
    %v1389 = vsel %vm1387, %v1375, 0
    %1391 = vmatprep.subr.mxu0 0.0
    %1392 = vmatpush1.msra.mxu0 %v1389
    %1393 = vmatprep.subr.mxu0 0.0
    %1394 = vmatpush1.msra.mxu0 0.0
    %1395 = vmatprep.subr.mxu0 0.0
    %1396 = vmatpush1.msra.mxu0 0.0
    %1397 = vmatprep.subr.mxu0 0.0
    %1398 = vmatpush1.msra.mxu0 0.0
    %1399 = vmatprep.subr.mxu0 0.0
    %1400 = vmatpush1.msra.mxu0 0.0
    %1401 = vmatprep.subr.mxu0 0.0
    %1402 = vmatpush1.msra.mxu0 0.0
    %1403 = vmatprep.subr.mxu0 0.0
    %1404 = vmatpush1.msra.mxu0 0.0
    %1405 = vmatprep.subr.mxu0 0.0
    %1406 = vmatpush1.msra.mxu0 0.0
    %1407 = vmatprep.subr.mxu0 0.0
    %1408 = vmatpush1.msra.mxu0 0.0
    %1409 = vmatprep.subr.mxu0 0.0
    %1410 = vmatpush1.msra.mxu0 0.0
    %1411 = vmatprep.subr.mxu0 0.0
    %1412 = vmatpush1.msra.mxu0 0.0
    %1413 = vmatprep.subr.mxu0 0.0
    %1414 = vmatpush1.msra.mxu0 0.0
    %1415 = vmatprep.subr.mxu0 0.0
    %1416 = vmatpush1.msra.mxu0 0.0
    %1417 = vmatprep.subr.mxu0 0.0
    %1418 = vmatpush1.msra.mxu0 0.0
    %1419 = vmatprep.subr.mxu0 0.0
    %1420 = vmatpush1.msra.mxu0 0.0
    %1421 = vmatprep.subr.mxu0 0.0
    %1422 = vmatpush1.msra.mxu0 0.0
    %1423 = vmatprep.subr.mxu0 0.0
    %1424 = vmatpush1.msra.mxu0 0.0
    %1425 = vmatprep.subr.mxu0 0.0
    %1426 = vmatpush1.msra.mxu0 0.0
    %1427 = vmatprep.subr.mxu0 0.0
    %1428 = vmatpush1.msra.mxu0 0.0
    %1429 = vmatprep.subr.mxu0 0.0
    %1430 = vmatpush1.msra.mxu0 0.0
    %1431 = vmatprep.subr.mxu0 0.0
    %1432 = vmatpush1.msra.mxu0 0.0
    %1433 = vmatprep.subr.mxu0 0.0
    %1434 = vmatpush1.msra.mxu0 0.0
    %1435 = vmatprep.subr.mxu0 0.0
    %1436 = vmatpush1.msra.mxu0 0.0
    %1437 = vmatprep.subr.mxu0 0.0
    %1438 = vmatpush1.msra.mxu0 0.0
    %1439 = vmatprep.subr.mxu0 0.0
    %1440 = vmatpush1.msra.mxu0 0.0
    %1441 = vmatprep.subr.mxu0 0.0
    %1442 = vmatpush1.msra.mxu0 0.0
    %1443 = vmatprep.subr.mxu0 0.0
    %1444 = vmatpush1.msra.mxu0 0.0
    %1445 = vmatprep.subr.mxu0 0.0
    %1446 = vmatpush1.msra.mxu0 0.0
    %1447 = vmatprep.subr.mxu0 0.0
    %1448 = vmatpush1.msra.mxu0 0.0
    %1449 = vmatprep.subr.mxu0 0.0
    %1450 = vmatpush1.msra.mxu0 0.0
    %1451 = vmatprep.subr.mxu0 0.0
    %1452 = vmatpush1.msra.mxu0 0.0
    %1453 = vmatprep.subr.mxu0 0.0
    %1454 = vmatpush1.msra.mxu0 0.0
    %1455 = vmatprep.mubr.f32.mxu0 0.0
    %1456 = vmatmul.mubr.f32.gmra.mrb[0].mxu0 %v1385
    %v1457 = vpop.f32.mrb[0].mxu0
    %v1458 = vadd.f32 %v1381, %v1457
    %v1459 = vpop.f32.mrb[0].mxu0
    %1460 = vdwg.mxu0
    %v1461 = vmax.f32 %v1458, 0.0
    %v1462 = vpack.c.bf16 %v1461, %v1461
    %v1463 = vld [vmem:[%s9] sm:$0xff]
    %v1464 = vld [vmem:[%s9 + $0x8] sm:$0xff]
    %v1465 = vld [vmem:[%s9 + $0x10] sm:$0xff]
    %v1466 = vld [vmem:[%s9 + $0x18] sm:$0xff]
    %v1467 = vld [vmem:[#allocation13] sm:$0x3]
    %v1469 = vlaneseq
    %v1470 = vshrl.u32 %v1469, 7
    %v1471 = vsub.s32 0, %v1470
    %v1472 = vrot.slane %v1467, %v1471
    %v1473 = vlaneseq
    %v1474 = vshrl.u32 %v1473, 7
    %v1475 = vsub.s32 1, %v1474
    %v1476 = vrot.slane %v1467, %v1475
    %v1483 = vunpack.c.l.b16 %v1463
    %v1484 = vunpack.c.h.b16 %v1463
    %v1485 = vunpack.c.l.b16 %v1464
    %v1486 = vunpack.c.h.b16 %v1464
    %v1487 = vunpack.c.l.b16 %v1465
    %v1488 = vunpack.c.h.b16 %v1465
    %v1489 = vunpack.c.l.b16 %v1466
    %v1490 = vunpack.c.h.b16 %v1466
    %v1491 = vpack.c.b16 %v1485, %v1483
    %v1492 = vpack.c.b16 %v1486, %v1484
    %v1493 = vpack.c.b16 %v1489, %v1487
    %v1494 = vpack.c.b16 %v1490, %v1488
    %vm1499 = vcmask 261120
    %v1501 = vsel %vm1499, %v1462, 0
    %1503 = vmatprep.subr.bf16.mxu0 %v1492
    %1504 = vmatpush1.bf16.msra.mxu0 %v1491
    %1505 = vmatprep.subr.bf16.mxu0 %v1494
    %1506 = vmatpush1.bf16.msra.mxu0 %v1493
    %1507 = vmatprep.subr.bf16.mxu0 0
    %1508 = vmatpush1.bf16.msra.mxu0 0
    %1509 = vmatprep.subr.bf16.mxu0 0
    %1510 = vmatpush1.bf16.msra.mxu0 0
    %1511 = vmatprep.subr.bf16.mxu0 0
    %1512 = vmatpush1.bf16.msra.mxu0 0
    %1513 = vmatprep.subr.bf16.mxu0 0
    %1514 = vmatpush1.bf16.msra.mxu0 0
    %1515 = vmatprep.subr.bf16.mxu0 0
    %1516 = vmatpush1.bf16.msra.mxu0 0
    %1517 = vmatprep.subr.bf16.mxu0 0
    %1518 = vmatpush1.bf16.msra.mxu0 0
    %1519 = vmatprep.subr.bf16.mxu0 0
    %1520 = vmatpush1.bf16.msra.mxu0 0
    %1521 = vmatprep.subr.bf16.mxu0 0
    %1522 = vmatpush1.bf16.msra.mxu0 0
    %1523 = vmatprep.subr.bf16.mxu0 0
    %1524 = vmatpush1.bf16.msra.mxu0 0
    %1525 = vmatprep.subr.bf16.mxu0 0
    %1526 = vmatpush1.bf16.msra.mxu0 0
    %1527 = vmatprep.subr.bf16.mxu0 0
    %1528 = vmatpush1.bf16.msra.mxu0 0
    %1529 = vmatprep.subr.bf16.mxu0 0
    %1530 = vmatpush1.bf16.msra.mxu0 0
    %1531 = vmatprep.subr.bf16.mxu0 0
    %1532 = vmatpush1.bf16.msra.mxu0 0
    %1533 = vmatprep.subr.bf16.mxu0 0
    %1534 = vmatpush1.bf16.msra.mxu0 0
    %1535 = vmatprep.mubr.bf16.mxu0 0
    %1536 = vmatmul.mubr.bf16.gmra.mrb[0].mxu0 %v1501
    %v1537 = vpop.f32.mrb[0].mxu0
    %v1538 = vadd.f32 %v1472, %v1537
    %v1539 = vpop.f32.mrb[0].mxu0
    %v1540 = vadd.f32 %v1476, %v1539
    %v1541 = vpop.f32.mrb[0].mxu0
    %v1542 = vpop.f32.mrb[0].mxu0
    %1543 = vdwg.mxu0
    %v1544 = vmax.f32 %v1538, 0.0
    %v1545 = vmax.f32 %v1540, 0.0
    %v1546 = vpack.c.bf16 %v1544, %v1544
    %v1547 = vpack.c.bf16 %v1545, %v1545
    %v1548 = vld [vmem:[#allocation2] sm:$0xff]
    %v1549 = vld [vmem:[#allocation2 + $0x8] sm:$0xff]
    %v1550 = vld [vmem:[#allocation2 + $0x10] sm:$0xff]
    %v1551 = vld [vmem:[#allocation2 + $0x18] sm:$0xff]
    %v1552 = vld [vmem:[#allocation14] sm:$0xff]
    %v1553 = vld [vmem:[#allocation14 + $0x8] sm:$0xff]
    %v1554 = vld [vmem:[#allocation14 + $0x10] sm:$0xff]
    %v1555 = vld [vmem:[#allocation14 + $0x18] sm:$0xff]
    %v1556 = vld [vmem:[#allocation14 + $0x20] sm:$0xff]
    %v1557 = vld [vmem:[#allocation14 + $0x28] sm:$0xff]
    %v1558 = vld [vmem:[#allocation14 + $0x30] sm:$0xff]
    %v1559 = vld [vmem:[#allocation14 + $0x38] sm:$0xff]
    %v1560 = vld [vmem:[#allocation14 + $0x40] sm:$0xff]
    %v1561 = vld [vmem:[#allocation14 + $0x48] sm:$0xff]
    %v1562 = vld [vmem:[#allocation14 + $0x50] sm:$0xff]
    %v1563 = vld [vmem:[#allocation14 + $0x58] sm:$0xff]
    %v1564 = vld [vmem:[#allocation14 + $0x60] sm:$0xff]
    %v1565 = vld [vmem:[#allocation14 + $0x68] sm:$0xff]
    %v1566 = vld [vmem:[#allocation14 + $0x70] sm:$0xff]
    %v1567 = vld [vmem:[#allocation14 + $0x78] sm:$0xff]
    %v1568 = vld [vmem:[#allocation14 + $0x80] sm:$0xff]
    %v1569 = vld [vmem:[#allocation14 + $0x88] sm:$0xff]
    %v1570 = vld [vmem:[#allocation14 + $0x90] sm:$0xff]
    %v1571 = vld [vmem:[#allocation14 + $0x98] sm:$0xff]
    %v1572 = vld [vmem:[#allocation14 + $0xa0] sm:$0xff]
    %v1573 = vld [vmem:[#allocation14 + $0xa8] sm:$0xff]
    %v1574 = vld [vmem:[#allocation14 + $0xb0] sm:$0xff]
    %v1575 = vld [vmem:[#allocation14 + $0xb8] sm:$0xff]
    %v1576 = vld [vmem:[#allocation14 + $0xc0] sm:$0xff]
    %v1577 = vld [vmem:[#allocation14 + $0xc8] sm:$0xff]
    %v1578 = vld [vmem:[#allocation14 + $0xd0] sm:$0xff]
    %v1579 = vld [vmem:[#allocation14 + $0xd8] sm:$0xff]
    %v1580 = vld [vmem:[#allocation14 + $0xe0] sm:$0xff]
    %v1581 = vld [vmem:[#allocation14 + $0xe8] sm:$0xff]
    %v1582 = vld [vmem:[#allocation14 + $0xf0] sm:$0xff]
    %v1583 = vld [vmem:[#allocation14 + $0xf8] sm:$0xff]
    %v1584 = vld [vmem:[#allocation14 + $0x100] sm:$0xff]
    %v1585 = vld [vmem:[#allocation14 + $0x108] sm:$0xff]
    %v1586 = vld [vmem:[#allocation14 + $0x110] sm:$0xff]
    %v1587 = vld [vmem:[#allocation14 + $0x118] sm:$0xff]
    %v1588 = vld [vmem:[#allocation14 + $0x120] sm:$0xff]
    %v1589 = vld [vmem:[#allocation14 + $0x128] sm:$0xff]
    %v1590 = vld [vmem:[#allocation14 + $0x130] sm:$0xff]
    %v1591 = vld [vmem:[#allocation14 + $0x138] sm:$0xff]
    %v1592 = vld [vmem:[#allocation14 + $0x140] sm:$0xff]
    %v1593 = vld [vmem:[#allocation14 + $0x148] sm:$0xff]
    %v1594 = vld [vmem:[#allocation14 + $0x150] sm:$0xff]
    %v1595 = vld [vmem:[#allocation14 + $0x158] sm:$0xff]
    %v1596 = vld [vmem:[#allocation14 + $0x160] sm:$0xff]
    %v1597 = vld [vmem:[#allocation14 + $0x168] sm:$0xff]
    %v1598 = vld [vmem:[#allocation14 + $0x170] sm:$0xff]
    %v1599 = vld [vmem:[#allocation14 + $0x178] sm:$0xff]
    %v1600 = vld [vmem:[#allocation14 + $0x180] sm:$0xff]
    %v1601 = vld [vmem:[#allocation14 + $0x188] sm:$0xff]
    %v1602 = vld [vmem:[#allocation14 + $0x190] sm:$0xff]
    %v1603 = vld [vmem:[#allocation14 + $0x198] sm:$0xff]
    %v1604 = vld [vmem:[#allocation14 + $0x1a0] sm:$0xff]
    %v1605 = vld [vmem:[#allocation14 + $0x1a8] sm:$0xff]
    %v1606 = vld [vmem:[#allocation14 + $0x1b0] sm:$0xff]
    %v1607 = vld [vmem:[#allocation14 + $0x1b8] sm:$0xff]
    %v1608 = vld [vmem:[#allocation14 + $0x1c0] sm:$0xff]
    %v1609 = vld [vmem:[#allocation14 + $0x1c8] sm:$0xff]
    %v1610 = vld [vmem:[#allocation14 + $0x1d0] sm:$0xff]
    %v1611 = vld [vmem:[#allocation14 + $0x1d8] sm:$0xff]
    %v1612 = vld [vmem:[#allocation14 + $0x1e0] sm:$0xff]
    %v1613 = vld [vmem:[#allocation14 + $0x1e8] sm:$0xff]
    %v1614 = vld [vmem:[#allocation14 + $0x1f0] sm:$0xff]
    %v1615 = vld [vmem:[#allocation14 + $0x1f8] sm:$0xff]
    %v1616 = vld [vmem:[#allocation14 + $0x200] sm:$0xff]
    %v1617 = vld [vmem:[#allocation14 + $0x208] sm:$0xff]
    %v1618 = vld [vmem:[#allocation14 + $0x210] sm:$0xff]
    %v1619 = vld [vmem:[#allocation14 + $0x218] sm:$0xff]
    %v1620 = vld [vmem:[#allocation14 + $0x220] sm:$0xff]
    %v1621 = vld [vmem:[#allocation14 + $0x228] sm:$0xff]
    %v1622 = vld [vmem:[#allocation14 + $0x230] sm:$0xff]
    %v1623 = vld [vmem:[#allocation14 + $0x238] sm:$0xff]
    %v1624 = vld [vmem:[#allocation14 + $0x240] sm:$0xff]
    %v1625 = vld [vmem:[#allocation14 + $0x248] sm:$0xff]
    %v1626 = vld [vmem:[#allocation14 + $0x250] sm:$0xff]
    %v1627 = vld [vmem:[#allocation14 + $0x258] sm:$0xff]
    %v1628 = vld [vmem:[#allocation14 + $0x260] sm:$0xff]
    %v1629 = vld [vmem:[#allocation14 + $0x268] sm:$0xff]
    %v1630 = vld [vmem:[#allocation14 + $0x270] sm:$0xff]
    %v1631 = vld [vmem:[#allocation14 + $0x278] sm:$0xff]
    %v1632 = vld [vmem:[#allocation14 + $0x280] sm:$0xff]
    %v1633 = vld [vmem:[#allocation14 + $0x288] sm:$0xff]
    %v1634 = vld [vmem:[#allocation14 + $0x290] sm:$0xff]
    %v1635 = vld [vmem:[#allocation14 + $0x298] sm:$0xff]
    %v1636 = vld [vmem:[#allocation14 + $0x2a0] sm:$0xff]
    %v1637 = vld [vmem:[#allocation14 + $0x2a8] sm:$0xff]
    %v1638 = vld [vmem:[#allocation14 + $0x2b0] sm:$0xff]
    %v1639 = vld [vmem:[#allocation14 + $0x2b8] sm:$0xff]
    %v1640 = vld [vmem:[#allocation14 + $0x2c0] sm:$0xff]
    %v1641 = vld [vmem:[#allocation14 + $0x2c8] sm:$0xff]
    %v1642 = vld [vmem:[#allocation14 + $0x2d0] sm:$0xff]
    %v1643 = vld [vmem:[#allocation14 + $0x2d8] sm:$0xff]
    %v1644 = vld [vmem:[#allocation14 + $0x2e0] sm:$0xff]
    %v1645 = vld [vmem:[#allocation14 + $0x2e8] sm:$0xff]
    %v1646 = vld [vmem:[#allocation14 + $0x2f0] sm:$0xff]
    %v1647 = vld [vmem:[#allocation14 + $0x2f8] sm:$0xff]
    %v1648 = vld [vmem:[#allocation14 + $0x300] sm:$0xff]
    %v1649 = vld [vmem:[#allocation14 + $0x308] sm:$0xff]
    %v1650 = vld [vmem:[#allocation14 + $0x310] sm:$0xff]
    %v1651 = vld [vmem:[#allocation14 + $0x318] sm:$0xff]
    %v1652 = vld [vmem:[#allocation14 + $0x320] sm:$0xff]
    %v1653 = vld [vmem:[#allocation14 + $0x328] sm:$0xff]
    %v1654 = vld [vmem:[#allocation14 + $0x330] sm:$0xff]
    %v1655 = vld [vmem:[#allocation14 + $0x338] sm:$0xff]
    %v1656 = vld [vmem:[#allocation14 + $0x340] sm:$0xff]
    %v1657 = vld [vmem:[#allocation14 + $0x348] sm:$0xff]
    %v1658 = vld [vmem:[#allocation14 + $0x350] sm:$0xff]
    %v1659 = vld [vmem:[#allocation14 + $0x358] sm:$0xff]
    %v1660 = vld [vmem:[#allocation14 + $0x360] sm:$0xff]
    %v1661 = vld [vmem:[#allocation14 + $0x368] sm:$0xff]
    %v1662 = vld [vmem:[#allocation14 + $0x370] sm:$0xff]
    %v1663 = vld [vmem:[#allocation14 + $0x378] sm:$0xff]
    %v1664 = vld [vmem:[#allocation14 + $0x380] sm:$0xff]
    %v1665 = vld [vmem:[#allocation14 + $0x388] sm:$0xff]
    %v1666 = vld [vmem:[#allocation14 + $0x390] sm:$0xff]
    %v1667 = vld [vmem:[#allocation14 + $0x398] sm:$0xff]
    %v1668 = vld [vmem:[#allocation14 + $0x3a0] sm:$0xff]
    %v1669 = vld [vmem:[#allocation14 + $0x3a8] sm:$0xff]
    %v1670 = vld [vmem:[#allocation14 + $0x3b0] sm:$0xff]
    %v1671 = vld [vmem:[#allocation14 + $0x3b8] sm:$0xff]
    %v1672 = vld [vmem:[#allocation14 + $0x3c0] sm:$0xff]
    %v1673 = vld [vmem:[#allocation14 + $0x3c8] sm:$0xff]
    %v1674 = vld [vmem:[#allocation14 + $0x3d0] sm:$0xff]
    %v1675 = vld [vmem:[#allocation14 + $0x3d8] sm:$0xff]
    %v1676 = vld [vmem:[#allocation14 + $0x3e0] sm:$0xff]
    %v1677 = vld [vmem:[#allocation14 + $0x3e8] sm:$0xff]
    %v1678 = vld [vmem:[#allocation14 + $0x3f0] sm:$0xff]
    %v1679 = vld [vmem:[#allocation14 + $0x3f8] sm:$0xff]
    %v1680 = vld [vmem:[#allocation14 + $0x400] sm:$0xff]
    %v1681 = vld [vmem:[#allocation14 + $0x408] sm:$0xff]
    %v1682 = vld [vmem:[#allocation14 + $0x410] sm:$0xff]
    %v1683 = vld [vmem:[#allocation14 + $0x418] sm:$0xff]
    %v1684 = vld [vmem:[#allocation14 + $0x420] sm:$0xff]
    %v1685 = vld [vmem:[#allocation14 + $0x428] sm:$0xff]
    %v1686 = vld [vmem:[#allocation14 + $0x430] sm:$0xff]
    %v1687 = vld [vmem:[#allocation14 + $0x438] sm:$0xff]
    %v1688 = vld [vmem:[#allocation14 + $0x440] sm:$0xff]
    %v1689 = vld [vmem:[#allocation14 + $0x448] sm:$0xff]
    %v1690 = vld [vmem:[#allocation14 + $0x450] sm:$0xff]
    %v1691 = vld [vmem:[#allocation14 + $0x458] sm:$0xff]
    %v1692 = vld [vmem:[#allocation14 + $0x460] sm:$0xff]
    %v1693 = vld [vmem:[#allocation14 + $0x468] sm:$0xff]
    %v1694 = vld [vmem:[#allocation14 + $0x470] sm:$0xff]
    %v1695 = vld [vmem:[#allocation14 + $0x478] sm:$0xff]
    %v1696 = vld [vmem:[#allocation14 + $0x480] sm:$0xff]
    %v1697 = vld [vmem:[#allocation14 + $0x488] sm:$0xff]
    %v1698 = vld [vmem:[#allocation14 + $0x490] sm:$0xff]
    %v1699 = vld [vmem:[#allocation14 + $0x498] sm:$0xff]
    %v1700 = vld [vmem:[#allocation14 + $0x4a0] sm:$0xff]
    %v1701 = vld [vmem:[#allocation14 + $0x4a8] sm:$0xff]
    %v1702 = vld [vmem:[#allocation14 + $0x4b0] sm:$0xff]
    %v1703 = vld [vmem:[#allocation14 + $0x4b8] sm:$0xff]
    %v1704 = vld [vmem:[#allocation14 + $0x4c0] sm:$0xff]
    %v1705 = vld [vmem:[#allocation14 + $0x4c8] sm:$0xff]
    %v1706 = vld [vmem:[#allocation14 + $0x4d0] sm:$0xff]
    %v1707 = vld [vmem:[#allocation14 + $0x4d8] sm:$0xff]
    %v1708 = vld [vmem:[#allocation14 + $0x4e0] sm:$0xff]
    %v1709 = vld [vmem:[#allocation14 + $0x4e8] sm:$0xff]
    %v1710 = vld [vmem:[#allocation14 + $0x4f0] sm:$0xff]
    %v1711 = vld [vmem:[#allocation14 + $0x4f8] sm:$0xff]
    %v1712 = vld [vmem:[#allocation14 + $0x500] sm:$0xff]
    %v1713 = vld [vmem:[#allocation14 + $0x508] sm:$0xff]
    %v1714 = vld [vmem:[#allocation14 + $0x510] sm:$0xff]
    %v1715 = vld [vmem:[#allocation14 + $0x518] sm:$0xff]
    %v1716 = vld [vmem:[#allocation14 + $0x520] sm:$0xff]
    %v1717 = vld [vmem:[#allocation14 + $0x528] sm:$0xff]
    %v1718 = vld [vmem:[#allocation14 + $0x530] sm:$0xff]
    %v1719 = vld [vmem:[#allocation14 + $0x538] sm:$0xff]
    %v1720 = vld [vmem:[#allocation14 + $0x540] sm:$0xff]
    %v1721 = vld [vmem:[#allocation14 + $0x548] sm:$0xff]
    %v1722 = vld [vmem:[#allocation14 + $0x550] sm:$0xff]
    %v1723 = vld [vmem:[#allocation14 + $0x558] sm:$0xff]
    %v1724 = vld [vmem:[#allocation14 + $0x560] sm:$0xff]
    %v1725 = vld [vmem:[#allocation14 + $0x568] sm:$0xff]
    %v1726 = vld [vmem:[#allocation14 + $0x570] sm:$0xff]
    %v1727 = vld [vmem:[#allocation14 + $0x578] sm:$0xff]
    %v1728 = vld [vmem:[#allocation14 + $0x580] sm:$0xff]
    %v1729 = vld [vmem:[#allocation14 + $0x588] sm:$0xff]
    %v1730 = vld [vmem:[#allocation14 + $0x590] sm:$0xff]
    %v1731 = vld [vmem:[#allocation14 + $0x598] sm:$0xff]
    %v1732 = vld [vmem:[#allocation14 + $0x5a0] sm:$0xff]
    %v1733 = vld [vmem:[#allocation14 + $0x5a8] sm:$0xff]
    %v1734 = vld [vmem:[#allocation14 + $0x5b0] sm:$0xff]
    %v1735 = vld [vmem:[#allocation14 + $0x5b8] sm:$0xff]
    %v1736 = vld [vmem:[#allocation14 + $0x5c0] sm:$0xff]
    %v1737 = vld [vmem:[#allocation14 + $0x5c8] sm:$0xff]
    %v1738 = vld [vmem:[#allocation14 + $0x5d0] sm:$0xff]
    %v1739 = vld [vmem:[#allocation14 + $0x5d8] sm:$0xff]
    %v1740 = vld [vmem:[#allocation14 + $0x5e0] sm:$0xff]
    %v1741 = vld [vmem:[#allocation14 + $0x5e8] sm:$0xff]
    %v1742 = vld [vmem:[#allocation14 + $0x5f0] sm:$0xff]
    %v1743 = vld [vmem:[#allocation14 + $0x5f8] sm:$0xff]
    %v1744 = vld [vmem:[#allocation14 + $0x600] sm:$0xff]
    %v1745 = vld [vmem:[#allocation14 + $0x608] sm:$0xff]
    %v1746 = vld [vmem:[#allocation14 + $0x610] sm:$0xff]
    %v1747 = vld [vmem:[#allocation14 + $0x618] sm:$0xff]
    %v1748 = vld [vmem:[#allocation14 + $0x620] sm:$0xff]
    %v1749 = vld [vmem:[#allocation14 + $0x628] sm:$0xff]
    %v1750 = vld [vmem:[#allocation14 + $0x630] sm:$0xff]
    %v1751 = vld [vmem:[#allocation14 + $0x638] sm:$0xff]
    %v1752 = vld [vmem:[#allocation14 + $0x640] sm:$0xff]
    %v1753 = vld [vmem:[#allocation14 + $0x648] sm:$0xff]
    %v1754 = vld [vmem:[#allocation14 + $0x650] sm:$0xff]
    %v1755 = vld [vmem:[#allocation14 + $0x658] sm:$0xff]
    %v1756 = vld [vmem:[#allocation14 + $0x660] sm:$0xff]
    %v1757 = vld [vmem:[#allocation14 + $0x668] sm:$0xff]
    %v1758 = vld [vmem:[#allocation14 + $0x670] sm:$0xff]
    %v1759 = vld [vmem:[#allocation14 + $0x678] sm:$0xff]
    %v1760 = vld [vmem:[#allocation14 + $0x680] sm:$0xff]
    %v1761 = vld [vmem:[#allocation14 + $0x688] sm:$0xff]
    %v1762 = vld [vmem:[#allocation14 + $0x690] sm:$0xff]
    %v1763 = vld [vmem:[#allocation14 + $0x698] sm:$0xff]
    %v1764 = vld [vmem:[#allocation14 + $0x6a0] sm:$0xff]
    %v1765 = vld [vmem:[#allocation14 + $0x6a8] sm:$0xff]
    %v1766 = vld [vmem:[#allocation14 + $0x6b0] sm:$0xff]
    %v1767 = vld [vmem:[#allocation14 + $0x6b8] sm:$0xff]
    %v1768 = vld [vmem:[#allocation14 + $0x6c0] sm:$0xff]
    %v1769 = vld [vmem:[#allocation14 + $0x6c8] sm:$0xff]
    %v1770 = vld [vmem:[#allocation14 + $0x6d0] sm:$0xff]
    %v1771 = vld [vmem:[#allocation14 + $0x6d8] sm:$0xff]
    %v1772 = vld [vmem:[#allocation14 + $0x6e0] sm:$0xff]
    %v1773 = vld [vmem:[#allocation14 + $0x6e8] sm:$0xff]
    %v1774 = vld [vmem:[#allocation14 + $0x6f0] sm:$0xff]
    %v1775 = vld [vmem:[#allocation14 + $0x6f8] sm:$0xff]
    %v1776 = vld [vmem:[#allocation14 + $0x700] sm:$0xff]
    %v1777 = vld [vmem:[#allocation14 + $0x708] sm:$0xff]
    %v1778 = vld [vmem:[#allocation14 + $0x710] sm:$0xff]
    %v1779 = vld [vmem:[#allocation14 + $0x718] sm:$0xff]
    %v1780 = vld [vmem:[#allocation14 + $0x720] sm:$0xff]
    %v1781 = vld [vmem:[#allocation14 + $0x728] sm:$0xff]
    %v1782 = vld [vmem:[#allocation14 + $0x730] sm:$0xff]
    %v1783 = vld [vmem:[#allocation14 + $0x738] sm:$0xff]
    %v1784 = vld [vmem:[#allocation14 + $0x740] sm:$0xff]
    %v1785 = vld [vmem:[#allocation14 + $0x748] sm:$0xff]
    %v1786 = vld [vmem:[#allocation14 + $0x750] sm:$0xff]
    %v1787 = vld [vmem:[#allocation14 + $0x758] sm:$0xff]
    %v1788 = vld [vmem:[#allocation14 + $0x760] sm:$0xff]
    %v1789 = vld [vmem:[#allocation14 + $0x768] sm:$0xff]
    %v1790 = vld [vmem:[#allocation14 + $0x770] sm:$0xff]
    %v1791 = vld [vmem:[#allocation14 + $0x778] sm:$0xff]
    %v1792 = vld [vmem:[#allocation14 + $0x780] sm:$0xff]
    %v1793 = vld [vmem:[#allocation14 + $0x788] sm:$0xff]
    %v1794 = vld [vmem:[#allocation14 + $0x790] sm:$0xff]
    %v1795 = vld [vmem:[#allocation14 + $0x798] sm:$0xff]
    %v1796 = vld [vmem:[#allocation14 + $0x7a0] sm:$0xff]
    %v1797 = vld [vmem:[#allocation14 + $0x7a8] sm:$0xff]
    %v1798 = vld [vmem:[#allocation14 + $0x7b0] sm:$0xff]
    %v1799 = vld [vmem:[#allocation14 + $0x7b8] sm:$0xff]
    %v1800 = vld [vmem:[#allocation14 + $0x7c0] sm:$0xff]
    %v1801 = vld [vmem:[#allocation14 + $0x7c8] sm:$0xff]
    %v1802 = vld [vmem:[#allocation14 + $0x7d0] sm:$0xff]
    %v1803 = vld [vmem:[#allocation14 + $0x7d8] sm:$0xff]
    %v1804 = vld [vmem:[#allocation14 + $0x7e0] sm:$0xff]
    %v1805 = vld [vmem:[#allocation14 + $0x7e8] sm:$0xff]
    %v1806 = vld [vmem:[#allocation14 + $0x7f0] sm:$0xff]
    %v1807 = vld [vmem:[#allocation14 + $0x7f8] sm:$0xff]
    %v1808 = vld [vmem:[%s12] sm:$0xf]
    %v1810 = vlaneseq
    %v1811 = vshrl.u32 %v1810, 7
    %v1812 = vsub.s32 0, %v1811
    %v1813 = vrot.slane %v1808, %v1812
    %v1814 = vlaneseq
    %v1815 = vshrl.u32 %v1814, 7
    %v1816 = vsub.s32 1, %v1815
    %v1817 = vrot.slane %v1808, %v1816
    %v1818 = vlaneseq
    %v1819 = vshrl.u32 %v1818, 7
    %v1820 = vsub.s32 2, %v1819
    %v1821 = vrot.slane %v1808, %v1820
    %v1822 = vlaneseq
    %v1823 = vshrl.u32 %v1822, 7
    %v1824 = vsub.s32 3, %v1823
    %v1825 = vrot.slane %v1808, %v1824
    %v1834 = vunpack.c.l.b16 %v1548
    %v1835 = vunpack.c.h.b16 %v1548
    %v1836 = vunpack.c.l.b16 %v1549
    %v1837 = vunpack.c.h.b16 %v1549
    %v1838 = vunpack.c.l.b16 %v1550
    %v1839 = vunpack.c.h.b16 %v1550
    %v1840 = vunpack.c.l.b16 %v1551
    %v1841 = vunpack.c.h.b16 %v1551
    %v1842 = vpack.c.b16 %v1834, %v1834
    %v1843 = vpack.c.b16 %v1835, %v1835
    %v1844 = vpack.c.b16 %v1836, %v1836
    %v1845 = vpack.c.b16 %v1837, %v1837
    %v1846 = vpack.c.b16 %v1838, %v1838
    %v1847 = vpack.c.b16 %v1839, %v1839
    %v1848 = vpack.c.b16 %v1840, %v1840
    %v1849 = vpack.c.b16 %v1841, %v1841
    %v2114 = vunpack.c.l.b16 %v1552
    %v2115 = vunpack.c.h.b16 %v1552
    %v2116 = vunpack.c.l.b16 %v1553
    %v2117 = vunpack.c.h.b16 %v1553
    %v2118 = vunpack.c.l.b16 %v1554
    %v2119 = vunpack.c.h.b16 %v1554
    %v2120 = vunpack.c.l.b16 %v1555
    %v2121 = vunpack.c.h.b16 %v1555
    %v2122 = vunpack.c.l.b16 %v1556
    %v2123 = vunpack.c.h.b16 %v1556
    %v2124 = vunpack.c.l.b16 %v1557
    %v2125 = vunpack.c.h.b16 %v1557
    %v2126 = vunpack.c.l.b16 %v1558
    %v2127 = vunpack.c.h.b16 %v1558
    %v2128 = vunpack.c.l.b16 %v1559
    %v2129 = vunpack.c.h.b16 %v1559
    %v2130 = vunpack.c.l.b16 %v1560
    %v2131 = vunpack.c.h.b16 %v1560
    %v2132 = vunpack.c.l.b16 %v1561
    %v2133 = vunpack.c.h.b16 %v1561
    %v2134 = vunpack.c.l.b16 %v1562
    %v2135 = vunpack.c.h.b16 %v1562
    %v2136 = vunpack.c.l.b16 %v1563
    %v2137 = vunpack.c.h.b16 %v1563
    %v2138 = vunpack.c.l.b16 %v1564
    %v2139 = vunpack.c.h.b16 %v1564
    %v2140 = vunpack.c.l.b16 %v1565
    %v2141 = vunpack.c.h.b16 %v1565
    %v2142 = vunpack.c.l.b16 %v1566
    %v2143 = vunpack.c.h.b16 %v1566
    %v2144 = vunpack.c.l.b16 %v1567
    %v2145 = vunpack.c.h.b16 %v1567
    %v2146 = vunpack.c.l.b16 %v1568
    %v2147 = vunpack.c.h.b16 %v1568
    %v2148 = vunpack.c.l.b16 %v1569
    %v2149 = vunpack.c.h.b16 %v1569
    %v2150 = vunpack.c.l.b16 %v1570
    %v2151 = vunpack.c.h.b16 %v1570
    %v2152 = vunpack.c.l.b16 %v1571
    %v2153 = vunpack.c.h.b16 %v1571
    %v2154 = vunpack.c.l.b16 %v1572
    %v2155 = vunpack.c.h.b16 %v1572
    %v2156 = vunpack.c.l.b16 %v1573
    %v2157 = vunpack.c.h.b16 %v1573
    %v2158 = vunpack.c.l.b16 %v1574
    %v2159 = vunpack.c.h.b16 %v1574
    %v2160 = vunpack.c.l.b16 %v1575
    %v2161 = vunpack.c.h.b16 %v1575
    %v2162 = vunpack.c.l.b16 %v1576
    %v2163 = vunpack.c.h.b16 %v1576
    %v2164 = vunpack.c.l.b16 %v1577
    %v2165 = vunpack.c.h.b16 %v1577
    %v2166 = vunpack.c.l.b16 %v1578
    %v2167 = vunpack.c.h.b16 %v1578
    %v2168 = vunpack.c.l.b16 %v1579
    %v2169 = vunpack.c.h.b16 %v1579
    %v2170 = vunpack.c.l.b16 %v1580
    %v2171 = vunpack.c.h.b16 %v1580
    %v2172 = vunpack.c.l.b16 %v1581
    %v2173 = vunpack.c.h.b16 %v1581
    %v2174 = vunpack.c.l.b16 %v1582
    %v2175 = vunpack.c.h.b16 %v1582
    %v2176 = vunpack.c.l.b16 %v1583
    %v2177 = vunpack.c.h.b16 %v1583
    %v2178 = vunpack.c.l.b16 %v1584
    %v2179 = vunpack.c.h.b16 %v1584
    %v2180 = vunpack.c.l.b16 %v1585
    %v2181 = vunpack.c.h.b16 %v1585
    %v2182 = vunpack.c.l.b16 %v1586
    %v2183 = vunpack.c.h.b16 %v1586
    %v2184 = vunpack.c.l.b16 %v1587
    %v2185 = vunpack.c.h.b16 %v1587
    %v2186 = vunpack.c.l.b16 %v1588
    %v2187 = vunpack.c.h.b16 %v1588
    %v2188 = vunpack.c.l.b16 %v1589
    %v2189 = vunpack.c.h.b16 %v1589
    %v2190 = vunpack.c.l.b16 %v1590
    %v2191 = vunpack.c.h.b16 %v1590
    %v2192 = vunpack.c.l.b16 %v1591
    %v2193 = vunpack.c.h.b16 %v1591
    %v2194 = vunpack.c.l.b16 %v1592
    %v2195 = vunpack.c.h.b16 %v1592
    %v2196 = vunpack.c.l.b16 %v1593
    %v2197 = vunpack.c.h.b16 %v1593
    %v2198 = vunpack.c.l.b16 %v1594
    %v2199 = vunpack.c.h.b16 %v1594
    %v2200 = vunpack.c.l.b16 %v1595
    %v2201 = vunpack.c.h.b16 %v1595
    %v2202 = vunpack.c.l.b16 %v1596
    %v2203 = vunpack.c.h.b16 %v1596
    %v2204 = vunpack.c.l.b16 %v1597
    %v2205 = vunpack.c.h.b16 %v1597
    %v2206 = vunpack.c.l.b16 %v1598
    %v2207 = vunpack.c.h.b16 %v1598
    %v2208 = vunpack.c.l.b16 %v1599
    %v2209 = vunpack.c.h.b16 %v1599
    %v2210 = vunpack.c.l.b16 %v1600
    %v2211 = vunpack.c.h.b16 %v1600
    %v2212 = vunpack.c.l.b16 %v1601
    %v2213 = vunpack.c.h.b16 %v1601
    %v2214 = vunpack.c.l.b16 %v1602
    %v2215 = vunpack.c.h.b16 %v1602
    %v2216 = vunpack.c.l.b16 %v1603
    %v2217 = vunpack.c.h.b16 %v1603
    %v2218 = vunpack.c.l.b16 %v1604
    %v2219 = vunpack.c.h.b16 %v1604
    %v2220 = vunpack.c.l.b16 %v1605
    %v2221 = vunpack.c.h.b16 %v1605
    %v2222 = vunpack.c.l.b16 %v1606
    %v2223 = vunpack.c.h.b16 %v1606
    %v2224 = vunpack.c.l.b16 %v1607
    %v2225 = vunpack.c.h.b16 %v1607
    %v2226 = vunpack.c.l.b16 %v1608
    %v2227 = vunpack.c.h.b16 %v1608
    %v2228 = vunpack.c.l.b16 %v1609
    %v2229 = vunpack.c.h.b16 %v1609
    %v2230 = vunpack.c.l.b16 %v1610
    %v2231 = vunpack.c.h.b16 %v1610
    %v2232 = vunpack.c.l.b16 %v1611
    %v2233 = vunpack.c.h.b16 %v1611
    %v2234 = vunpack.c.l.b16 %v1612
    %v2235 = vunpack.c.h.b16 %v1612
    %v2236 = vunpack.c.l.b16 %v1613
    %v2237 = vunpack.c.h.b16 %v1613
    %v2238 = vunpack.c.l.b16 %v1614
    %v2239 = vunpack.c.h.b16 %v1614
    %v2240 = vunpack.c.l.b16 %v1615
    %v2241 = vunpack.c.h.b16 %v1615
    %v2242 = vunpack.c.l.b16 %v1616
    %v2243 = vunpack.c.h.b16 %v1616
    %v2244 = vunpack.c.l.b16 %v1617
    %v2245 = vunpack.c.h.b16 %v1617
    %v2246 = vunpack.c.l.b16 %v1618
    %v2247 = vunpack.c.h.b16 %v1618
    %v2248 = vunpack.c.l.b16 %v1619
    %v2249 = vunpack.c.h.b16 %v1619
    %v2250 = vunpack.c.l.b16 %v1620
    %v2251 = vunpack.c.h.b16 %v1620
    %v2252 = vunpack.c.l.b16 %v1621
    %v2253 = vunpack.c.h.b16 %v1621
    %v2254 = vunpack.c.l.b16 %v1622
    %v2255 = vunpack.c.h.b16 %v1622
    %v2256 = vunpack.c.l.b16 %v1623
    %v2257 = vunpack.c.h.b16 %v1623
    %v2258 = vunpack.c.l.b16 %v1624
    %v2259 = vunpack.c.h.b16 %v1624
    %v2260 = vunpack.c.l.b16 %v1625
    %v2261 = vunpack.c.h.b16 %v1625
    %v2262 = vunpack.c.l.b16 %v1626
    %v2263 = vunpack.c.h.b16 %v1626
    %v2264 = vunpack.c.l.b16 %v1627
    %v2265 = vunpack.c.h.b16 %v1627
    %v2266 = vunpack.c.l.b16 %v1628
    %v2267 = vunpack.c.h.b16 %v1628
    %v2268 = vunpack.c.l.b16 %v1629
    %v2269 = vunpack.c.h.b16 %v1629
    %v2270 = vunpack.c.l.b16 %v1630
    %v2271 = vunpack.c.h.b16 %v1630
    %v2272 = vunpack.c.l.b16 %v1631
    %v2273 = vunpack.c.h.b16 %v1631
    %v2274 = vunpack.c.l.b16 %v1632
    %v2275 = vunpack.c.h.b16 %v1632
    %v2276 = vunpack.c.l.b16 %v1633
    %v2277 = vunpack.c.h.b16 %v1633
    %v2278 = vunpack.c.l.b16 %v1634
    %v2279 = vunpack.c.h.b16 %v1634
    %v2280 = vunpack.c.l.b16 %v1635
    %v2281 = vunpack.c.h.b16 %v1635
    %v2282 = vunpack.c.l.b16 %v1636
    %v2283 = vunpack.c.h.b16 %v1636
    %v2284 = vunpack.c.l.b16 %v1637
    %v2285 = vunpack.c.h.b16 %v1637
    %v2286 = vunpack.c.l.b16 %v1638
    %v2287 = vunpack.c.h.b16 %v1638
    %v2288 = vunpack.c.l.b16 %v1639
    %v2289 = vunpack.c.h.b16 %v1639
    %v2290 = vunpack.c.l.b16 %v1640
    %v2291 = vunpack.c.h.b16 %v1640
    %v2292 = vunpack.c.l.b16 %v1641
    %v2293 = vunpack.c.h.b16 %v1641
    %v2294 = vunpack.c.l.b16 %v1642
    %v2295 = vunpack.c.h.b16 %v1642
    %v2296 = vunpack.c.l.b16 %v1643
    %v2297 = vunpack.c.h.b16 %v1643
    %v2298 = vunpack.c.l.b16 %v1644
    %v2299 = vunpack.c.h.b16 %v1644
    %v2300 = vunpack.c.l.b16 %v1645
    %v2301 = vunpack.c.h.b16 %v1645
    %v2302 = vunpack.c.l.b16 %v1646
    %v2303 = vunpack.c.h.b16 %v1646
    %v2304 = vunpack.c.l.b16 %v1647
    %v2305 = vunpack.c.h.b16 %v1647
    %v2306 = vunpack.c.l.b16 %v1648
    %v2307 = vunpack.c.h.b16 %v1648
    %v2308 = vunpack.c.l.b16 %v1649
    %v2309 = vunpack.c.h.b16 %v1649
    %v2310 = vunpack.c.l.b16 %v1650
    %v2311 = vunpack.c.h.b16 %v1650
    %v2312 = vunpack.c.l.b16 %v1651
    %v2313 = vunpack.c.h.b16 %v1651
    %v2314 = vunpack.c.l.b16 %v1652
    %v2315 = vunpack.c.h.b16 %v1652
    %v2316 = vunpack.c.l.b16 %v1653
    %v2317 = vunpack.c.h.b16 %v1653
    %v2318 = vunpack.c.l.b16 %v1654
    %v2319 = vunpack.c.h.b16 %v1654
    %v2320 = vunpack.c.l.b16 %v1655
    %v2321 = vunpack.c.h.b16 %v1655
    %v2322 = vunpack.c.l.b16 %v1656
    %v2323 = vunpack.c.h.b16 %v1656
    %v2324 = vunpack.c.l.b16 %v1657
    %v2325 = vunpack.c.h.b16 %v1657
    %v2326 = vunpack.c.l.b16 %v1658
    %v2327 = vunpack.c.h.b16 %v1658
    %v2328 = vunpack.c.l.b16 %v1659
    %v2329 = vunpack.c.h.b16 %v1659
    %v2330 = vunpack.c.l.b16 %v1660
    %v2331 = vunpack.c.h.b16 %v1660
    %v2332 = vunpack.c.l.b16 %v1661
    %v2333 = vunpack.c.h.b16 %v1661
    %v2334 = vunpack.c.l.b16 %v1662
    %v2335 = vunpack.c.h.b16 %v1662
    %v2336 = vunpack.c.l.b16 %v1663
    %v2337 = vunpack.c.h.b16 %v1663
    %v2338 = vunpack.c.l.b16 %v1664
    %v2339 = vunpack.c.h.b16 %v1664
    %v2340 = vunpack.c.l.b16 %v1665
    %v2341 = vunpack.c.h.b16 %v1665
    %v2342 = vunpack.c.l.b16 %v1666
    %v2343 = vunpack.c.h.b16 %v1666
    %v2344 = vunpack.c.l.b16 %v1667
    %v2345 = vunpack.c.h.b16 %v1667
    %v2346 = vunpack.c.l.b16 %v1668
    %v2347 = vunpack.c.h.b16 %v1668
    %v2348 = vunpack.c.l.b16 %v1669
    %v2349 = vunpack.c.h.b16 %v1669
    %v2350 = vunpack.c.l.b16 %v1670
    %v2351 = vunpack.c.h.b16 %v1670
    %v2352 = vunpack.c.l.b16 %v1671
    %v2353 = vunpack.c.h.b16 %v1671
    %v2354 = vunpack.c.l.b16 %v1672
    %v2355 = vunpack.c.h.b16 %v1672
    %v2356 = vunpack.c.l.b16 %v1673
    %v2357 = vunpack.c.h.b16 %v1673
    %v2358 = vunpack.c.l.b16 %v1674
    %v2359 = vunpack.c.h.b16 %v1674
    %v2360 = vunpack.c.l.b16 %v1675
    %v2361 = vunpack.c.h.b16 %v1675
    %v2362 = vunpack.c.l.b16 %v1676
    %v2363 = vunpack.c.h.b16 %v1676
    %v2364 = vunpack.c.l.b16 %v1677
    %v2365 = vunpack.c.h.b16 %v1677
    %v2366 = vunpack.c.l.b16 %v1678
    %v2367 = vunpack.c.h.b16 %v1678
    %v2368 = vunpack.c.l.b16 %v1679
    %v2369 = vunpack.c.h.b16 %v1679
    %v2370 = vunpack.c.l.b16 %v1680
    %v2371 = vunpack.c.h.b16 %v1680
    %v2372 = vunpack.c.l.b16 %v1681
    %v2373 = vunpack.c.h.b16 %v1681
    %v2374 = vunpack.c.l.b16 %v1682
    %v2375 = vunpack.c.h.b16 %v1682
    %v2376 = vunpack.c.l.b16 %v1683
    %v2377 = vunpack.c.h.b16 %v1683
    %v2378 = vunpack.c.l.b16 %v1684
    %v2379 = vunpack.c.h.b16 %v1684
    %v2380 = vunpack.c.l.b16 %v1685
    %v2381 = vunpack.c.h.b16 %v1685
    %v2382 = vunpack.c.l.b16 %v1686
    %v2383 = vunpack.c.h.b16 %v1686
    %v2384 = vunpack.c.l.b16 %v1687
    %v2385 = vunpack.c.h.b16 %v1687
    %v2386 = vunpack.c.l.b16 %v1688
    %v2387 = vunpack.c.h.b16 %v1688
    %v2388 = vunpack.c.l.b16 %v1689
    %v2389 = vunpack.c.h.b16 %v1689
    %v2390 = vunpack.c.l.b16 %v1690
    %v2391 = vunpack.c.h.b16 %v1690
    %v2392 = vunpack.c.l.b16 %v1691
    %v2393 = vunpack.c.h.b16 %v1691
    %v2394 = vunpack.c.l.b16 %v1692
    %v2395 = vunpack.c.h.b16 %v1692
    %v2396 = vunpack.c.l.b16 %v1693
    %v2397 = vunpack.c.h.b16 %v1693
    %v2398 = vunpack.c.l.b16 %v1694
    %v2399 = vunpack.c.h.b16 %v1694
    %v2400 = vunpack.c.l.b16 %v1695
    %v2401 = vunpack.c.h.b16 %v1695
    %v2402 = vunpack.c.l.b16 %v1696
    %v2403 = vunpack.c.h.b16 %v1696
    %v2404 = vunpack.c.l.b16 %v1697
    %v2405 = vunpack.c.h.b16 %v1697
    %v2406 = vunpack.c.l.b16 %v1698
    %v2407 = vunpack.c.h.b16 %v1698
    %v2408 = vunpack.c.l.b16 %v1699
    %v2409 = vunpack.c.h.b16 %v1699
    %v2410 = vunpack.c.l.b16 %v1700
    %v2411 = vunpack.c.h.b16 %v1700
    %v2412 = vunpack.c.l.b16 %v1701
    %v2413 = vunpack.c.h.b16 %v1701
    %v2414 = vunpack.c.l.b16 %v1702
    %v2415 = vunpack.c.h.b16 %v1702
    %v2416 = vunpack.c.l.b16 %v1703
    %v2417 = vunpack.c.h.b16 %v1703
    %v2418 = vunpack.c.l.b16 %v1704
    %v2419 = vunpack.c.h.b16 %v1704
    %v2420 = vunpack.c.l.b16 %v1705
    %v2421 = vunpack.c.h.b16 %v1705
    %v2422 = vunpack.c.l.b16 %v1706
    %v2423 = vunpack.c.h.b16 %v1706
    %v2424 = vunpack.c.l.b16 %v1707
    %v2425 = vunpack.c.h.b16 %v1707
    %v2426 = vunpack.c.l.b16 %v1708
    %v2427 = vunpack.c.h.b16 %v1708
    %v2428 = vunpack.c.l.b16 %v1709
    %v2429 = vunpack.c.h.b16 %v1709
    %v2430 = vunpack.c.l.b16 %v1710
    %v2431 = vunpack.c.h.b16 %v1710
    %v2432 = vunpack.c.l.b16 %v1711
    %v2433 = vunpack.c.h.b16 %v1711
    %v2434 = vunpack.c.l.b16 %v1712
    %v2435 = vunpack.c.h.b16 %v1712
    %v2436 = vunpack.c.l.b16 %v1713
    %v2437 = vunpack.c.h.b16 %v1713
    %v2438 = vunpack.c.l.b16 %v1714
    %v2439 = vunpack.c.h.b16 %v1714
    %v2440 = vunpack.c.l.b16 %v1715
    %v2441 = vunpack.c.h.b16 %v1715
    %v2442 = vunpack.c.l.b16 %v1716
    %v2443 = vunpack.c.h.b16 %v1716
    %v2444 = vunpack.c.l.b16 %v1717
    %v2445 = vunpack.c.h.b16 %v1717
    %v2446 = vunpack.c.l.b16 %v1718
    %v2447 = vunpack.c.h.b16 %v1718
    %v2448 = vunpack.c.l.b16 %v1719
    %v2449 = vunpack.c.h.b16 %v1719
    %v2450 = vunpack.c.l.b16 %v1720
    %v2451 = vunpack.c.h.b16 %v1720
    %v2452 = vunpack.c.l.b16 %v1721
    %v2453 = vunpack.c.h.b16 %v1721
    %v2454 = vunpack.c.l.b16 %v1722
    %v2455 = vunpack.c.h.b16 %v1722
    %v2456 = vunpack.c.l.b16 %v1723
    %v2457 = vunpack.c.h.b16 %v1723
    %v2458 = vunpack.c.l.b16 %v1724
    %v2459 = vunpack.c.h.b16 %v1724
    %v2460 = vunpack.c.l.b16 %v1725
    %v2461 = vunpack.c.h.b16 %v1725
    %v2462 = vunpack.c.l.b16 %v1726
    %v2463 = vunpack.c.h.b16 %v1726
    %v2464 = vunpack.c.l.b16 %v1727
    %v2465 = vunpack.c.h.b16 %v1727
    %v2466 = vunpack.c.l.b16 %v1728
    %v2467 = vunpack.c.h.b16 %v1728
    %v2468 = vunpack.c.l.b16 %v1729
    %v2469 = vunpack.c.h.b16 %v1729
    %v2470 = vunpack.c.l.b16 %v1730
    %v2471 = vunpack.c.h.b16 %v1730
    %v2472 = vunpack.c.l.b16 %v1731
    %v2473 = vunpack.c.h.b16 %v1731
    %v2474 = vunpack.c.l.b16 %v1732
    %v2475 = vunpack.c.h.b16 %v1732
    %v2476 = vunpack.c.l.b16 %v1733
    %v2477 = vunpack.c.h.b16 %v1733
    %v2478 = vunpack.c.l.b16 %v1734
    %v2479 = vunpack.c.h.b16 %v1734
    %v2480 = vunpack.c.l.b16 %v1735
    %v2481 = vunpack.c.h.b16 %v1735
    %v2482 = vunpack.c.l.b16 %v1736
    %v2483 = vunpack.c.h.b16 %v1736
    %v2484 = vunpack.c.l.b16 %v1737
    %v2485 = vunpack.c.h.b16 %v1737
    %v2486 = vunpack.c.l.b16 %v1738
    %v2487 = vunpack.c.h.b16 %v1738
    %v2488 = vunpack.c.l.b16 %v1739
    %v2489 = vunpack.c.h.b16 %v1739
    %v2490 = vunpack.c.l.b16 %v1740
    %v2491 = vunpack.c.h.b16 %v1740
    %v2492 = vunpack.c.l.b16 %v1741
    %v2493 = vunpack.c.h.b16 %v1741
    %v2494 = vunpack.c.l.b16 %v1742
    %v2495 = vunpack.c.h.b16 %v1742
    %v2496 = vunpack.c.l.b16 %v1743
    %v2497 = vunpack.c.h.b16 %v1743
    %v2498 = vunpack.c.l.b16 %v1744
    %v2499 = vunpack.c.h.b16 %v1744
    %v2500 = vunpack.c.l.b16 %v1745
    %v2501 = vunpack.c.h.b16 %v1745
    %v2502 = vunpack.c.l.b16 %v1746
    %v2503 = vunpack.c.h.b16 %v1746
    %v2504 = vunpack.c.l.b16 %v1747
    %v2505 = vunpack.c.h.b16 %v1747
    %v2506 = vunpack.c.l.b16 %v1748
    %v2507 = vunpack.c.h.b16 %v1748
    %v2508 = vunpack.c.l.b16 %v1749
    %v2509 = vunpack.c.h.b16 %v1749
    %v2510 = vunpack.c.l.b16 %v1750
    %v2511 = vunpack.c.h.b16 %v1750
    %v2512 = vunpack.c.l.b16 %v1751
    %v2513 = vunpack.c.h.b16 %v1751
    %v2514 = vunpack.c.l.b16 %v1752
    %v2515 = vunpack.c.h.b16 %v1752
    %v2516 = vunpack.c.l.b16 %v1753
    %v2517 = vunpack.c.h.b16 %v1753
    %v2518 = vunpack.c.l.b16 %v1754
    %v2519 = vunpack.c.h.b16 %v1754
    %v2520 = vunpack.c.l.b16 %v1755
    %v2521 = vunpack.c.h.b16 %v1755
    %v2522 = vunpack.c.l.b16 %v1756
    %v2523 = vunpack.c.h.b16 %v1756
    %v2524 = vunpack.c.l.b16 %v1757
    %v2525 = vunpack.c.h.b16 %v1757
    %v2526 = vunpack.c.l.b16 %v1758
    %v2527 = vunpack.c.h.b16 %v1758
    %v2528 = vunpack.c.l.b16 %v1759
    %v2529 = vunpack.c.h.b16 %v1759
    %v2530 = vunpack.c.l.b16 %v1760
    %v2531 = vunpack.c.h.b16 %v1760
    %v2532 = vunpack.c.l.b16 %v1761
    %v2533 = vunpack.c.h.b16 %v1761
    %v2534 = vunpack.c.l.b16 %v1762
    %v2535 = vunpack.c.h.b16 %v1762
    %v2536 = vunpack.c.l.b16 %v1763
    %v2537 = vunpack.c.h.b16 %v1763
    %v2538 = vunpack.c.l.b16 %v1764
    %v2539 = vunpack.c.h.b16 %v1764
    %v2540 = vunpack.c.l.b16 %v1765
    %v2541 = vunpack.c.h.b16 %v1765
    %v2542 = vunpack.c.l.b16 %v1766
    %v2543 = vunpack.c.h.b16 %v1766
    %v2544 = vunpack.c.l.b16 %v1767
    %v2545 = vunpack.c.h.b16 %v1767
    %v2546 = vunpack.c.l.b16 %v1768
    %v2547 = vunpack.c.h.b16 %v1768
    %v2548 = vunpack.c.l.b16 %v1769
    %v2549 = vunpack.c.h.b16 %v1769
    %v2550 = vunpack.c.l.b16 %v1770
    %v2551 = vunpack.c.h.b16 %v1770
    %v2552 = vunpack.c.l.b16 %v1771
    %v2553 = vunpack.c.h.b16 %v1771
    %v2554 = vunpack.c.l.b16 %v1772
    %v2555 = vunpack.c.h.b16 %v1772
    %v2556 = vunpack.c.l.b16 %v1773
    %v2557 = vunpack.c.h.b16 %v1773
    %v2558 = vunpack.c.l.b16 %v1774
    %v2559 = vunpack.c.h.b16 %v1774
    %v2560 = vunpack.c.l.b16 %v1775
    %v2561 = vunpack.c.h.b16 %v1775
    %v2562 = vunpack.c.l.b16 %v1776
    %v2563 = vunpack.c.h.b16 %v1776
    %v2564 = vunpack.c.l.b16 %v1777
    %v2565 = vunpack.c.h.b16 %v1777
    %v2566 = vunpack.c.l.b16 %v1778
    %v2567 = vunpack.c.h.b16 %v1778
    %v2568 = vunpack.c.l.b16 %v1779
    %v2569 = vunpack.c.h.b16 %v1779
    %v2570 = vunpack.c.l.b16 %v1780
    %v2571 = vunpack.c.h.b16 %v1780
    %v2572 = vunpack.c.l.b16 %v1781
    %v2573 = vunpack.c.h.b16 %v1781
    %v2574 = vunpack.c.l.b16 %v1782
    %v2575 = vunpack.c.h.b16 %v1782
    %v2576 = vunpack.c.l.b16 %v1783
    %v2577 = vunpack.c.h.b16 %v1783
    %v2578 = vunpack.c.l.b16 %v1784
    %v2579 = vunpack.c.h.b16 %v1784
    %v2580 = vunpack.c.l.b16 %v1785
    %v2581 = vunpack.c.h.b16 %v1785
    %v2582 = vunpack.c.l.b16 %v1786
    %v2583 = vunpack.c.h.b16 %v1786
    %v2584 = vunpack.c.l.b16 %v1787
    %v2585 = vunpack.c.h.b16 %v1787
    %v2586 = vunpack.c.l.b16 %v1788
    %v2587 = vunpack.c.h.b16 %v1788
    %v2588 = vunpack.c.l.b16 %v1789
    %v2589 = vunpack.c.h.b16 %v1789
    %v2590 = vunpack.c.l.b16 %v1790
    %v2591 = vunpack.c.h.b16 %v1790
    %v2592 = vunpack.c.l.b16 %v1791
    %v2593 = vunpack.c.h.b16 %v1791
    %v2594 = vunpack.c.l.b16 %v1792
    %v2595 = vunpack.c.h.b16 %v1792
    %v2596 = vunpack.c.l.b16 %v1793
    %v2597 = vunpack.c.h.b16 %v1793
    %v2598 = vunpack.c.l.b16 %v1794
    %v2599 = vunpack.c.h.b16 %v1794
    %v2600 = vunpack.c.l.b16 %v1795
    %v2601 = vunpack.c.h.b16 %v1795
    %v2602 = vunpack.c.l.b16 %v1796
    %v2603 = vunpack.c.h.b16 %v1796
    %v2604 = vunpack.c.l.b16 %v1797
    %v2605 = vunpack.c.h.b16 %v1797
    %v2606 = vunpack.c.l.b16 %v1798
    %v2607 = vunpack.c.h.b16 %v1798
    %v2608 = vunpack.c.l.b16 %v1799
    %v2609 = vunpack.c.h.b16 %v1799
    %v2610 = vunpack.c.l.b16 %v1800
    %v2611 = vunpack.c.h.b16 %v1800
    %v2612 = vunpack.c.l.b16 %v1801
    %v2613 = vunpack.c.h.b16 %v1801
    %v2614 = vunpack.c.l.b16 %v1802
    %v2615 = vunpack.c.h.b16 %v1802
    %v2616 = vunpack.c.l.b16 %v1803
    %v2617 = vunpack.c.h.b16 %v1803
    %v2618 = vunpack.c.l.b16 %v1804
    %v2619 = vunpack.c.h.b16 %v1804
    %v2620 = vunpack.c.l.b16 %v1805
    %v2621 = vunpack.c.h.b16 %v1805
    %v2622 = vunpack.c.l.b16 %v1806
    %v2623 = vunpack.c.h.b16 %v1806
    %v2624 = vunpack.c.l.b16 %v1807
    %v2625 = vunpack.c.h.b16 %v1807
    %v2626 = vpack.c.b16 %v2118, %v2114
    %v2627 = vpack.c.b16 %v2119, %v2115
    %v2628 = vpack.c.b16 %v2120, %v2116
    %v2629 = vpack.c.b16 %v2121, %v2117
    %v2630 = vpack.c.b16 %v2126, %v2122
    %v2631 = vpack.c.b16 %v2127, %v2123
    %v2632 = vpack.c.b16 %v2128, %v2124
    %v2633 = vpack.c.b16 %v2129, %v2125
    %v2634 = vpack.c.b16 %v2134, %v2130
    %v2635 = vpack.c.b16 %v2135, %v2131
    %v2636 = vpack.c.b16 %v2136, %v2132
    %v2637 = vpack.c.b16 %v2137, %v2133
    %v2638 = vpack.c.b16 %v2142, %v2138
    %v2639 = vpack.c.b16 %v2143, %v2139
    %v2640 = vpack.c.b16 %v2144, %v2140
    %v2641 = vpack.c.b16 %v2145, %v2141
    %v2642 = vpack.c.b16 %v2150, %v2146
    %v2643 = vpack.c.b16 %v2151, %v2147
    %v2644 = vpack.c.b16 %v2152, %v2148
    %v2645 = vpack.c.b16 %v2153, %v2149
    %v2646 = vpack.c.b16 %v2158, %v2154
    %v2647 = vpack.c.b16 %v2159, %v2155
    %v2648 = vpack.c.b16 %v2160, %v2156
    %v2649 = vpack.c.b16 %v2161, %v2157
    %v2650 = vpack.c.b16 %v2166, %v2162
    %v2651 = vpack.c.b16 %v2167, %v2163
    %v2652 = vpack.c.b16 %v2168, %v2164
    %v2653 = vpack.c.b16 %v2169, %v2165
    %v2654 = vpack.c.b16 %v2174, %v2170
    %v2655 = vpack.c.b16 %v2175, %v2171
    %v2656 = vpack.c.b16 %v2176, %v2172
    %v2657 = vpack.c.b16 %v2177, %v2173
    %v2658 = vpack.c.b16 %v2182, %v2178
    %v2659 = vpack.c.b16 %v2183, %v2179
    %v2660 = vpack.c.b16 %v2184, %v2180
    %v2661 = vpack.c.b16 %v2185, %v2181
    %v2662 = vpack.c.b16 %v2190, %v2186
    %v2663 = vpack.c.b16 %v2191, %v2187
    %v2664 = vpack.c.b16 %v2192, %v2188
    %v2665 = vpack.c.b16 %v2193, %v2189
    %v2666 = vpack.c.b16 %v2198, %v2194
    %v2667 = vpack.c.b16 %v2199, %v2195
    %v2668 = vpack.c.b16 %v2200, %v2196
    %v2669 = vpack.c.b16 %v2201, %v2197
    %v2670 = vpack.c.b16 %v2206, %v2202
    %v2671 = vpack.c.b16 %v2207, %v2203
    %v2672 = vpack.c.b16 %v2208, %v2204
    %v2673 = vpack.c.b16 %v2209, %v2205
    %v2674 = vpack.c.b16 %v2214, %v2210
    %v2675 = vpack.c.b16 %v2215, %v2211
    %v2676 = vpack.c.b16 %v2216, %v2212
    %v2677 = vpack.c.b16 %v2217, %v2213
    %v2678 = vpack.c.b16 %v2222, %v2218
    %v2679 = vpack.c.b16 %v2223, %v2219
    %v2680 = vpack.c.b16 %v2224, %v2220
    %v2681 = vpack.c.b16 %v2225, %v2221
    %v2682 = vpack.c.b16 %v2230, %v2226
    %v2683 = vpack.c.b16 %v2231, %v2227
    %v2684 = vpack.c.b16 %v2232, %v2228
    %v2685 = vpack.c.b16 %v2233, %v2229
    %v2686 = vpack.c.b16 %v2238, %v2234
    %v2687 = vpack.c.b16 %v2239, %v2235
    %v2688 = vpack.c.b16 %v2240, %v2236
    %v2689 = vpack.c.b16 %v2241, %v2237
    %v2690 = vpack.c.b16 %v2246, %v2242
    %v2691 = vpack.c.b16 %v2247, %v2243
    %v2692 = vpack.c.b16 %v2248, %v2244
    %v2693 = vpack.c.b16 %v2249, %v2245
    %v2694 = vpack.c.b16 %v2254, %v2250
    %v2695 = vpack.c.b16 %v2255, %v2251
    %v2696 = vpack.c.b16 %v2256, %v2252
    %v2697 = vpack.c.b16 %v2257, %v2253
    %v2698 = vpack.c.b16 %v2262, %v2258
    %v2699 = vpack.c.b16 %v2263, %v2259
    %v2700 = vpack.c.b16 %v2264, %v2260
    %v2701 = vpack.c.b16 %v2265, %v2261
    %v2702 = vpack.c.b16 %v2270, %v2266
    %v2703 = vpack.c.b16 %v2271, %v2267
    %v2704 = vpack.c.b16 %v2272, %v2268
    %v2705 = vpack.c.b16 %v2273, %v2269
    %v2706 = vpack.c.b16 %v2278, %v2274
    %v2707 = vpack.c.b16 %v2279, %v2275
    %v2708 = vpack.c.b16 %v2280, %v2276
    %v2709 = vpack.c.b16 %v2281, %v2277
    %v2710 = vpack.c.b16 %v2286, %v2282
    %v2711 = vpack.c.b16 %v2287, %v2283
    %v2712 = vpack.c.b16 %v2288, %v2284
    %v2713 = vpack.c.b16 %v2289, %v2285
    %v2714 = vpack.c.b16 %v2294, %v2290
    %v2715 = vpack.c.b16 %v2295, %v2291
    %v2716 = vpack.c.b16 %v2296, %v2292
    %v2717 = vpack.c.b16 %v2297, %v2293
    %v2718 = vpack.c.b16 %v2302, %v2298
    %v2719 = vpack.c.b16 %v2303, %v2299
    %v2720 = vpack.c.b16 %v2304, %v2300
    %v2721 = vpack.c.b16 %v2305, %v2301
    %v2722 = vpack.c.b16 %v2310, %v2306
    %v2723 = vpack.c.b16 %v2311, %v2307
    %v2724 = vpack.c.b16 %v2312, %v2308
    %v2725 = vpack.c.b16 %v2313, %v2309
    %v2726 = vpack.c.b16 %v2318, %v2314
    %v2727 = vpack.c.b16 %v2319, %v2315
    %v2728 = vpack.c.b16 %v2320, %v2316
    %v2729 = vpack.c.b16 %v2321, %v2317
    %v2730 = vpack.c.b16 %v2326, %v2322
    %v2731 = vpack.c.b16 %v2327, %v2323
    %v2732 = vpack.c.b16 %v2328, %v2324
    %v2733 = vpack.c.b16 %v2329, %v2325
    %v2734 = vpack.c.b16 %v2334, %v2330
    %v2735 = vpack.c.b16 %v2335, %v2331
    %v2736 = vpack.c.b16 %v2336, %v2332
    %v2737 = vpack.c.b16 %v2337, %v2333
    %v2738 = vpack.c.b16 %v2342, %v2338
    %v2739 = vpack.c.b16 %v2343, %v2339
    %v2740 = vpack.c.b16 %v2344, %v2340
    %v2741 = vpack.c.b16 %v2345, %v2341
    %v2742 = vpack.c.b16 %v2350, %v2346
    %v2743 = vpack.c.b16 %v2351, %v2347
    %v2744 = vpack.c.b16 %v2352, %v2348
    %v2745 = vpack.c.b16 %v2353, %v2349
    %v2746 = vpack.c.b16 %v2358, %v2354
    %v2747 = vpack.c.b16 %v2359, %v2355
    %v2748 = vpack.c.b16 %v2360, %v2356
    %v2749 = vpack.c.b16 %v2361, %v2357
    %v2750 = vpack.c.b16 %v2366, %v2362
    %v2751 = vpack.c.b16 %v2367, %v2363
    %v2752 = vpack.c.b16 %v2368, %v2364
    %v2753 = vpack.c.b16 %v2369, %v2365
    %v2754 = vpack.c.b16 %v2374, %v2370
    %v2755 = vpack.c.b16 %v2375, %v2371
    %v2756 = vpack.c.b16 %v2376, %v2372
    %v2757 = vpack.c.b16 %v2377, %v2373
    %v2758 = vpack.c.b16 %v2382, %v2378
    %v2759 = vpack.c.b16 %v2383, %v2379
    %v2760 = vpack.c.b16 %v2384, %v2380
    %v2761 = vpack.c.b16 %v2385, %v2381
    %v2762 = vpack.c.b16 %v2390, %v2386
    %v2763 = vpack.c.b16 %v2391, %v2387
    %v2764 = vpack.c.b16 %v2392, %v2388
    %v2765 = vpack.c.b16 %v2393, %v2389
    %v2766 = vpack.c.b16 %v2398, %v2394
    %v2767 = vpack.c.b16 %v2399, %v2395
    %v2768 = vpack.c.b16 %v2400, %v2396
    %v2769 = vpack.c.b16 %v2401, %v2397
    %v2770 = vpack.c.b16 %v2406, %v2402
    %v2771 = vpack.c.b16 %v2407, %v2403
    %v2772 = vpack.c.b16 %v2408, %v2404
    %v2773 = vpack.c.b16 %v2409, %v2405
    %v2774 = vpack.c.b16 %v2414, %v2410
    %v2775 = vpack.c.b16 %v2415, %v2411
    %v2776 = vpack.c.b16 %v2416, %v2412
    %v2777 = vpack.c.b16 %v2417, %v2413
    %v2778 = vpack.c.b16 %v2422, %v2418
    %v2779 = vpack.c.b16 %v2423, %v2419
    %v2780 = vpack.c.b16 %v2424, %v2420
    %v2781 = vpack.c.b16 %v2425, %v2421
    %v2782 = vpack.c.b16 %v2430, %v2426
    %v2783 = vpack.c.b16 %v2431, %v2427
    %v2784 = vpack.c.b16 %v2432, %v2428
    %v2785 = vpack.c.b16 %v2433, %v2429
    %v2786 = vpack.c.b16 %v2438, %v2434
    %v2787 = vpack.c.b16 %v2439, %v2435
    %v2788 = vpack.c.b16 %v2440, %v2436
    %v2789 = vpack.c.b16 %v2441, %v2437
    %v2790 = vpack.c.b16 %v2446, %v2442
    %v2791 = vpack.c.b16 %v2447, %v2443
    %v2792 = vpack.c.b16 %v2448, %v2444
    %v2793 = vpack.c.b16 %v2449, %v2445
    %v2794 = vpack.c.b16 %v2454, %v2450
    %v2795 = vpack.c.b16 %v2455, %v2451
    %v2796 = vpack.c.b16 %v2456, %v2452
    %v2797 = vpack.c.b16 %v2457, %v2453
    %v2798 = vpack.c.b16 %v2462, %v2458
    %v2799 = vpack.c.b16 %v2463, %v2459
    %v2800 = vpack.c.b16 %v2464, %v2460
    %v2801 = vpack.c.b16 %v2465, %v2461
    %v2802 = vpack.c.b16 %v2470, %v2466
    %v2803 = vpack.c.b16 %v2471, %v2467
    %v2804 = vpack.c.b16 %v2472, %v2468
    %v2805 = vpack.c.b16 %v2473, %v2469
    %v2806 = vpack.c.b16 %v2478, %v2474
    %v2807 = vpack.c.b16 %v2479, %v2475
    %v2808 = vpack.c.b16 %v2480, %v2476
    %v2809 = vpack.c.b16 %v2481, %v2477
    %v2810 = vpack.c.b16 %v2486, %v2482
    %v2811 = vpack.c.b16 %v2487, %v2483
    %v2812 = vpack.c.b16 %v2488, %v2484
    %v2813 = vpack.c.b16 %v2489, %v2485
    %v2814 = vpack.c.b16 %v2494, %v2490
    %v2815 = vpack.c.b16 %v2495, %v2491
    %v2816 = vpack.c.b16 %v2496, %v2492
    %v2817 = vpack.c.b16 %v2497, %v2493
    %v2818 = vpack.c.b16 %v2502, %v2498
    %v2819 = vpack.c.b16 %v2503, %v2499
    %v2820 = vpack.c.b16 %v2504, %v2500
    %v2821 = vpack.c.b16 %v2505, %v2501
    %v2822 = vpack.c.b16 %v2510, %v2506
    %v2823 = vpack.c.b16 %v2511, %v2507
    %v2824 = vpack.c.b16 %v2512, %v2508
    %v2825 = vpack.c.b16 %v2513, %v2509
    %v2826 = vpack.c.b16 %v2518, %v2514
    %v2827 = vpack.c.b16 %v2519, %v2515
    %v2828 = vpack.c.b16 %v2520, %v2516
    %v2829 = vpack.c.b16 %v2521, %v2517
    %v2830 = vpack.c.b16 %v2526, %v2522
    %v2831 = vpack.c.b16 %v2527, %v2523
    %v2832 = vpack.c.b16 %v2528, %v2524
    %v2833 = vpack.c.b16 %v2529, %v2525
    %v2834 = vpack.c.b16 %v2534, %v2530
    %v2835 = vpack.c.b16 %v2535, %v2531
    %v2836 = vpack.c.b16 %v2536, %v2532
    %v2837 = vpack.c.b16 %v2537, %v2533
    %v2838 = vpack.c.b16 %v2542, %v2538
    %v2839 = vpack.c.b16 %v2543, %v2539
    %v2840 = vpack.c.b16 %v2544, %v2540
    %v2841 = vpack.c.b16 %v2545, %v2541
    %v2842 = vpack.c.b16 %v2550, %v2546
    %v2843 = vpack.c.b16 %v2551, %v2547
    %v2844 = vpack.c.b16 %v2552, %v2548
    %v2845 = vpack.c.b16 %v2553, %v2549
    %v2846 = vpack.c.b16 %v2558, %v2554
    %v2847 = vpack.c.b16 %v2559, %v2555
    %v2848 = vpack.c.b16 %v2560, %v2556
    %v2849 = vpack.c.b16 %v2561, %v2557
    %v2850 = vpack.c.b16 %v2566, %v2562
    %v2851 = vpack.c.b16 %v2567, %v2563
    %v2852 = vpack.c.b16 %v2568, %v2564
    %v2853 = vpack.c.b16 %v2569, %v2565
    %v2854 = vpack.c.b16 %v2574, %v2570
    %v2855 = vpack.c.b16 %v2575, %v2571
    %v2856 = vpack.c.b16 %v2576, %v2572
    %v2857 = vpack.c.b16 %v2577, %v2573
    %v2858 = vpack.c.b16 %v2582, %v2578
    %v2859 = vpack.c.b16 %v2583, %v2579
    %v2860 = vpack.c.b16 %v2584, %v2580
    %v2861 = vpack.c.b16 %v2585, %v2581
    %v2862 = vpack.c.b16 %v2590, %v2586
    %v2863 = vpack.c.b16 %v2591, %v2587
    %v2864 = vpack.c.b16 %v2592, %v2588
    %v2865 = vpack.c.b16 %v2593, %v2589
    %v2866 = vpack.c.b16 %v2598, %v2594
    %v2867 = vpack.c.b16 %v2599, %v2595
    %v2868 = vpack.c.b16 %v2600, %v2596
    %v2869 = vpack.c.b16 %v2601, %v2597
    %v2870 = vpack.c.b16 %v2606, %v2602
    %v2871 = vpack.c.b16 %v2607, %v2603
    %v2872 = vpack.c.b16 %v2608, %v2604
    %v2873 = vpack.c.b16 %v2609, %v2605
    %v2874 = vpack.c.b16 %v2614, %v2610
    %v2875 = vpack.c.b16 %v2615, %v2611
    %v2876 = vpack.c.b16 %v2616, %v2612
    %v2877 = vpack.c.b16 %v2617, %v2613
    %v2878 = vpack.c.b16 %v2622, %v2618
    %v2879 = vpack.c.b16 %v2623, %v2619
    %v2880 = vpack.c.b16 %v2624, %v2620
    %v2881 = vpack.c.b16 %v2625, %v2621
    %3138 = vmatprep.subr.bf16.mxu0 %v2627
    %3139 = vmatpush1.bf16.msra.mxu0 %v2626
    %3140 = vmatprep.subr.bf16.mxu0 %v2631
    %3141 = vmatpush1.bf16.msra.mxu0 %v2630
    %3142 = vmatprep.subr.bf16.mxu0 %v2635
    %3143 = vmatpush1.bf16.msra.mxu0 %v2634
    %3144 = vmatprep.subr.bf16.mxu0 %v2639
    %3145 = vmatpush1.bf16.msra.mxu0 %v2638
    %3146 = vmatprep.subr.bf16.mxu0 %v2643
    %3147 = vmatpush1.bf16.msra.mxu0 %v2642
    %3148 = vmatprep.subr.bf16.mxu0 %v2647
    %3149 = vmatpush1.bf16.msra.mxu0 %v2646
    %3150 = vmatprep.subr.bf16.mxu0 %v2651
    %3151 = vmatpush1.bf16.msra.mxu0 %v2650
    %3152 = vmatprep.subr.bf16.mxu0 %v2655
    %3153 = vmatpush1.bf16.msra.mxu0 %v2654
    %3154 = vmatprep.subr.bf16.mxu0 %v2659
    %3155 = vmatpush1.bf16.msra.mxu0 %v2658
    %3156 = vmatprep.subr.bf16.mxu0 %v2663
    %3157 = vmatpush1.bf16.msra.mxu0 %v2662
    %3158 = vmatprep.subr.bf16.mxu0 %v2667
    %3159 = vmatpush1.bf16.msra.mxu0 %v2666
    %3160 = vmatprep.subr.bf16.mxu0 %v2671
    %3161 = vmatpush1.bf16.msra.mxu0 %v2670
    %3162 = vmatprep.subr.bf16.mxu0 %v2675
    %3163 = vmatpush1.bf16.msra.mxu0 %v2674
    %3164 = vmatprep.subr.bf16.mxu0 %v2679
    %3165 = vmatpush1.bf16.msra.mxu0 %v2678
    %3166 = vmatprep.subr.bf16.mxu0 %v2683
    %3167 = vmatpush1.bf16.msra.mxu0 %v2682
    %3168 = vmatprep.subr.bf16.mxu0 %v2687
    %3169 = vmatpush1.bf16.msra.mxu0 %v2686
    %3170 = vmatprep.mubr.bf16.mxu0 %v1843
    %3171 = vmatmul.mubr.bf16.gmra.mrb[0].mxu0 %v1842
    %v3172 = vpop.f32.mrb[0].mxu0
    %v3173 = vadd.f32 %v1813, %v3172
    %v3174 = vpop.f32.mrb[0].mxu0
    %v3175 = vadd.f32 %v1817, %v3174
    %v3176 = vpop.f32.mrb[0].mxu0
    %v3177 = vpop.f32.mrb[0].mxu0
    %3178 = vdwg.mxu0
    %3179 = vmatprep.subr.bf16.mxu0 %v2691
    %3180 = vmatpush1.bf16.msra.mxu0 %v2690
    %3181 = vmatprep.subr.bf16.mxu0 %v2695
    %3182 = vmatpush1.bf16.msra.mxu0 %v2694
    %3183 = vmatprep.subr.bf16.mxu0 %v2699
    %3184 = vmatpush1.bf16.msra.mxu0 %v2698
    %3185 = vmatprep.subr.bf16.mxu0 %v2703
    %3186 = vmatpush1.bf16.msra.mxu0 %v2702
    %3187 = vmatprep.subr.bf16.mxu0 %v2707
    %3188 = vmatpush1.bf16.msra.mxu0 %v2706
    %3189 = vmatprep.subr.bf16.mxu0 %v2711
    %3190 = vmatpush1.bf16.msra.mxu0 %v2710
    %3191 = vmatprep.subr.bf16.mxu0 %v2715
    %3192 = vmatpush1.bf16.msra.mxu0 %v2714
    %3193 = vmatprep.subr.bf16.mxu0 %v2719
    %3194 = vmatpush1.bf16.msra.mxu0 %v2718
    %3195 = vmatprep.subr.bf16.mxu0 %v2723
    %3196 = vmatpush1.bf16.msra.mxu0 %v2722
    %3197 = vmatprep.subr.bf16.mxu0 %v2727
    %3198 = vmatpush1.bf16.msra.mxu0 %v2726
    %3199 = vmatprep.subr.bf16.mxu0 %v2731
    %3200 = vmatpush1.bf16.msra.mxu0 %v2730
    %3201 = vmatprep.subr.bf16.mxu0 %v2735
    %3202 = vmatpush1.bf16.msra.mxu0 %v2734
    %3203 = vmatprep.subr.bf16.mxu0 %v2739
    %3204 = vmatpush1.bf16.msra.mxu0 %v2738
    %3205 = vmatprep.subr.bf16.mxu0 %v2743
    %3206 = vmatpush1.bf16.msra.mxu0 %v2742
    %3207 = vmatprep.subr.bf16.mxu0 %v2747
    %3208 = vmatpush1.bf16.msra.mxu0 %v2746
    %3209 = vmatprep.subr.bf16.mxu0 %v2751
    %3210 = vmatpush1.bf16.msra.mxu0 %v2750
    %3211 = vmatprep.mubr.bf16.mxu0 %v1845
    %3212 = vmatmul.mubr.bf16.gmra.mrb[0].mxu0 %v1844
    %v3213 = vpop.f32.mrb[0].mxu0
    %v3214 = vadd.f32 %v3173, %v3213
    %v3215 = vpop.f32.mrb[0].mxu0
    %v3216 = vadd.f32 %v3175, %v3215
    %v3217 = vpop.f32.mrb[0].mxu0
    %v3218 = vpop.f32.mrb[0].mxu0
    %3219 = vdwg.mxu0
    %3220 = vmatprep.subr.bf16.mxu0 %v2755
    %3221 = vmatpush1.bf16.msra.mxu0 %v2754
    %3222 = vmatprep.subr.bf16.mxu0 %v2759
    %3223 = vmatpush1.bf16.msra.mxu0 %v2758
    %3224 = vmatprep.subr.bf16.mxu0 %v2763
    %3225 = vmatpush1.bf16.msra.mxu0 %v2762
    %3226 = vmatprep.subr.bf16.mxu0 %v2767
    %3227 = vmatpush1.bf16.msra.mxu0 %v2766
    %3228 = vmatprep.subr.bf16.mxu0 %v2771
    %3229 = vmatpush1.bf16.msra.mxu0 %v2770
    %3230 = vmatprep.subr.bf16.mxu0 %v2775
    %3231 = vmatpush1.bf16.msra.mxu0 %v2774
    %3232 = vmatprep.subr.bf16.mxu0 %v2779
    %3233 = vmatpush1.bf16.msra.mxu0 %v2778
    %3234 = vmatprep.subr.bf16.mxu0 %v2783
    %3235 = vmatpush1.bf16.msra.mxu0 %v2782
    %3236 = vmatprep.subr.bf16.mxu0 %v2787
    %3237 = vmatpush1.bf16.msra.mxu0 %v2786
    %3238 = vmatprep.subr.bf16.mxu0 %v2791
    %3239 = vmatpush1.bf16.msra.mxu0 %v2790
    %3240 = vmatprep.subr.bf16.mxu0 %v2795
    %3241 = vmatpush1.bf16.msra.mxu0 %v2794
    %3242 = vmatprep.subr.bf16.mxu0 %v2799
    %3243 = vmatpush1.bf16.msra.mxu0 %v2798
    %3244 = vmatprep.subr.bf16.mxu0 %v2803
    %3245 = vmatpush1.bf16.msra.mxu0 %v2802
    %3246 = vmatprep.subr.bf16.mxu0 %v2807
    %3247 = vmatpush1.bf16.msra.mxu0 %v2806
    %3248 = vmatprep.subr.bf16.mxu0 %v2811
    %3249 = vmatpush1.bf16.msra.mxu0 %v2810
    %3250 = vmatprep.subr.bf16.mxu0 %v2815
    %3251 = vmatpush1.bf16.msra.mxu0 %v2814
    %3252 = vmatprep.mubr.bf16.mxu0 %v1847
    %3253 = vmatmul.mubr.bf16.gmra.mrb[0].mxu0 %v1846
    %v3254 = vpop.f32.mrb[0].mxu0
    %v3255 = vadd.f32 %v3214, %v3254
    %v3256 = vpop.f32.mrb[0].mxu0
    %v3257 = vadd.f32 %v3216, %v3256
    %v3258 = vpop.f32.mrb[0].mxu0
    %v3259 = vpop.f32.mrb[0].mxu0
    %3260 = vdwg.mxu0
    %3261 = vmatprep.subr.bf16.mxu0 %v2819
    %3262 = vmatpush1.bf16.msra.mxu0 %v2818
    %3263 = vmatprep.subr.bf16.mxu0 %v2823
    %3264 = vmatpush1.bf16.msra.mxu0 %v2822
    %3265 = vmatprep.subr.bf16.mxu0 %v2827
    %3266 = vmatpush1.bf16.msra.mxu0 %v2826
    %3267 = vmatprep.subr.bf16.mxu0 %v2831
    %3268 = vmatpush1.bf16.msra.mxu0 %v2830
    %3269 = vmatprep.subr.bf16.mxu0 %v2835
    %3270 = vmatpush1.bf16.msra.mxu0 %v2834
    %3271 = vmatprep.subr.bf16.mxu0 %v2839
    %3272 = vmatpush1.bf16.msra.mxu0 %v2838
    %3273 = vmatprep.subr.bf16.mxu0 %v2843
    %3274 = vmatpush1.bf16.msra.mxu0 %v2842
    %3275 = vmatprep.subr.bf16.mxu0 %v2847
    %3276 = vmatpush1.bf16.msra.mxu0 %v2846
    %3277 = vmatprep.subr.bf16.mxu0 %v2851
    %3278 = vmatpush1.bf16.msra.mxu0 %v2850
    %3279 = vmatprep.subr.bf16.mxu0 %v2855
    %3280 = vmatpush1.bf16.msra.mxu0 %v2854
    %3281 = vmatprep.subr.bf16.mxu0 %v2859
    %3282 = vmatpush1.bf16.msra.mxu0 %v2858
    %3283 = vmatprep.subr.bf16.mxu0 %v2863
    %3284 = vmatpush1.bf16.msra.mxu0 %v2862
    %3285 = vmatprep.subr.bf16.mxu0 %v2867
    %3286 = vmatpush1.bf16.msra.mxu0 %v2866
    %3287 = vmatprep.subr.bf16.mxu0 %v2871
    %3288 = vmatpush1.bf16.msra.mxu0 %v2870
    %3289 = vmatprep.subr.bf16.mxu0 %v2875
    %3290 = vmatpush1.bf16.msra.mxu0 %v2874
    %3291 = vmatprep.subr.bf16.mxu0 %v2879
    %3292 = vmatpush1.bf16.msra.mxu0 %v2878
    %3293 = vmatprep.mubr.bf16.mxu0 %v1849
    %3294 = vmatmul.mubr.bf16.gmra.mrb[0].mxu0 %v1848
    %v3295 = vpop.f32.mrb[0].mxu0
    %v3296 = vadd.f32 %v3255, %v3295
    %v3297 = vpop.f32.mrb[0].mxu0
    %v3298 = vadd.f32 %v3257, %v3297
    %v3299 = vpop.f32.mrb[0].mxu0
    %v3300 = vpop.f32.mrb[0].mxu0
    %3301 = vdwg.mxu0
    %3302 = vmatprep.subr.bf16.mxu0 %v2629
    %3303 = vmatpush1.bf16.msra.mxu0 %v2628
    %3304 = vmatprep.subr.bf16.mxu0 %v2633
    %3305 = vmatpush1.bf16.msra.mxu0 %v2632
    %3306 = vmatprep.subr.bf16.mxu0 %v2637
    %3307 = vmatpush1.bf16.msra.mxu0 %v2636
    %3308 = vmatprep.subr.bf16.mxu0 %v2641
    %3309 = vmatpush1.bf16.msra.mxu0 %v2640
    %3310 = vmatprep.subr.bf16.mxu0 %v2645
    %3311 = vmatpush1.bf16.msra.mxu0 %v2644
    %3312 = vmatprep.subr.bf16.mxu0 %v2649
    %3313 = vmatpush1.bf16.msra.mxu0 %v2648
    %3314 = vmatprep.subr.bf16.mxu0 %v2653
    %3315 = vmatpush1.bf16.msra.mxu0 %v2652
    %3316 = vmatprep.subr.bf16.mxu0 %v2657
    %3317 = vmatpush1.bf16.msra.mxu0 %v2656
    %3318 = vmatprep.subr.bf16.mxu0 %v2661
    %3319 = vmatpush1.bf16.msra.mxu0 %v2660
    %3320 = vmatprep.subr.bf16.mxu0 %v2665
    %3321 = vmatpush1.bf16.msra.mxu0 %v2664
    %3322 = vmatprep.subr.bf16.mxu0 %v2669
    %3323 = vmatpush1.bf16.msra.mxu0 %v2668
    %3324 = vmatprep.subr.bf16.mxu0 %v2673
    %3325 = vmatpush1.bf16.msra.mxu0 %v2672
    %3326 = vmatprep.subr.bf16.mxu0 %v2677
    %3327 = vmatpush1.bf16.msra.mxu0 %v2676
    %3328 = vmatprep.subr.bf16.mxu0 %v2681
    %3329 = vmatpush1.bf16.msra.mxu0 %v2680
    %3330 = vmatprep.subr.bf16.mxu0 %v2685
    %3331 = vmatpush1.bf16.msra.mxu0 %v2684
    %3332 = vmatprep.subr.bf16.mxu0 %v2689
    %3333 = vmatpush1.bf16.msra.mxu0 %v2688
    %3334 = vmatprep.mubr.bf16.mxu0 %v1843
    %3335 = vmatmul.mubr.bf16.gmra.mrb[0].mxu0 %v1842
    %v3336 = vpop.f32.mrb[0].mxu0
    %v3337 = vadd.f32 %v1821, %v3336
    %v3338 = vpop.f32.mrb[0].mxu0
    %v3339 = vadd.f32 %v1825, %v3338
    %v3340 = vpop.f32.mrb[0].mxu0
    %v3341 = vpop.f32.mrb[0].mxu0
    %3342 = vdwg.mxu0
    %3343 = vmatprep.subr.bf16.mxu0 %v2693
    %3344 = vmatpush1.bf16.msra.mxu0 %v2692
    %3345 = vmatprep.subr.bf16.mxu0 %v2697
    %3346 = vmatpush1.bf16.msra.mxu0 %v2696
    %3347 = vmatprep.subr.bf16.mxu0 %v2701
    %3348 = vmatpush1.bf16.msra.mxu0 %v2700
    %3349 = vmatprep.subr.bf16.mxu0 %v2705
    %3350 = vmatpush1.bf16.msra.mxu0 %v2704
    %3351 = vmatprep.subr.bf16.mxu0 %v2709
    %3352 = vmatpush1.bf16.msra.mxu0 %v2708
    %3353 = vmatprep.subr.bf16.mxu0 %v2713
    %3354 = vmatpush1.bf16.msra.mxu0 %v2712
    %3355 = vmatprep.subr.bf16.mxu0 %v2717
    %3356 = vmatpush1.bf16.msra.mxu0 %v2716
    %3357 = vmatprep.subr.bf16.mxu0 %v2721
    %3358 = vmatpush1.bf16.msra.mxu0 %v2720
    %3359 = vmatprep.subr.bf16.mxu0 %v2725
    %3360 = vmatpush1.bf16.msra.mxu0 %v2724
    %3361 = vmatprep.subr.bf16.mxu0 %v2729
    %3362 = vmatpush1.bf16.msra.mxu0 %v2728
    %3363 = vmatprep.subr.bf16.mxu0 %v2733
    %3364 = vmatpush1.bf16.msra.mxu0 %v2732
    %3365 = vmatprep.subr.bf16.mxu0 %v2737
    %3366 = vmatpush1.bf16.msra.mxu0 %v2736
    %3367 = vmatprep.subr.bf16.mxu0 %v2741
    %3368 = vmatpush1.bf16.msra.mxu0 %v2740
    %3369 = vmatprep.subr.bf16.mxu0 %v2745
    %3370 = vmatpush1.bf16.msra.mxu0 %v2744
    %3371 = vmatprep.subr.bf16.mxu0 %v2749
    %3372 = vmatpush1.bf16.msra.mxu0 %v2748
    %3373 = vmatprep.subr.bf16.mxu0 %v2753
    %3374 = vmatpush1.bf16.msra.mxu0 %v2752
    %3375 = vmatprep.mubr.bf16.mxu0 %v1845
    %3376 = vmatmul.mubr.bf16.gmra.mrb[0].mxu0 %v1844
    %v3377 = vpop.f32.mrb[0].mxu0
    %v3378 = vadd.f32 %v3337, %v3377
    %v3379 = vpop.f32.mrb[0].mxu0
    %v3380 = vadd.f32 %v3339, %v3379
    %v3381 = vpop.f32.mrb[0].mxu0
    %v3382 = vpop.f32.mrb[0].mxu0
    %3383 = vdwg.mxu0
    %3384 = vmatprep.subr.bf16.mxu0 %v2757
    %3385 = vmatpush1.bf16.msra.mxu0 %v2756
    %3386 = vmatprep.subr.bf16.mxu0 %v2761
    %3387 = vmatpush1.bf16.msra.mxu0 %v2760
    %3388 = vmatprep.subr.bf16.mxu0 %v2765
    %3389 = vmatpush1.bf16.msra.mxu0 %v2764
    %3390 = vmatprep.subr.bf16.mxu0 %v2769
    %3391 = vmatpush1.bf16.msra.mxu0 %v2768
    %3392 = vmatprep.subr.bf16.mxu0 %v2773
    %3393 = vmatpush1.bf16.msra.mxu0 %v2772
    %3394 = vmatprep.subr.bf16.mxu0 %v2777
    %3395 = vmatpush1.bf16.msra.mxu0 %v2776
    %3396 = vmatprep.subr.bf16.mxu0 %v2781
    %3397 = vmatpush1.bf16.msra.mxu0 %v2780
    %3398 = vmatprep.subr.bf16.mxu0 %v2785
    %3399 = vmatpush1.bf16.msra.mxu0 %v2784
    %3400 = vmatprep.subr.bf16.mxu0 %v2789
    %3401 = vmatpush1.bf16.msra.mxu0 %v2788
    %3402 = vmatprep.subr.bf16.mxu0 %v2793
    %3403 = vmatpush1.bf16.msra.mxu0 %v2792
    %3404 = vmatprep.subr.bf16.mxu0 %v2797
    %3405 = vmatpush1.bf16.msra.mxu0 %v2796
    %3406 = vmatprep.subr.bf16.mxu0 %v2801
    %3407 = vmatpush1.bf16.msra.mxu0 %v2800
    %3408 = vmatprep.subr.bf16.mxu0 %v2805
    %3409 = vmatpush1.bf16.msra.mxu0 %v2804
    %3410 = vmatprep.subr.bf16.mxu0 %v2809
    %3411 = vmatpush1.bf16.msra.mxu0 %v2808
    %3412 = vmatprep.subr.bf16.mxu0 %v2813
    %3413 = vmatpush1.bf16.msra.mxu0 %v2812
    %3414 = vmatprep.subr.bf16.mxu0 %v2817
    %3415 = vmatpush1.bf16.msra.mxu0 %v2816
    %3416 = vmatprep.mubr.bf16.mxu0 %v1847
    %3417 = vmatmul.mubr.bf16.gmra.mrb[0].mxu0 %v1846
    %v3418 = vpop.f32.mrb[0].mxu0
    %v3419 = vadd.f32 %v3378, %v3418
    %v3420 = vpop.f32.mrb[0].mxu0
    %v3421 = vadd.f32 %v3380, %v3420
    %v3422 = vpop.f32.mrb[0].mxu0
    %v3423 = vpop.f32.mrb[0].mxu0
    %3424 = vdwg.mxu0
    %3425 = vmatprep.subr.bf16.mxu0 %v2821
    %3426 = vmatpush1.bf16.msra.mxu0 %v2820
    %3427 = vmatprep.subr.bf16.mxu0 %v2825
    %3428 = vmatpush1.bf16.msra.mxu0 %v2824
    %3429 = vmatprep.subr.bf16.mxu0 %v2829
    %3430 = vmatpush1.bf16.msra.mxu0 %v2828
    %3431 = vmatprep.subr.bf16.mxu0 %v2833
    %3432 = vmatpush1.bf16.msra.mxu0 %v2832
    %3433 = vmatprep.subr.bf16.mxu0 %v2837
    %3434 = vmatpush1.bf16.msra.mxu0 %v2836
    %3435 = vmatprep.subr.bf16.mxu0 %v2841
    %3436 = vmatpush1.bf16.msra.mxu0 %v2840
    %3437 = vmatprep.subr.bf16.mxu0 %v2845
    %3438 = vmatpush1.bf16.msra.mxu0 %v2844
    %3439 = vmatprep.subr.bf16.mxu0 %v2849
    %3440 = vmatpush1.bf16.msra.mxu0 %v2848
    %3441 = vmatprep.subr.bf16.mxu0 %v2853
    %3442 = vmatpush1.bf16.msra.mxu0 %v2852
    %3443 = vmatprep.subr.bf16.mxu0 %v2857
    %3444 = vmatpush1.bf16.msra.mxu0 %v2856
    %3445 = vmatprep.subr.bf16.mxu0 %v2861
    %3446 = vmatpush1.bf16.msra.mxu0 %v2860
    %3447 = vmatprep.subr.bf16.mxu0 %v2865
    %3448 = vmatpush1.bf16.msra.mxu0 %v2864
    %3449 = vmatprep.subr.bf16.mxu0 %v2869
    %3450 = vmatpush1.bf16.msra.mxu0 %v2868
    %3451 = vmatprep.subr.bf16.mxu0 %v2873
    %3452 = vmatpush1.bf16.msra.mxu0 %v2872
    %3453 = vmatprep.subr.bf16.mxu0 %v2877
    %3454 = vmatpush1.bf16.msra.mxu0 %v2876
    %3455 = vmatprep.subr.bf16.mxu0 %v2881
    %3456 = vmatpush1.bf16.msra.mxu0 %v2880
    %3457 = vmatprep.mubr.bf16.mxu0 %v1849
    %3458 = vmatmul.mubr.bf16.gmra.mrb[0].mxu0 %v1848
    %v3459 = vpop.f32.mrb[0].mxu0
    %v3460 = vadd.f32 %v3419, %v3459
    %v3461 = vpop.f32.mrb[0].mxu0
    %v3462 = vadd.f32 %v3421, %v3461
    %v3463 = vpop.f32.mrb[0].mxu0
    %v3464 = vpop.f32.mrb[0].mxu0
    %3465 = vdwg.mxu0
    %v3466 = vmax.f32 %v3296, 0.0
    %v3467 = vmax.f32 %v3298, 0.0
    %v3468 = vmax.f32 %v3460, 0.0
    %v3469 = vmax.f32 %v3462, 0.0
    %v3470 = vpack.c.bf16 %v3466, %v3466
    %v3471 = vpack.c.bf16 %v3467, %v3467
    %v3472 = vpack.c.bf16 %v3468, %v3468
    %v3473 = vpack.c.bf16 %v3469, %v3469
    %v3474 = vld [vmem:[#allocation16] sm:$0xff]
    %v3475 = vld [vmem:[#allocation16 + $0x8] sm:$0xff]
    %v3476 = vld [vmem:[#allocation16 + $0x10] sm:$0xff]
    %v3477 = vld [vmem:[#allocation16 + $0x18] sm:$0xff]
    %v3478 = vld [vmem:[#allocation16 + $0x20] sm:$0xff]
    %v3479 = vld [vmem:[#allocation16 + $0x28] sm:$0xff]
    %v3480 = vld [vmem:[#allocation16 + $0x30] sm:$0xff]
    %v3481 = vld [vmem:[#allocation16 + $0x38] sm:$0xff]
    %v3482 = vld [vmem:[#allocation16 + $0x40] sm:$0xff]
    %v3483 = vld [vmem:[#allocation16 + $0x48] sm:$0xff]
    %v3484 = vld [vmem:[#allocation16 + $0x50] sm:$0xff]
    %v3485 = vld [vmem:[#allocation16 + $0x58] sm:$0xff]
    %v3486 = vld [vmem:[#allocation16 + $0x60] sm:$0xff]
    %v3487 = vld [vmem:[#allocation16 + $0x68] sm:$0xff]
    %v3488 = vld [vmem:[#allocation16 + $0x70] sm:$0xff]
    %v3489 = vld [vmem:[#allocation16 + $0x78] sm:$0xff]
    %v3490 = vld [vmem:[#allocation16 + $0x80] sm:$0xff]
    %v3491 = vld [vmem:[#allocation16 + $0x88] sm:$0xff]
    %v3492 = vld [vmem:[#allocation16 + $0x90] sm:$0xff]
    %v3493 = vld [vmem:[#allocation16 + $0x98] sm:$0xff]
    %v3494 = vld [vmem:[#allocation16 + $0xa0] sm:$0xff]
    %v3495 = vld [vmem:[#allocation16 + $0xa8] sm:$0xff]
    %v3496 = vld [vmem:[#allocation16 + $0xb0] sm:$0xff]
    %v3497 = vld [vmem:[#allocation16 + $0xb8] sm:$0xff]
    %v3498 = vld [vmem:[#allocation16 + $0xc0] sm:$0xff]
    %v3499 = vld [vmem:[#allocation16 + $0xc8] sm:$0xff]
    %v3500 = vld [vmem:[#allocation16 + $0xd0] sm:$0xff]
    %v3501 = vld [vmem:[#allocation16 + $0xd8] sm:$0xff]
    %v3502 = vld [vmem:[#allocation16 + $0xe0] sm:$0xff]
    %v3503 = vld [vmem:[#allocation16 + $0xe8] sm:$0xff]
    %v3504 = vld [vmem:[#allocation16 + $0xf0] sm:$0xff]
    %v3505 = vld [vmem:[#allocation16 + $0xf8] sm:$0xff]
    %v3506 = vld [vmem:[#allocation16 + $0x100] sm:$0xff]
    %v3507 = vld [vmem:[#allocation16 + $0x108] sm:$0xff]
    %v3508 = vld [vmem:[#allocation16 + $0x110] sm:$0xff]
    %v3509 = vld [vmem:[#allocation16 + $0x118] sm:$0xff]
    %v3510 = vld [vmem:[#allocation16 + $0x120] sm:$0xff]
    %v3511 = vld [vmem:[#allocation16 + $0x128] sm:$0xff]
    %v3512 = vld [vmem:[#allocation16 + $0x130] sm:$0xff]
    %v3513 = vld [vmem:[#allocation16 + $0x138] sm:$0xff]
    %v3514 = vld [vmem:[#allocation16 + $0x140] sm:$0xff]
    %v3515 = vld [vmem:[#allocation16 + $0x148] sm:$0xff]
    %v3516 = vld [vmem:[#allocation16 + $0x150] sm:$0xff]
    %v3517 = vld [vmem:[#allocation16 + $0x158] sm:$0xff]
    %v3518 = vld [vmem:[#allocation16 + $0x160] sm:$0xff]
    %v3519 = vld [vmem:[#allocation16 + $0x168] sm:$0xff]
    %v3520 = vld [vmem:[#allocation16 + $0x170] sm:$0xff]
    %v3521 = vld [vmem:[#allocation16 + $0x178] sm:$0xff]
    %v3522 = vld [vmem:[#allocation16 + $0x180] sm:$0xff]
    %v3523 = vld [vmem:[#allocation16 + $0x188] sm:$0xff]
    %v3524 = vld [vmem:[#allocation16 + $0x190] sm:$0xff]
    %v3525 = vld [vmem:[#allocation16 + $0x198] sm:$0xff]
    %v3526 = vld [vmem:[#allocation16 + $0x1a0] sm:$0xff]
    %v3527 = vld [vmem:[#allocation16 + $0x1a8] sm:$0xff]
    %v3528 = vld [vmem:[#allocation16 + $0x1b0] sm:$0xff]
    %v3529 = vld [vmem:[#allocation16 + $0x1b8] sm:$0xff]
    %v3530 = vld [vmem:[#allocation16 + $0x1c0] sm:$0xff]
    %v3531 = vld [vmem:[#allocation16 + $0x1c8] sm:$0xff]
    %v3532 = vld [vmem:[#allocation16 + $0x1d0] sm:$0xff]
    %v3533 = vld [vmem:[#allocation16 + $0x1d8] sm:$0xff]
    %v3534 = vld [vmem:[#allocation16 + $0x1e0] sm:$0xff]
    %v3535 = vld [vmem:[#allocation16 + $0x1e8] sm:$0xff]
    %v3536 = vld [vmem:[#allocation16 + $0x1f0] sm:$0xff]
    %v3537 = vld [vmem:[#allocation16 + $0x1f8] sm:$0xff]
    %v3538 = vld [vmem:[%s14] sm:$0x3]
    %v3540 = vlaneseq
    %v3541 = vshrl.u32 %v3540, 7
    %v3542 = vsub.s32 0, %v3541
    %v3543 = vrot.slane %v3538, %v3542
    %v3544 = vlaneseq
    %v3545 = vshrl.u32 %v3544, 7
    %v3546 = vsub.s32 1, %v3545
    %v3547 = vrot.slane %v3538, %v3546
    %v3614 = vunpack.c.l.b16 %v3474
    %v3615 = vunpack.c.h.b16 %v3474
    %v3616 = vunpack.c.l.b16 %v3475
    %v3617 = vunpack.c.h.b16 %v3475
    %v3618 = vunpack.c.l.b16 %v3476
    %v3619 = vunpack.c.h.b16 %v3476
    %v3620 = vunpack.c.l.b16 %v3477
    %v3621 = vunpack.c.h.b16 %v3477
    %v3622 = vunpack.c.l.b16 %v3478
    %v3623 = vunpack.c.h.b16 %v3478
    %v3624 = vunpack.c.l.b16 %v3479
    %v3625 = vunpack.c.h.b16 %v3479
    %v3626 = vunpack.c.l.b16 %v3480
    %v3627 = vunpack.c.h.b16 %v3480
    %v3628 = vunpack.c.l.b16 %v3481
    %v3629 = vunpack.c.h.b16 %v3481
    %v3630 = vunpack.c.l.b16 %v3482
    %v3631 = vunpack.c.h.b16 %v3482
    %v3632 = vunpack.c.l.b16 %v3483
    %v3633 = vunpack.c.h.b16 %v3483
    %v3634 = vunpack.c.l.b16 %v3484
    %v3635 = vunpack.c.h.b16 %v3484
    %v3636 = vunpack.c.l.b16 %v3485
    %v3637 = vunpack.c.h.b16 %v3485
    %v3638 = vunpack.c.l.b16 %v3486
    %v3639 = vunpack.c.h.b16 %v3486
    %v3640 = vunpack.c.l.b16 %v3487
    %v3641 = vunpack.c.h.b16 %v3487
    %v3642 = vunpack.c.l.b16 %v3488
    %v3643 = vunpack.c.h.b16 %v3488
    %v3644 = vunpack.c.l.b16 %v3489
    %v3645 = vunpack.c.h.b16 %v3489
    %v3646 = vunpack.c.l.b16 %v3490
    %v3647 = vunpack.c.h.b16 %v3490
    %v3648 = vunpack.c.l.b16 %v3491
    %v3649 = vunpack.c.h.b16 %v3491
    %v3650 = vunpack.c.l.b16 %v3492
    %v3651 = vunpack.c.h.b16 %v3492
    %v3652 = vunpack.c.l.b16 %v3493
    %v3653 = vunpack.c.h.b16 %v3493
    %v3654 = vunpack.c.l.b16 %v3494
    %v3655 = vunpack.c.h.b16 %v3494
    %v3656 = vunpack.c.l.b16 %v3495
    %v3657 = vunpack.c.h.b16 %v3495
    %v3658 = vunpack.c.l.b16 %v3496
    %v3659 = vunpack.c.h.b16 %v3496
    %v3660 = vunpack.c.l.b16 %v3497
    %v3661 = vunpack.c.h.b16 %v3497
    %v3662 = vunpack.c.l.b16 %v3498
    %v3663 = vunpack.c.h.b16 %v3498
    %v3664 = vunpack.c.l.b16 %v3499
    %v3665 = vunpack.c.h.b16 %v3499
    %v3666 = vunpack.c.l.b16 %v3500
    %v3667 = vunpack.c.h.b16 %v3500
    %v3668 = vunpack.c.l.b16 %v3501
    %v3669 = vunpack.c.h.b16 %v3501
    %v3670 = vunpack.c.l.b16 %v3502
    %v3671 = vunpack.c.h.b16 %v3502
    %v3672 = vunpack.c.l.b16 %v3503
    %v3673 = vunpack.c.h.b16 %v3503
    %v3674 = vunpack.c.l.b16 %v3504
    %v3675 = vunpack.c.h.b16 %v3504
    %v3676 = vunpack.c.l.b16 %v3505
    %v3677 = vunpack.c.h.b16 %v3505
    %v3678 = vunpack.c.l.b16 %v3506
    %v3679 = vunpack.c.h.b16 %v3506
    %v3680 = vunpack.c.l.b16 %v3507
    %v3681 = vunpack.c.h.b16 %v3507
    %v3682 = vunpack.c.l.b16 %v3508
    %v3683 = vunpack.c.h.b16 %v3508
    %v3684 = vunpack.c.l.b16 %v3509
    %v3685 = vunpack.c.h.b16 %v3509
    %v3686 = vunpack.c.l.b16 %v3510
    %v3687 = vunpack.c.h.b16 %v3510
    %v3688 = vunpack.c.l.b16 %v3511
    %v3689 = vunpack.c.h.b16 %v3511
    %v3690 = vunpack.c.l.b16 %v3512
    %v3691 = vunpack.c.h.b16 %v3512
    %v3692 = vunpack.c.l.b16 %v3513
    %v3693 = vunpack.c.h.b16 %v3513
    %v3694 = vunpack.c.l.b16 %v3514
    %v3695 = vunpack.c.h.b16 %v3514
    %v3696 = vunpack.c.l.b16 %v3515
    %v3697 = vunpack.c.h.b16 %v3515
    %v3698 = vunpack.c.l.b16 %v3516
    %v3699 = vunpack.c.h.b16 %v3516
    %v3700 = vunpack.c.l.b16 %v3517
    %v3701 = vunpack.c.h.b16 %v3517
    %v3702 = vunpack.c.l.b16 %v3518
    %v3703 = vunpack.c.h.b16 %v3518
    %v3704 = vunpack.c.l.b16 %v3519
    %v3705 = vunpack.c.h.b16 %v3519
    %v3706 = vunpack.c.l.b16 %v3520
    %v3707 = vunpack.c.h.b16 %v3520
    %v3708 = vunpack.c.l.b16 %v3521
    %v3709 = vunpack.c.h.b16 %v3521
    %v3710 = vunpack.c.l.b16 %v3522
    %v3711 = vunpack.c.h.b16 %v3522
    %v3712 = vunpack.c.l.b16 %v3523
    %v3713 = vunpack.c.h.b16 %v3523
    %v3714 = vunpack.c.l.b16 %v3524
    %v3715 = vunpack.c.h.b16 %v3524
    %v3716 = vunpack.c.l.b16 %v3525
    %v3717 = vunpack.c.h.b16 %v3525
    %v3718 = vunpack.c.l.b16 %v3526
    %v3719 = vunpack.c.h.b16 %v3526
    %v3720 = vunpack.c.l.b16 %v3527
    %v3721 = vunpack.c.h.b16 %v3527
    %v3722 = vunpack.c.l.b16 %v3528
    %v3723 = vunpack.c.h.b16 %v3528
    %v3724 = vunpack.c.l.b16 %v3529
    %v3725 = vunpack.c.h.b16 %v3529
    %v3726 = vunpack.c.l.b16 %v3530
    %v3727 = vunpack.c.h.b16 %v3530
    %v3728 = vunpack.c.l.b16 %v3531
    %v3729 = vunpack.c.h.b16 %v3531
    %v3730 = vunpack.c.l.b16 %v3532
    %v3731 = vunpack.c.h.b16 %v3532
    %v3732 = vunpack.c.l.b16 %v3533
    %v3733 = vunpack.c.h.b16 %v3533
    %v3734 = vunpack.c.l.b16 %v3534
    %v3735 = vunpack.c.h.b16 %v3534
    %v3736 = vunpack.c.l.b16 %v3535
    %v3737 = vunpack.c.h.b16 %v3535
    %v3738 = vunpack.c.l.b16 %v3536
    %v3739 = vunpack.c.h.b16 %v3536
    %v3740 = vunpack.c.l.b16 %v3537
    %v3741 = vunpack.c.h.b16 %v3537
    %v3742 = vpack.c.b16 %v3616, %v3614
    %v3743 = vpack.c.b16 %v3617, %v3615
    %v3744 = vpack.c.b16 %v3620, %v3618
    %v3745 = vpack.c.b16 %v3621, %v3619
    %v3746 = vpack.c.b16 %v3624, %v3622
    %v3747 = vpack.c.b16 %v3625, %v3623
    %v3748 = vpack.c.b16 %v3628, %v3626
    %v3749 = vpack.c.b16 %v3629, %v3627
    %v3750 = vpack.c.b16 %v3632, %v3630
    %v3751 = vpack.c.b16 %v3633, %v3631
    %v3752 = vpack.c.b16 %v3636, %v3634
    %v3753 = vpack.c.b16 %v3637, %v3635
    %v3754 = vpack.c.b16 %v3640, %v3638
    %v3755 = vpack.c.b16 %v3641, %v3639
    %v3756 = vpack.c.b16 %v3644, %v3642
    %v3757 = vpack.c.b16 %v3645, %v3643
    %v3758 = vpack.c.b16 %v3648, %v3646
    %v3759 = vpack.c.b16 %v3649, %v3647
    %v3760 = vpack.c.b16 %v3652, %v3650
    %v3761 = vpack.c.b16 %v3653, %v3651
    %v3762 = vpack.c.b16 %v3656, %v3654
    %v3763 = vpack.c.b16 %v3657, %v3655
    %v3764 = vpack.c.b16 %v3660, %v3658
    %v3765 = vpack.c.b16 %v3661, %v3659
    %v3766 = vpack.c.b16 %v3664, %v3662
    %v3767 = vpack.c.b16 %v3665, %v3663
    %v3768 = vpack.c.b16 %v3668, %v3666
    %v3769 = vpack.c.b16 %v3669, %v3667
    %v3770 = vpack.c.b16 %v3672, %v3670
    %v3771 = vpack.c.b16 %v3673, %v3671
    %v3772 = vpack.c.b16 %v3676, %v3674
    %v3773 = vpack.c.b16 %v3677, %v3675
    %v3774 = vpack.c.b16 %v3680, %v3678
    %v3775 = vpack.c.b16 %v3681, %v3679
    %v3776 = vpack.c.b16 %v3684, %v3682
    %v3777 = vpack.c.b16 %v3685, %v3683
    %v3778 = vpack.c.b16 %v3688, %v3686
    %v3779 = vpack.c.b16 %v3689, %v3687
    %v3780 = vpack.c.b16 %v3692, %v3690
    %v3781 = vpack.c.b16 %v3693, %v3691
    %v3782 = vpack.c.b16 %v3696, %v3694
    %v3783 = vpack.c.b16 %v3697, %v3695
    %v3784 = vpack.c.b16 %v3700, %v3698
    %v3785 = vpack.c.b16 %v3701, %v3699
    %v3786 = vpack.c.b16 %v3704, %v3702
    %v3787 = vpack.c.b16 %v3705, %v3703
    %v3788 = vpack.c.b16 %v3708, %v3706
    %v3789 = vpack.c.b16 %v3709, %v3707
    %v3790 = vpack.c.b16 %v3712, %v3710
    %v3791 = vpack.c.b16 %v3713, %v3711
    %v3792 = vpack.c.b16 %v3716, %v3714
    %v3793 = vpack.c.b16 %v3717, %v3715
    %v3794 = vpack.c.b16 %v3720, %v3718
    %v3795 = vpack.c.b16 %v3721, %v3719
    %v3796 = vpack.c.b16 %v3724, %v3722
    %v3797 = vpack.c.b16 %v3725, %v3723
    %v3798 = vpack.c.b16 %v3728, %v3726
    %v3799 = vpack.c.b16 %v3729, %v3727
    %v3800 = vpack.c.b16 %v3732, %v3730
    %v3801 = vpack.c.b16 %v3733, %v3731
    %v3802 = vpack.c.b16 %v3736, %v3734
    %v3803 = vpack.c.b16 %v3737, %v3735
    %v3804 = vpack.c.b16 %v3740, %v3738
    %v3805 = vpack.c.b16 %v3741, %v3739
    %3870 = vmatprep.subr.bf16.mxu0 %v3743
    %3871 = vmatpush1.bf16.msra.mxu0 %v3742
    %3872 = vmatprep.subr.bf16.mxu0 %v3745
    %3873 = vmatpush1.bf16.msra.mxu0 %v3744
    %3874 = vmatprep.subr.bf16.mxu0 %v3747
    %3875 = vmatpush1.bf16.msra.mxu0 %v3746
    %3876 = vmatprep.subr.bf16.mxu0 %v3749
    %3877 = vmatpush1.bf16.msra.mxu0 %v3748
    %3878 = vmatprep.subr.bf16.mxu0 %v3751
    %3879 = vmatpush1.bf16.msra.mxu0 %v3750
    %3880 = vmatprep.subr.bf16.mxu0 %v3753
    %3881 = vmatpush1.bf16.msra.mxu0 %v3752
    %3882 = vmatprep.subr.bf16.mxu0 %v3755
    %3883 = vmatpush1.bf16.msra.mxu0 %v3754
    %3884 = vmatprep.subr.bf16.mxu0 %v3757
    %3885 = vmatpush1.bf16.msra.mxu0 %v3756
    %3886 = vmatprep.subr.bf16.mxu0 %v3759
    %3887 = vmatpush1.bf16.msra.mxu0 %v3758
    %3888 = vmatprep.subr.bf16.mxu0 %v3761
    %3889 = vmatpush1.bf16.msra.mxu0 %v3760
    %3890 = vmatprep.subr.bf16.mxu0 %v3763
    %3891 = vmatpush1.bf16.msra.mxu0 %v3762
    %3892 = vmatprep.subr.bf16.mxu0 %v3765
    %3893 = vmatpush1.bf16.msra.mxu0 %v3764
    %3894 = vmatprep.subr.bf16.mxu0 %v3767
    %3895 = vmatpush1.bf16.msra.mxu0 %v3766
    %3896 = vmatprep.subr.bf16.mxu0 %v3769
    %3897 = vmatpush1.bf16.msra.mxu0 %v3768
    %3898 = vmatprep.subr.bf16.mxu0 %v3771
    %3899 = vmatpush1.bf16.msra.mxu0 %v3770
    %3900 = vmatprep.subr.bf16.mxu0 %v3773
    %3901 = vmatpush1.bf16.msra.mxu0 %v3772
    %3902 = vmatprep.mubr.bf16.mxu0 %v3471
    %3903 = vmatmul.mubr.bf16.gmra.mrb[0].mxu0 %v3470
    %v3904 = vpop.f32.mrb[0].mxu0
    %v3905 = vadd.f32 %v3543, %v3904
    %v3906 = vpop.f32.mrb[0].mxu0
    %v3907 = vadd.f32 %v3547, %v3906
    %v3908 = vpop.f32.mrb[0].mxu0
    %v3909 = vpop.f32.mrb[0].mxu0
    %3910 = vdwg.mxu0
    %3911 = vmatprep.subr.bf16.mxu0 %v3775
    %3912 = vmatpush1.bf16.msra.mxu0 %v3774
    %3913 = vmatprep.subr.bf16.mxu0 %v3777
    %3914 = vmatpush1.bf16.msra.mxu0 %v3776
    %3915 = vmatprep.subr.bf16.mxu0 %v3779
    %3916 = vmatpush1.bf16.msra.mxu0 %v3778
    %3917 = vmatprep.subr.bf16.mxu0 %v3781
    %3918 = vmatpush1.bf16.msra.mxu0 %v3780
    %3919 = vmatprep.subr.bf16.mxu0 %v3783
    %3920 = vmatpush1.bf16.msra.mxu0 %v3782
    %3921 = vmatprep.subr.bf16.mxu0 %v3785
    %3922 = vmatpush1.bf16.msra.mxu0 %v3784
    %3923 = vmatprep.subr.bf16.mxu0 %v3787
    %3924 = vmatpush1.bf16.msra.mxu0 %v3786
    %3925 = vmatprep.subr.bf16.mxu0 %v3789
    %3926 = vmatpush1.bf16.msra.mxu0 %v3788
    %3927 = vmatprep.subr.bf16.mxu0 %v3791
    %3928 = vmatpush1.bf16.msra.mxu0 %v3790
    %3929 = vmatprep.subr.bf16.mxu0 %v3793
    %3930 = vmatpush1.bf16.msra.mxu0 %v3792
    %3931 = vmatprep.subr.bf16.mxu0 %v3795
    %3932 = vmatpush1.bf16.msra.mxu0 %v3794
    %3933 = vmatprep.subr.bf16.mxu0 %v3797
    %3934 = vmatpush1.bf16.msra.mxu0 %v3796
    %3935 = vmatprep.subr.bf16.mxu0 %v3799
    %3936 = vmatpush1.bf16.msra.mxu0 %v3798
    %3937 = vmatprep.subr.bf16.mxu0 %v3801
    %3938 = vmatpush1.bf16.msra.mxu0 %v3800
    %3939 = vmatprep.subr.bf16.mxu0 %v3803
    %3940 = vmatpush1.bf16.msra.mxu0 %v3802
    %3941 = vmatprep.subr.bf16.mxu0 %v3805
    %3942 = vmatpush1.bf16.msra.mxu0 %v3804
    %3943 = vmatprep.mubr.bf16.mxu0 %v3473
    %3944 = vmatmul.mubr.bf16.gmra.mrb[0].mxu0 %v3472
    %v3945 = vpop.f32.mrb[0].mxu0
    %v3946 = vadd.f32 %v3905, %v3945
    %v3947 = vpop.f32.mrb[0].mxu0
    %v3948 = vadd.f32 %v3907, %v3947
    %v3949 = vpop.f32.mrb[0].mxu0
    %v3950 = vpop.f32.mrb[0].mxu0
    %3951 = vdwg.mxu0
    %v3952 = vmax.f32 %v3946, 0.0
    %v3953 = vmax.f32 %v3948, 0.0
    %v3954 = vpack.c.bf16 %v3952, %v3952
    %v3955 = vpack.c.bf16 %v3953, %v3953
    %v3956 = vld [vmem:[#allocation17] sm:$0xff]
    %v3957 = vld [vmem:[#allocation17 + $0x8] sm:$0xff]
    %v3958 = vld [vmem:[#allocation17 + $0x10] sm:$0xff]
    %v3959 = vld [vmem:[#allocation17 + $0x18] sm:$0xff]
    %v3960 = vld [vmem:[#allocation17 + $0x20] sm:$0xff]
    %v3961 = vld [vmem:[#allocation17 + $0x28] sm:$0xff]
    %v3962 = vld [vmem:[#allocation17 + $0x30] sm:$0xff]
    %v3963 = vld [vmem:[#allocation17 + $0x38] sm:$0xff]
    %v3964 = vld [vmem:[#allocation17 + $0x40] sm:$0xff]
    %v3965 = vld [vmem:[#allocation17 + $0x48] sm:$0xff]
    %v3966 = vld [vmem:[#allocation17 + $0x50] sm:$0xff]
    %v3967 = vld [vmem:[#allocation17 + $0x58] sm:$0xff]
    %v3968 = vld [vmem:[#allocation17 + $0x60] sm:$0xff]
    %v3969 = vld [vmem:[#allocation17 + $0x68] sm:$0xff]
    %v3970 = vld [vmem:[#allocation17 + $0x70] sm:$0xff]
    %v3971 = vld [vmem:[#allocation17 + $0x78] sm:$0xff]
    %v3972 = vld [vmem:[#allocation17 + $0x80] sm:$0xff]
    %v3973 = vld [vmem:[#allocation17 + $0x88] sm:$0xff]
    %v3974 = vld [vmem:[#allocation17 + $0x90] sm:$0xff]
    %v3975 = vld [vmem:[#allocation17 + $0x98] sm:$0xff]
    %v3976 = vld [vmem:[#allocation17 + $0xa0] sm:$0xff]
    %v3977 = vld [vmem:[#allocation17 + $0xa8] sm:$0xff]
    %v3978 = vld [vmem:[#allocation17 + $0xb0] sm:$0xff]
    %v3979 = vld [vmem:[#allocation17 + $0xb8] sm:$0xff]
    %v3980 = vld [vmem:[#allocation17 + $0xc0] sm:$0xff]
    %v3981 = vld [vmem:[#allocation17 + $0xc8] sm:$0xff]
    %v3982 = vld [vmem:[#allocation17 + $0xd0] sm:$0xff]
    %v3983 = vld [vmem:[#allocation17 + $0xd8] sm:$0xff]
    %v3984 = vld [vmem:[#allocation17 + $0xe0] sm:$0xff]
    %v3985 = vld [vmem:[#allocation17 + $0xe8] sm:$0xff]
    %v3986 = vld [vmem:[#allocation17 + $0xf0] sm:$0xff]
    %v3987 = vld [vmem:[#allocation17 + $0xf8] sm:$0xff]
    %v3988 = vld [vmem:[#allocation19] sm:$0xff]
    %v3989 = vld [vmem:[#allocation19 + $0x8] sm:$0xff]
    %v3990 = vld [vmem:[#allocation19 + $0x10] sm:$0xff]
    %v3991 = vld [vmem:[#allocation19 + $0x18] sm:$0xff]
    %v3992 = vld [vmem:[#allocation19 + $0x20] sm:$0xff]
    %v3993 = vld [vmem:[#allocation19 + $0x28] sm:$0xff]
    %v3994 = vld [vmem:[#allocation19 + $0x30] sm:$0xff]
    %v3995 = vld [vmem:[#allocation19 + $0x38] sm:$0xff]
    %v3996 = vld [vmem:[#allocation19 + $0x40] sm:$0xff]
    %v3997 = vld [vmem:[#allocation19 + $0x48] sm:$0xff]
    %v3998 = vld [vmem:[#allocation19 + $0x50] sm:$0xff]
    %v3999 = vld [vmem:[#allocation19 + $0x58] sm:$0xff]
    %v4000 = vld [vmem:[#allocation19 + $0x60] sm:$0xff]
    %v4001 = vld [vmem:[#allocation19 + $0x68] sm:$0xff]
    %v4002 = vld [vmem:[#allocation19 + $0x70] sm:$0xff]
    %v4003 = vld [vmem:[#allocation19 + $0x78] sm:$0xff]
    %v4004 = vld [vmem:[#allocation19 + $0x80] sm:$0xff]
    %v4005 = vld [vmem:[#allocation19 + $0x88] sm:$0xff]
    %v4006 = vld [vmem:[#allocation19 + $0x90] sm:$0xff]
    %v4007 = vld [vmem:[#allocation19 + $0x98] sm:$0xff]
    %v4008 = vld [vmem:[#allocation19 + $0xa0] sm:$0xff]
    %v4009 = vld [vmem:[#allocation19 + $0xa8] sm:$0xff]
    %v4010 = vld [vmem:[#allocation19 + $0xb0] sm:$0xff]
    %v4011 = vld [vmem:[#allocation19 + $0xb8] sm:$0xff]
    %v4012 = vld [vmem:[#allocation19 + $0xc0] sm:$0xff]
    %v4013 = vld [vmem:[#allocation19 + $0xc8] sm:$0xff]
    %v4014 = vld [vmem:[#allocation19 + $0xd0] sm:$0xff]
    %v4015 = vld [vmem:[#allocation19 + $0xd8] sm:$0xff]
    %v4016 = vld [vmem:[#allocation19 + $0xe0] sm:$0xff]
    %v4017 = vld [vmem:[#allocation19 + $0xe8] sm:$0xff]
    %v4018 = vld [vmem:[#allocation19 + $0xf0] sm:$0xff]
    %v4019 = vld [vmem:[#allocation19 + $0xf8] sm:$0xff]
    %v4052 = vunpack.c.l.b16 %v3988
    %v4053 = vunpack.c.h.b16 %v3988
    %v4054 = vunpack.c.l.b16 %v3989
    %v4055 = vunpack.c.h.b16 %v3989
    %v4056 = vunpack.c.l.b16 %v3990
    %v4057 = vunpack.c.h.b16 %v3990
    %v4058 = vunpack.c.l.b16 %v3991
    %v4059 = vunpack.c.h.b16 %v3991
    %v4060 = vunpack.c.l.b16 %v3992
    %v4061 = vunpack.c.h.b16 %v3992
    %v4062 = vunpack.c.l.b16 %v3993
    %v4063 = vunpack.c.h.b16 %v3993
    %v4064 = vunpack.c.l.b16 %v3994
    %v4065 = vunpack.c.h.b16 %v3994
    %v4066 = vunpack.c.l.b16 %v3995
    %v4067 = vunpack.c.h.b16 %v3995
    %v4068 = vunpack.c.l.b16 %v3996
    %v4069 = vunpack.c.h.b16 %v3996
    %v4070 = vunpack.c.l.b16 %v3997
    %v4071 = vunpack.c.h.b16 %v3997
    %v4072 = vunpack.c.l.b16 %v3998
    %v4073 = vunpack.c.h.b16 %v3998
    %v4074 = vunpack.c.l.b16 %v3999
    %v4075 = vunpack.c.h.b16 %v3999
    %v4076 = vunpack.c.l.b16 %v4000
    %v4077 = vunpack.c.h.b16 %v4000
    %v4078 = vunpack.c.l.b16 %v4001
    %v4079 = vunpack.c.h.b16 %v4001
    %v4080 = vunpack.c.l.b16 %v4002
    %v4081 = vunpack.c.h.b16 %v4002
    %v4082 = vunpack.c.l.b16 %v4003
    %v4083 = vunpack.c.h.b16 %v4003
    %v4084 = vunpack.c.l.b16 %v4004
    %v4085 = vunpack.c.h.b16 %v4004
    %v4086 = vunpack.c.l.b16 %v4005
    %v4087 = vunpack.c.h.b16 %v4005
    %v4088 = vunpack.c.l.b16 %v4006
    %v4089 = vunpack.c.h.b16 %v4006
    %v4090 = vunpack.c.l.b16 %v4007
    %v4091 = vunpack.c.h.b16 %v4007
    %v4092 = vunpack.c.l.b16 %v4008
    %v4093 = vunpack.c.h.b16 %v4008
    %v4094 = vunpack.c.l.b16 %v4009
    %v4095 = vunpack.c.h.b16 %v4009
    %v4096 = vunpack.c.l.b16 %v4010
    %v4097 = vunpack.c.h.b16 %v4010
    %v4098 = vunpack.c.l.b16 %v4011
    %v4099 = vunpack.c.h.b16 %v4011
    %v4100 = vunpack.c.l.b16 %v4012
    %v4101 = vunpack.c.h.b16 %v4012
    %v4102 = vunpack.c.l.b16 %v4013
    %v4103 = vunpack.c.h.b16 %v4013
    %v4104 = vunpack.c.l.b16 %v4014
    %v4105 = vunpack.c.h.b16 %v4014
    %v4106 = vunpack.c.l.b16 %v4015
    %v4107 = vunpack.c.h.b16 %v4015
    %v4108 = vunpack.c.l.b16 %v4016
    %v4109 = vunpack.c.h.b16 %v4016
    %v4110 = vunpack.c.l.b16 %v4017
    %v4111 = vunpack.c.h.b16 %v4017
    %v4112 = vunpack.c.l.b16 %v4018
    %v4113 = vunpack.c.h.b16 %v4018
    %v4114 = vunpack.c.l.b16 %v4019
    %v4115 = vunpack.c.h.b16 %v4019
    %v4116 = vpack.c.b16 %v4054, %v4052
    %v4117 = vpack.c.b16 %v4055, %v4053
    %v4118 = vpack.c.b16 %v4058, %v4056
    %v4119 = vpack.c.b16 %v4059, %v4057
    %v4120 = vpack.c.b16 %v4062, %v4060
    %v4121 = vpack.c.b16 %v4063, %v4061
    %v4122 = vpack.c.b16 %v4066, %v4064
    %v4123 = vpack.c.b16 %v4067, %v4065
    %v4124 = vpack.c.b16 %v4070, %v4068
    %v4125 = vpack.c.b16 %v4071, %v4069
    %v4126 = vpack.c.b16 %v4074, %v4072
    %v4127 = vpack.c.b16 %v4075, %v4073
    %v4128 = vpack.c.b16 %v4078, %v4076
    %v4129 = vpack.c.b16 %v4079, %v4077
    %v4130 = vpack.c.b16 %v4082, %v4080
    %v4131 = vpack.c.b16 %v4083, %v4081
    %v4132 = vpack.c.b16 %v4086, %v4084
    %v4133 = vpack.c.b16 %v4087, %v4085
    %v4134 = vpack.c.b16 %v4090, %v4088
    %v4135 = vpack.c.b16 %v4091, %v4089
    %v4136 = vpack.c.b16 %v4094, %v4092
    %v4137 = vpack.c.b16 %v4095, %v4093
    %v4138 = vpack.c.b16 %v4098, %v4096
    %v4139 = vpack.c.b16 %v4099, %v4097
    %v4140 = vpack.c.b16 %v4102, %v4100
    %v4141 = vpack.c.b16 %v4103, %v4101
    %v4142 = vpack.c.b16 %v4106, %v4104
    %v4143 = vpack.c.b16 %v4107, %v4105
    %v4144 = vpack.c.b16 %v4110, %v4108
    %v4145 = vpack.c.b16 %v4111, %v4109
    %v4146 = vpack.c.b16 %v4114, %v4112
    %v4147 = vpack.c.b16 %v4115, %v4113
    %4180 = vmatprep.subr.bf16.mxu0 %v4117
    %4181 = vmatpush1.bf16.msra.mxu0 %v4116
    %4182 = vmatprep.subr.bf16.mxu0 %v4119
    %4183 = vmatpush1.bf16.msra.mxu0 %v4118
    %4184 = vmatprep.subr.bf16.mxu0 %v4121
    %4185 = vmatpush1.bf16.msra.mxu0 %v4120
    %4186 = vmatprep.subr.bf16.mxu0 %v4123
    %4187 = vmatpush1.bf16.msra.mxu0 %v4122
    %4188 = vmatprep.subr.bf16.mxu0 %v4125
    %4189 = vmatpush1.bf16.msra.mxu0 %v4124
    %4190 = vmatprep.subr.bf16.mxu0 %v4127
    %4191 = vmatpush1.bf16.msra.mxu0 %v4126
    %4192 = vmatprep.subr.bf16.mxu0 %v4129
    %4193 = vmatpush1.bf16.msra.mxu0 %v4128
    %4194 = vmatprep.subr.bf16.mxu0 %v4131
    %4195 = vmatpush1.bf16.msra.mxu0 %v4130
    %4196 = vmatprep.subr.bf16.mxu0 %v4133
    %4197 = vmatpush1.bf16.msra.mxu0 %v4132
    %4198 = vmatprep.subr.bf16.mxu0 %v4135
    %4199 = vmatpush1.bf16.msra.mxu0 %v4134
    %4200 = vmatprep.subr.bf16.mxu0 %v4137
    %4201 = vmatpush1.bf16.msra.mxu0 %v4136
    %4202 = vmatprep.subr.bf16.mxu0 %v4139
    %4203 = vmatpush1.bf16.msra.mxu0 %v4138
    %4204 = vmatprep.subr.bf16.mxu0 %v4141
    %4205 = vmatpush1.bf16.msra.mxu0 %v4140
    %4206 = vmatprep.subr.bf16.mxu0 %v4143
    %4207 = vmatpush1.bf16.msra.mxu0 %v4142
    %4208 = vmatprep.subr.bf16.mxu0 %v4145
    %4209 = vmatpush1.bf16.msra.mxu0 %v4144
    %4210 = vmatprep.subr.bf16.mxu0 %v4147
    %4211 = vmatpush1.bf16.msra.mxu0 %v4146
    %4212 = vmatprep.mubr.bf16.mxu0 %v1547
    %4213 = vmatmul.mubr.bf16.gmra.mrb[0].mxu0 %v1546
    %v4214 = vpop.f32.mrb[0].mxu0
    %v4215 = vadd.f32 0.0, %v4214
    %v4216 = vpop.f32.mrb[0].mxu0
    %v4217 = vadd.f32 0.0, %v4216
    %v4218 = vpop.f32.mrb[0].mxu0
    %v4219 = vpop.f32.mrb[0].mxu0
    %4220 = vdwg.mxu0
    %v4253 = vunpack.c.l.b16 %v3956
    %v4254 = vunpack.c.h.b16 %v3956
    %v4255 = vunpack.c.l.b16 %v3957
    %v4256 = vunpack.c.h.b16 %v3957
    %v4257 = vunpack.c.l.b16 %v3958
    %v4258 = vunpack.c.h.b16 %v3958
    %v4259 = vunpack.c.l.b16 %v3959
    %v4260 = vunpack.c.h.b16 %v3959
    %v4261 = vunpack.c.l.b16 %v3960
    %v4262 = vunpack.c.h.b16 %v3960
    %v4263 = vunpack.c.l.b16 %v3961
    %v4264 = vunpack.c.h.b16 %v3961
    %v4265 = vunpack.c.l.b16 %v3962
    %v4266 = vunpack.c.h.b16 %v3962
    %v4267 = vunpack.c.l.b16 %v3963
    %v4268 = vunpack.c.h.b16 %v3963
    %v4269 = vunpack.c.l.b16 %v3964
    %v4270 = vunpack.c.h.b16 %v3964
    %v4271 = vunpack.c.l.b16 %v3965
    %v4272 = vunpack.c.h.b16 %v3965
    %v4273 = vunpack.c.l.b16 %v3966
    %v4274 = vunpack.c.h.b16 %v3966
    %v4275 = vunpack.c.l.b16 %v3967
    %v4276 = vunpack.c.h.b16 %v3967
    %v4277 = vunpack.c.l.b16 %v3968
    %v4278 = vunpack.c.h.b16 %v3968
    %v4279 = vunpack.c.l.b16 %v3969
    %v4280 = vunpack.c.h.b16 %v3969
    %v4281 = vunpack.c.l.b16 %v3970
    %v4282 = vunpack.c.h.b16 %v3970
    %v4283 = vunpack.c.l.b16 %v3971
    %v4284 = vunpack.c.h.b16 %v3971
    %v4285 = vunpack.c.l.b16 %v3972
    %v4286 = vunpack.c.h.b16 %v3972
    %v4287 = vunpack.c.l.b16 %v3973
    %v4288 = vunpack.c.h.b16 %v3973
    %v4289 = vunpack.c.l.b16 %v3974
    %v4290 = vunpack.c.h.b16 %v3974
    %v4291 = vunpack.c.l.b16 %v3975
    %v4292 = vunpack.c.h.b16 %v3975
    %v4293 = vunpack.c.l.b16 %v3976
    %v4294 = vunpack.c.h.b16 %v3976
    %v4295 = vunpack.c.l.b16 %v3977
    %v4296 = vunpack.c.h.b16 %v3977
    %v4297 = vunpack.c.l.b16 %v3978
    %v4298 = vunpack.c.h.b16 %v3978
    %v4299 = vunpack.c.l.b16 %v3979
    %v4300 = vunpack.c.h.b16 %v3979
    %v4301 = vunpack.c.l.b16 %v3980
    %v4302 = vunpack.c.h.b16 %v3980
    %v4303 = vunpack.c.l.b16 %v3981
    %v4304 = vunpack.c.h.b16 %v3981
    %v4305 = vunpack.c.l.b16 %v3982
    %v4306 = vunpack.c.h.b16 %v3982
    %v4307 = vunpack.c.l.b16 %v3983
    %v4308 = vunpack.c.h.b16 %v3983
    %v4309 = vunpack.c.l.b16 %v3984
    %v4310 = vunpack.c.h.b16 %v3984
    %v4311 = vunpack.c.l.b16 %v3985
    %v4312 = vunpack.c.h.b16 %v3985
    %v4313 = vunpack.c.l.b16 %v3986
    %v4314 = vunpack.c.h.b16 %v3986
    %v4315 = vunpack.c.l.b16 %v3987
    %v4316 = vunpack.c.h.b16 %v3987
    %v4317 = vpack.c.b16 %v4255, %v4253
    %v4318 = vpack.c.b16 %v4256, %v4254
    %v4319 = vpack.c.b16 %v4259, %v4257
    %v4320 = vpack.c.b16 %v4260, %v4258
    %v4321 = vpack.c.b16 %v4263, %v4261
    %v4322 = vpack.c.b16 %v4264, %v4262
    %v4323 = vpack.c.b16 %v4267, %v4265
    %v4324 = vpack.c.b16 %v4268, %v4266
    %v4325 = vpack.c.b16 %v4271, %v4269
    %v4326 = vpack.c.b16 %v4272, %v4270
    %v4327 = vpack.c.b16 %v4275, %v4273
    %v4328 = vpack.c.b16 %v4276, %v4274
    %v4329 = vpack.c.b16 %v4279, %v4277
    %v4330 = vpack.c.b16 %v4280, %v4278
    %v4331 = vpack.c.b16 %v4283, %v4281
    %v4332 = vpack.c.b16 %v4284, %v4282
    %v4333 = vpack.c.b16 %v4287, %v4285
    %v4334 = vpack.c.b16 %v4288, %v4286
    %v4335 = vpack.c.b16 %v4291, %v4289
    %v4336 = vpack.c.b16 %v4292, %v4290
    %v4337 = vpack.c.b16 %v4295, %v4293
    %v4338 = vpack.c.b16 %v4296, %v4294
    %v4339 = vpack.c.b16 %v4299, %v4297
    %v4340 = vpack.c.b16 %v4300, %v4298
    %v4341 = vpack.c.b16 %v4303, %v4301
    %v4342 = vpack.c.b16 %v4304, %v4302
    %v4343 = vpack.c.b16 %v4307, %v4305
    %v4344 = vpack.c.b16 %v4308, %v4306
    %v4345 = vpack.c.b16 %v4311, %v4309
    %v4346 = vpack.c.b16 %v4312, %v4310
    %v4347 = vpack.c.b16 %v4315, %v4313
    %v4348 = vpack.c.b16 %v4316, %v4314
    %4381 = vmatprep.subr.bf16.mxu0 %v4318
    %4382 = vmatpush1.bf16.msra.mxu0 %v4317
    %4383 = vmatprep.subr.bf16.mxu0 %v4320
    %4384 = vmatpush1.bf16.msra.mxu0 %v4319
    %4385 = vmatprep.subr.bf16.mxu0 %v4322
    %4386 = vmatpush1.bf16.msra.mxu0 %v4321
    %4387 = vmatprep.subr.bf16.mxu0 %v4324
    %4388 = vmatpush1.bf16.msra.mxu0 %v4323
    %4389 = vmatprep.subr.bf16.mxu0 %v4326
    %4390 = vmatpush1.bf16.msra.mxu0 %v4325
    %4391 = vmatprep.subr.bf16.mxu0 %v4328
    %4392 = vmatpush1.bf16.msra.mxu0 %v4327
    %4393 = vmatprep.subr.bf16.mxu0 %v4330
    %4394 = vmatpush1.bf16.msra.mxu0 %v4329
    %4395 = vmatprep.subr.bf16.mxu0 %v4332
    %4396 = vmatpush1.bf16.msra.mxu0 %v4331
    %4397 = vmatprep.subr.bf16.mxu0 %v4334
    %4398 = vmatpush1.bf16.msra.mxu0 %v4333
    %4399 = vmatprep.subr.bf16.mxu0 %v4336
    %4400 = vmatpush1.bf16.msra.mxu0 %v4335
    %4401 = vmatprep.subr.bf16.mxu0 %v4338
    %4402 = vmatpush1.bf16.msra.mxu0 %v4337
    %4403 = vmatprep.subr.bf16.mxu0 %v4340
    %4404 = vmatpush1.bf16.msra.mxu0 %v4339
    %4405 = vmatprep.subr.bf16.mxu0 %v4342
    %4406 = vmatpush1.bf16.msra.mxu0 %v4341
    %4407 = vmatprep.subr.bf16.mxu0 %v4344
    %4408 = vmatpush1.bf16.msra.mxu0 %v4343
    %4409 = vmatprep.subr.bf16.mxu0 %v4346
    %4410 = vmatpush1.bf16.msra.mxu0 %v4345
    %4411 = vmatprep.subr.bf16.mxu0 %v4348
    %4412 = vmatpush1.bf16.msra.mxu0 %v4347
    %4413 = vmatprep.mubr.bf16.mxu0 %v1373
    %4414 = vmatmul.mubr.bf16.gmra.mrb[0].mxu0 %v1372
    %v4415 = vpop.f32.mrb[0].mxu0
    %v4416 = vadd.f32 %v4215, %v4415
    %v4417 = vpop.f32.mrb[0].mxu0
    %v4418 = vadd.f32 %v4217, %v4417
    %v4419 = vpop.f32.mrb[0].mxu0
    %v4420 = vpop.f32.mrb[0].mxu0
    %4421 = vdwg.mxu0
    %v4422 = vld [vmem:[#allocation20] sm:$0xff]
    %v4423 = vld [vmem:[#allocation20 + $0x8] sm:$0xff]
    %v4424 = vld [vmem:[#allocation20 + $0x10] sm:$0xff]
    %v4425 = vld [vmem:[#allocation20 + $0x18] sm:$0xff]
    %v4426 = vld [vmem:[#allocation20 + $0x20] sm:$0xff]
    %v4427 = vld [vmem:[#allocation20 + $0x28] sm:$0xff]
    %v4428 = vld [vmem:[#allocation20 + $0x30] sm:$0xff]
    %v4429 = vld [vmem:[#allocation20 + $0x38] sm:$0xff]
    %v4430 = vld [vmem:[#allocation20 + $0x40] sm:$0xff]
    %v4431 = vld [vmem:[#allocation20 + $0x48] sm:$0xff]
    %v4432 = vld [vmem:[#allocation20 + $0x50] sm:$0xff]
    %v4433 = vld [vmem:[#allocation20 + $0x58] sm:$0xff]
    %v4434 = vld [vmem:[#allocation20 + $0x60] sm:$0xff]
    %v4435 = vld [vmem:[#allocation20 + $0x68] sm:$0xff]
    %v4436 = vld [vmem:[#allocation20 + $0x70] sm:$0xff]
    %v4437 = vld [vmem:[#allocation20 + $0x78] sm:$0xff]
    %v4438 = vld [vmem:[#allocation20 + $0x80] sm:$0xff]
    %v4439 = vld [vmem:[#allocation20 + $0x88] sm:$0xff]
    %v4440 = vld [vmem:[#allocation20 + $0x90] sm:$0xff]
    %v4441 = vld [vmem:[#allocation20 + $0x98] sm:$0xff]
    %v4442 = vld [vmem:[#allocation20 + $0xa0] sm:$0xff]
    %v4443 = vld [vmem:[#allocation20 + $0xa8] sm:$0xff]
    %v4444 = vld [vmem:[#allocation20 + $0xb0] sm:$0xff]
    %v4445 = vld [vmem:[#allocation20 + $0xb8] sm:$0xff]
    %v4446 = vld [vmem:[#allocation20 + $0xc0] sm:$0xff]
    %v4447 = vld [vmem:[#allocation20 + $0xc8] sm:$0xff]
    %v4448 = vld [vmem:[#allocation20 + $0xd0] sm:$0xff]
    %v4449 = vld [vmem:[#allocation20 + $0xd8] sm:$0xff]
    %v4450 = vld [vmem:[#allocation20 + $0xe0] sm:$0xff]
    %v4451 = vld [vmem:[#allocation20 + $0xe8] sm:$0xff]
    %v4452 = vld [vmem:[#allocation20 + $0xf0] sm:$0xff]
    %v4453 = vld [vmem:[#allocation20 + $0xf8] sm:$0xff]
    %v4486 = vunpack.c.l.b16 %v4422
    %v4487 = vunpack.c.h.b16 %v4422
    %v4488 = vunpack.c.l.b16 %v4423
    %v4489 = vunpack.c.h.b16 %v4423
    %v4490 = vunpack.c.l.b16 %v4424
    %v4491 = vunpack.c.h.b16 %v4424
    %v4492 = vunpack.c.l.b16 %v4425
    %v4493 = vunpack.c.h.b16 %v4425
    %v4494 = vunpack.c.l.b16 %v4426
    %v4495 = vunpack.c.h.b16 %v4426
    %v4496 = vunpack.c.l.b16 %v4427
    %v4497 = vunpack.c.h.b16 %v4427
    %v4498 = vunpack.c.l.b16 %v4428
    %v4499 = vunpack.c.h.b16 %v4428
    %v4500 = vunpack.c.l.b16 %v4429
    %v4501 = vunpack.c.h.b16 %v4429
    %v4502 = vunpack.c.l.b16 %v4430
    %v4503 = vunpack.c.h.b16 %v4430
    %v4504 = vunpack.c.l.b16 %v4431
    %v4505 = vunpack.c.h.b16 %v4431
    %v4506 = vunpack.c.l.b16 %v4432
    %v4507 = vunpack.c.h.b16 %v4432
    %v4508 = vunpack.c.l.b16 %v4433
    %v4509 = vunpack.c.h.b16 %v4433
    %v4510 = vunpack.c.l.b16 %v4434
    %v4511 = vunpack.c.h.b16 %v4434
    %v4512 = vunpack.c.l.b16 %v4435
    %v4513 = vunpack.c.h.b16 %v4435
    %v4514 = vunpack.c.l.b16 %v4436
    %v4515 = vunpack.c.h.b16 %v4436
    %v4516 = vunpack.c.l.b16 %v4437
    %v4517 = vunpack.c.h.b16 %v4437
    %v4518 = vunpack.c.l.b16 %v4438
    %v4519 = vunpack.c.h.b16 %v4438
    %v4520 = vunpack.c.l.b16 %v4439
    %v4521 = vunpack.c.h.b16 %v4439
    %v4522 = vunpack.c.l.b16 %v4440
    %v4523 = vunpack.c.h.b16 %v4440
    %v4524 = vunpack.c.l.b16 %v4441
    %v4525 = vunpack.c.h.b16 %v4441
    %v4526 = vunpack.c.l.b16 %v4442
    %v4527 = vunpack.c.h.b16 %v4442
    %v4528 = vunpack.c.l.b16 %v4443
    %v4529 = vunpack.c.h.b16 %v4443
    %v4530 = vunpack.c.l.b16 %v4444
    %v4531 = vunpack.c.h.b16 %v4444
    %v4532 = vunpack.c.l.b16 %v4445
    %v4533 = vunpack.c.h.b16 %v4445
    %v4534 = vunpack.c.l.b16 %v4446
    %v4535 = vunpack.c.h.b16 %v4446
    %v4536 = vunpack.c.l.b16 %v4447
    %v4537 = vunpack.c.h.b16 %v4447
    %v4538 = vunpack.c.l.b16 %v4448
    %v4539 = vunpack.c.h.b16 %v4448
    %v4540 = vunpack.c.l.b16 %v4449
    %v4541 = vunpack.c.h.b16 %v4449
    %v4542 = vunpack.c.l.b16 %v4450
    %v4543 = vunpack.c.h.b16 %v4450
    %v4544 = vunpack.c.l.b16 %v4451
    %v4545 = vunpack.c.h.b16 %v4451
    %v4546 = vunpack.c.l.b16 %v4452
    %v4547 = vunpack.c.h.b16 %v4452
    %v4548 = vunpack.c.l.b16 %v4453
    %v4549 = vunpack.c.h.b16 %v4453
    %v4550 = vpack.c.b16 %v4488, %v4486
    %v4551 = vpack.c.b16 %v4489, %v4487
    %v4552 = vpack.c.b16 %v4492, %v4490
    %v4553 = vpack.c.b16 %v4493, %v4491
    %v4554 = vpack.c.b16 %v4496, %v4494
    %v4555 = vpack.c.b16 %v4497, %v4495
    %v4556 = vpack.c.b16 %v4500, %v4498
    %v4557 = vpack.c.b16 %v4501, %v4499
    %v4558 = vpack.c.b16 %v4504, %v4502
    %v4559 = vpack.c.b16 %v4505, %v4503
    %v4560 = vpack.c.b16 %v4508, %v4506
    %v4561 = vpack.c.b16 %v4509, %v4507
    %v4562 = vpack.c.b16 %v4512, %v4510
    %v4563 = vpack.c.b16 %v4513, %v4511
    %v4564 = vpack.c.b16 %v4516, %v4514
    %v4565 = vpack.c.b16 %v4517, %v4515
    %v4566 = vpack.c.b16 %v4520, %v4518
    %v4567 = vpack.c.b16 %v4521, %v4519
    %v4568 = vpack.c.b16 %v4524, %v4522
    %v4569 = vpack.c.b16 %v4525, %v4523
    %v4570 = vpack.c.b16 %v4528, %v4526
    %v4571 = vpack.c.b16 %v4529, %v4527
    %v4572 = vpack.c.b16 %v4532, %v4530
    %v4573 = vpack.c.b16 %v4533, %v4531
    %v4574 = vpack.c.b16 %v4536, %v4534
    %v4575 = vpack.c.b16 %v4537, %v4535
    %v4576 = vpack.c.b16 %v4540, %v4538
    %v4577 = vpack.c.b16 %v4541, %v4539
    %v4578 = vpack.c.b16 %v4544, %v4542
    %v4579 = vpack.c.b16 %v4545, %v4543
    %v4580 = vpack.c.b16 %v4548, %v4546
    %v4581 = vpack.c.b16 %v4549, %v4547
    %4614 = vmatprep.subr.bf16.mxu0 %v4551
    %4615 = vmatpush1.bf16.msra.mxu0 %v4550
    %4616 = vmatprep.subr.bf16.mxu0 %v4553
    %4617 = vmatpush1.bf16.msra.mxu0 %v4552
    %4618 = vmatprep.subr.bf16.mxu0 %v4555
    %4619 = vmatpush1.bf16.msra.mxu0 %v4554
    %4620 = vmatprep.subr.bf16.mxu0 %v4557
    %4621 = vmatpush1.bf16.msra.mxu0 %v4556
    %4622 = vmatprep.subr.bf16.mxu0 %v4559
    %4623 = vmatpush1.bf16.msra.mxu0 %v4558
    %4624 = vmatprep.subr.bf16.mxu0 %v4561
    %4625 = vmatpush1.bf16.msra.mxu0 %v4560
    %4626 = vmatprep.subr.bf16.mxu0 %v4563
    %4627 = vmatpush1.bf16.msra.mxu0 %v4562
    %4628 = vmatprep.subr.bf16.mxu0 %v4565
    %4629 = vmatpush1.bf16.msra.mxu0 %v4564
    %4630 = vmatprep.subr.bf16.mxu0 %v4567
    %4631 = vmatpush1.bf16.msra.mxu0 %v4566
    %4632 = vmatprep.subr.bf16.mxu0 %v4569
    %4633 = vmatpush1.bf16.msra.mxu0 %v4568
    %4634 = vmatprep.subr.bf16.mxu0 %v4571
    %4635 = vmatpush1.bf16.msra.mxu0 %v4570
    %4636 = vmatprep.subr.bf16.mxu0 %v4573
    %4637 = vmatpush1.bf16.msra.mxu0 %v4572
    %4638 = vmatprep.subr.bf16.mxu0 %v4575
    %4639 = vmatpush1.bf16.msra.mxu0 %v4574
    %4640 = vmatprep.subr.bf16.mxu0 %v4577
    %4641 = vmatpush1.bf16.msra.mxu0 %v4576
    %4642 = vmatprep.subr.bf16.mxu0 %v4579
    %4643 = vmatpush1.bf16.msra.mxu0 %v4578
    %4644 = vmatprep.subr.bf16.mxu0 %v4581
    %4645 = vmatpush1.bf16.msra.mxu0 %v4580
    %4646 = vmatprep.mubr.bf16.mxu0 %v3955
    %4647 = vmatmul.mubr.bf16.gmra.mrb[0].mxu0 %v3954
    %v4648 = vpop.f32.mrb[0].mxu0
    %v4649 = vadd.f32 0.0, %v4648
    %v4650 = vpop.f32.mrb[0].mxu0
    %v4651 = vadd.f32 0.0, %v4650
    %v4652 = vpop.f32.mrb[0].mxu0
    %v4653 = vpop.f32.mrb[0].mxu0
    %4654 = vdwg.mxu0
    %v4655 = vadd.f32 %v4416, %v4649
    %v4656 = vadd.f32 %v4418, %v4651
    %v4657 = vld [vmem:[%s18] sm:$0x3]
    %v4659 = vlaneseq
    %v4660 = vshrl.u32 %v4659, 7
    %v4661 = vsub.s32 0, %v4660
    %v4662 = vrot.slane %v4657, %v4661
    %v4663 = vlaneseq
    %v4664 = vshrl.u32 %v4663, 7
    %v4665 = vsub.s32 1, %v4664
    %v4666 = vrot.slane %v4657, %v4665
    %v4669 = vadd.f32 %v4655, %v4662
    %v4670 = vadd.f32 %v4656, %v4666
    %v4671 = vsub.f32 0.0, %v4669
    %v4672 = vsub.f32 0.0, %v4670
    %v4673 = vmul.f32 %v4671, 1.442695
    %v4674 = vpow.pop %v4673
    %v4675 = vmul.f32 %v4672, 1.442695
    %v4676 = vpow.pop %v4675
    %v4677 = vadd.f32 %v4674, 1.0
    %v4678 = vadd.f32 %v4676, 1.0
    %v4679 = vrcp.pop %v4677
    %v4680 = vrcp.pop %v4678
    %4681 = vst [vmem:[#allocation22] sm:$0xff] %v4679
    %4682 = vst [vmem:[#allocation22 + $0x8] sm:$0xff] %v4680
    // Predicated region
    $region126: #{tpu_custom_call.1} parent=1 // pred_check
      _
    $region127: #{tpu_custom_call.1} parent=1 // pred_check_branch
      %4684 = sbr.rel (0) target = $region129
    $region128: #{tpu_custom_call.1} parent=1 // pred_region
      %s4686 = ssub.s32 256, 256
      %4687 = vsyncadd [#allocation4], %s4686
      %s4689 = sshll.u32 [#allocation22], 4
      %s4690 = int_to_ptr.vmem [resolvable:$true] %s4689
      %4692 = dma.vmem_to_hbm [thread:$0]  %s4690, 256, %s19, [#allocation4]
    $region129: #{tpu_custom_call.1} parent=1 // pred_fallthru
      _
    // Predicated region
    $region130: #{tpu_custom_call.1} parent=1 // pred_check
      _
    $region131: #{tpu_custom_call.1} parent=1 // pred_check_branch
      %4694 = sbr.rel (0) target = $region133
    $region132: #{tpu_custom_call.1} parent=1 // pred_region
      %4695 = dma.done [#allocation4], 256
    $region133: #{tpu_custom_call.1} parent=1 // pred_fallthru
      _
    %4696 = vsyncpa [#allocation3], 1
    %4697 = vsyncpa [#allocation6], 1
    %4698 = vsyncpa [#allocation9], 1
    %4699 = vsyncpa [#allocation12], 1
    %4700 = vsyncpa [#allocation15], 1
    %4701 = vsyncpa [#allocation18], 1
    %4702 = vsyncpa [#allocation21], 1
    %4703 = vsyncpa [#allocation4], 1

</llo_original>
